<compile_context>
chip_gen: v6e
topology: v6e:2x2x1
jax: 0.10.0
libtpu: 0.0.40
codegen_flags: <defaults>
</compile_context>

<pallas_src>
import functools

import jax
import jax.numpy as jnp
from jax import lax
from jax.experimental import pallas as pl
from jax.experimental.pallas import tpu as pltpu


def _bsc_s_muti_cat_kernel(x_ref, rc_ref, w1_ref, b1_ref, w2_ref, b2_ref,
                           wd_ref, bd_ref, o_ref, *, h, w, mm_dtype):
    hw = h * w

    x = x_ref[0]                                   # (C, H*W)   lane-dense
    rc = rc_ref[...]                               # (2, H*W)   int32 row/col idx
    w1 = w1_ref[...]                               # (4C, C)
    b1 = b1_ref[...].astype(jnp.float32)           # (4C, 1)
    w2 = w2_ref[...]                               # (C, 4C)    block-diagonal
    b2 = b2_ref[...].astype(jnp.float32)           # (C, 1)
    wd = wd_ref[...].astype(jnp.float32)           # (C, 49)    7x7 depthwise taps
    bd = bd_ref[...].astype(jnp.float32)           # (C, 1)

    # ---- fused pointwise (1x1) convs on the MXU: output lane dim = H*W ------
    y = jnp.dot(w1.astype(mm_dtype), x.astype(mm_dtype),
                preferred_element_type=jnp.float32) + b1          # (4C, H*W)
    z = jnp.dot(w2.astype(mm_dtype), y.astype(mm_dtype),
                preferred_element_type=jnp.float32) + b2          # (C,  H*W)

    # ---- unified depthwise 7x7 "same" conv via static rolls + edge masks ----
    row = rc[0:1, :]                               # (1, H*W)
    col = rc[1:2, :]                               # (1, H*W)
    row_ok = [(row >= -d) & (row < h - d) for d in range(-3, 4)]
    col_ok = [(col >= -d) & (col < w - d) for d in range(-3, 4)]

    acc = jnp.zeros(z.shape, jnp.float32)
    for kh in range(7):
        dh = kh - 3
        for kw in range(7):
            dw = kw - 3
            s = dh * w + dw                        # flat source offset
            # shifted[f] == z[f + s]  (valid positions only; rest masked)
            shifted = z if s == 0 else pltpu.roll(z, (-s) % hw, 1)
            mask = row_ok[dh + 3] & col_ok[dw + 3]                 # (1, H*W)
            t = kh * 7 + kw
            tap = wd[:, t:t + 1]                                   # (C, 1)
            acc = acc + jnp.where(mask, shifted, 0.0) * tap
    acc = acc + bd

    o_ref[0] = acc.astype(o_ref.dtype)


def _pack_params(branch_params, C):
    """Pack per-branch nn.Conv2d params into fused, kernel-friendly blocks.

    branch_params: list of 4 tuples (w1, b1, w2, b2, wd, bd) with torch layouts
      w1: (C, C, 1, 1)   b1: (C,)
      w2: (Cb, C, 1, 1)  b2: (Cb,)          Cb = C // 4
      wd: (Cb, 1, k, k)  bd: (Cb,)          k in (1, 3, 5, 7), padding (k-1)//2
    """
    Cb = C // 4
    dt = branch_params[0][0].dtype

    w1_all = jnp.concatenate([p[0][:, :, 0, 0] for p in branch_params], axis=0)
    b1_all = jnp.concatenate([p[1] for p in branch_params]).reshape(4 * C, 1)

    w2_bd = jnp.zeros((C, 4 * C), dt)
    wd7 = jnp.zeros((C, 7, 7), dt)
    for b, p in enumerate(branch_params):
        w2_bd = w2_bd.at[b * Cb:(b + 1) * Cb, b * C:(b + 1) * C].set(p[2][:, :, 0, 0])
        k = p[4].shape[-1]
        o = (7 - k) // 2            # centre the k x k kernel in the 7x7 window
        wd7 = wd7.at[b * Cb:(b + 1) * Cb, o:o + k, o:o + k].set(p[4][:, 0])

    b2_all = jnp.concatenate([p[3] for p in branch_params]).reshape(C, 1)
    bd_all = jnp.concatenate([p[5] for p in branch_params]).reshape(C, 1)
    wd_all = wd7.reshape(C, 49)
    return w1_all, b1_all, w2_bd, b2_all, wd_all, bd_all


def bsc_s_muti_cat_forward(x, branch_params, *, matmul_dtype=jnp.float32):
    """x: (N, C, H, W) NCHW, C divisible by 4.  Returns (N, C, H, W)."""
    N, C, H, W = x.shape
    assert C % 4 == 0, "inner_channels must be divisible by 4"
    HW = H * W

    w1_all, b1_all, w2_bd, b2_all, wd_all, bd_all = _pack_params(branch_params, C)

    # Free reshape of the contiguous NCHW buffer: channels on sublanes,
    # flattened spatial on lanes.
    x2 = x.reshape(N, C, HW)

    # Row / column index of every flattened spatial position (built once,
    # outside the kernel -> no in-kernel integer div/mod).
    ridx = jnp.repeat(jnp.arange(H, dtype=jnp.int32), W)
    cidx = jnp.tile(jnp.arange(W, dtype=jnp.int32), H)
    rc_idx = jnp.stack([ridx, cidx], axis=0)                      # (2, H*W)

    kernel = functools.partial(_bsc_s_muti_cat_kernel, h=H, w=W,
                               mm_dtype=matmul_dtype)

    out = pl.pallas_call(
        kernel,
        out_shape=jax.ShapeDtypeStruct((N, C, HW), x.dtype),
        grid_spec=pltpu.PrefetchScalarGridSpec(
            num_scalar_prefetch=0,
            grid=(N,),
            in_specs=[
                pl.BlockSpec((1, C, HW), lambda n: (n, 0, 0)),     # x (per image)
                pl.BlockSpec((2, HW), lambda n: (0, 0)),           # row/col idx
                pl.BlockSpec((4 * C, C), lambda n: (0, 0)),        # stacked pw1
                pl.BlockSpec((4 * C, 1), lambda n: (0, 0)),        # pw1 bias
                pl.BlockSpec((C, 4 * C), lambda n: (0, 0)),        # block-diag pw2
                pl.BlockSpec((C, 1), lambda n: (0, 0)),            # pw2 bias
                pl.BlockSpec((C, 49), lambda n: (0, 0)),           # 7x7 dw taps
                pl.BlockSpec((C, 1), lambda n: (0, 0)),            # dw bias
            ],
            out_specs=pl.BlockSpec((1, C, HW), lambda n: (n, 0, 0)),
        ),
        compiler_params=pltpu.CompilerParams(
            dimension_semantics=("parallel",)),
    )(x2, rc_idx, w1_all, b1_all, w2_bd, b2_all, wd_all, bd_all)

    return out.reshape(N, C, H, W)


def bsc_s_muti_cat_reference(x, branch_params):
    """Pure-JAX reference matching the PyTorch module (lax.conv, NCHW)."""
    dn = ('NCHW', 'OIHW', 'NCHW')
    outs = []
    for (w1, b1, w2, b2, wd, bd) in branch_params:
        k = wd.shape[-1]
        p = (k - 1) // 2
        y = lax.conv_general_dilated(x, w1, (1, 1), 'VALID', dimension_numbers=dn)
        y = y + b1[None, :, None, None]
        y = lax.conv_general_dilated(y, w2, (1, 1), 'VALID', dimension_numbers=dn)
        y = y + b2[None, :, None, None]
        z = lax.conv_general_dilated(y, wd, (1, 1), ((p, p), (p, p)),
                                     dimension_numbers=dn,
                                     feature_group_count=wd.shape[0])
        z = z + bd[None, :, None, None]
        outs.append(z)
    return jnp.concatenate(outs, axis=1)


if __name__ == "__main__":
    # BSC_S_Muti_Cat(inner_channels=8): 4 branches of 2 output channels each.
    N, C, H, W = 2, 8, 16, 16
    Cb = C // 4
    ksizes = (1, 3, 5, 7)

    key = jax.random.PRNGKey(0)
    kx, key = jax.random.split(key)
    x = jax.random.normal(kx, (N, C, H, W), jnp.float32)

    branch_params = []
    for k in ksizes:
        keys = jax.random.split(key, 7)
        key = keys[0]
        w1 = jax.random.normal(keys[1], (C, C, 1, 1), jnp.float32) * 0.2
        b1 = jax.random.normal(keys[2], (C,), jnp.float32) * 0.1
        w2 = jax.random.normal(keys[3], (Cb, C, 1, 1), jnp.float32) * 0.2
        b2 = jax.random.normal(keys[4], (Cb,), jnp.float32) * 0.1
        wd = jax.random.normal(keys[5], (Cb, 1, k, k), jnp.float32) * 0.2
        bd = jax.random.normal(keys[6], (Cb,), jnp.float32) * 0.1
        branch_params.append((w1, b1, w2, b2, wd, bd))

    fwd = jax.jit(bsc_s_muti_cat_forward)
    out = jax.block_until_ready(fwd(x, branch_params))

    ref = bsc_s_muti_cat_reference(x, branch_params)
    assert out.shape == (N, C, H, W), out.shape
    max_err = float(jnp.max(jnp.abs(out - ref)))
    assert jnp.allclose(out, ref, atol=1e-4, rtol=1e-4), max_err

    print("KERNEL_OK")
</pallas_src>

<mosaic_0001>
module attributes {stable_mosaic.version = 11 : i64} {
  func.func @_bsc_s_muti_cat_kernel(%arg0: i32, %arg1: memref<1x8x256xf32, #tpu.memory_space<vmem>>, %arg2: memref<2x256xi32, #tpu.memory_space<vmem>>, %arg3: memref<32x8xf32, #tpu.memory_space<vmem>>, %arg4: memref<32x1xf32, #tpu.memory_space<vmem>>, %arg5: memref<8x32xf32, #tpu.memory_space<vmem>>, %arg6: memref<8x1xf32, #tpu.memory_space<vmem>>, %arg7: memref<8x49xf32, #tpu.memory_space<vmem>>, %arg8: memref<8x1xf32, #tpu.memory_space<vmem>>, %arg9: memref<1x8x256xf32, #tpu.memory_space<vmem>>) attributes {dimension_semantics = [#tpu.dimension_semantics<parallel>], iteration_bounds = array<i64: 2>, scalar_prefetch = 0 : i64, scratch_operands = 0 : i64, tpu.core_type = #tpu.core_type<tc>, window_params = [{transform_indices = @transform_0, window_bounds = array<i64: 1, 8, 256>}, {pipeline_mode = #tpu.pipeline_mode<synchronous>, transform_indices = @transform_1, window_bounds = array<i64: 2, 256>}, {pipeline_mode = #tpu.pipeline_mode<synchronous>, transform_indices = @transform_2, window_bounds = array<i64: 32, 8>}, {pipeline_mode = #tpu.pipeline_mode<synchronous>, transform_indices = @transform_3, window_bounds = array<i64: 32, 1>}, {pipeline_mode = #tpu.pipeline_mode<synchronous>, transform_indices = @transform_4, window_bounds = array<i64: 8, 32>}, {pipeline_mode = #tpu.pipeline_mode<synchronous>, transform_indices = @transform_5, window_bounds = array<i64: 8, 1>}, {pipeline_mode = #tpu.pipeline_mode<synchronous>, transform_indices = @transform_6, window_bounds = array<i64: 8, 49>}, {pipeline_mode = #tpu.pipeline_mode<synchronous>, transform_indices = @transform_7, window_bounds = array<i64: 8, 1>}, {transform_indices = @transform_8, window_bounds = array<i64: 1, 8, 256>}]} {
    %c0 = arith.constant 0 : index
    %c0_0 = arith.constant 0 : index
    %c0_1 = arith.constant 0 : index
    %0 = vector.load %arg1[%c0, %c0_0, %c0_1] : memref<1x8x256xf32, #tpu.memory_space<vmem>>, vector<1x8x256xf32>
    %1 = vector.shape_cast %0 : vector<1x8x256xf32> to vector<8x256xf32>
    %c0_2 = arith.constant 0 : index
    %c0_3 = arith.constant 0 : index
    %2 = vector.load %arg2[%c0_2, %c0_3] : memref<2x256xi32, #tpu.memory_space<vmem>>, vector<2x256xi32>
    %c0_4 = arith.constant 0 : index
    %c0_5 = arith.constant 0 : index
    %3 = vector.load %arg3[%c0_4, %c0_5] : memref<32x8xf32, #tpu.memory_space<vmem>>, vector<32x8xf32>
    %c0_6 = arith.constant 0 : index
    %c0_7 = arith.constant 0 : index
    %4 = vector.load %arg4[%c0_6, %c0_7] : memref<32x1xf32, #tpu.memory_space<vmem>>, vector<32x1xf32>
    %c0_8 = arith.constant 0 : index
    %c0_9 = arith.constant 0 : index
    %5 = vector.load %arg5[%c0_8, %c0_9] : memref<8x32xf32, #tpu.memory_space<vmem>>, vector<8x32xf32>
    %c0_10 = arith.constant 0 : index
    %c0_11 = arith.constant 0 : index
    %6 = vector.load %arg6[%c0_10, %c0_11] : memref<8x1xf32, #tpu.memory_space<vmem>>, vector<8x1xf32>
    %c0_12 = arith.constant 0 : index
    %c0_13 = arith.constant 0 : index
    %7 = vector.load %arg7[%c0_12, %c0_13] : memref<8x49xf32, #tpu.memory_space<vmem>>, vector<8x49xf32>
    %c0_14 = arith.constant 0 : index
    %c0_15 = arith.constant 0 : index
    %8 = vector.load %arg8[%c0_14, %c0_15] : memref<8x1xf32, #tpu.memory_space<vmem>>, vector<8x1xf32>
    %cst = arith.constant dense<0.000000e+00> : vector<32x256xf32>
    %9 = tpu.matmul %3, %1, %cst {dimension_numbers = #tpu.dot_dimension_numbers<[1], [0], [0], [1], [0, 0, 1, 1], [], []>} : vector<32x8xf32>, vector<8x256xf32>, vector<32x256xf32> -> vector<32x256xf32>
    %10 = vector.broadcast %4 : vector<32x1xf32> to vector<32x256xf32>
    %11 = arith.addf %9, %10 : vector<32x256xf32>
    %cst_16 = arith.constant dense<0.000000e+00> : vector<8x256xf32>
    %12 = tpu.matmul %5, %11, %cst_16 {dimension_numbers = #tpu.dot_dimension_numbers<[1], [0], [0], [1], [0, 0, 1, 1], [], []>} : vector<8x32xf32>, vector<32x256xf32>, vector<8x256xf32> -> vector<8x256xf32>
    %13 = vector.broadcast %6 : vector<8x1xf32> to vector<8x256xf32>
    %14 = arith.addf %12, %13 : vector<8x256xf32>
    %15 = vector.extract_strided_slice %2 {offsets = [0, 0], sizes = [1, 256], strides = [1, 1]} : vector<2x256xi32> to vector<1x256xi32>
    %16 = vector.extract_strided_slice %2 {offsets = [1, 0], sizes = [1, 256], strides = [1, 1]} : vector<2x256xi32> to vector<1x256xi32>
    %c3_i32 = arith.constant 3 : i32
    %17 = vector.broadcast %c3_i32 : i32 to vector<1x256xi32>
    %18 = arith.cmpi sge, %15, %17 : vector<1x256xi32>
    %c19_i32 = arith.constant 19 : i32
    %19 = vector.broadcast %c19_i32 : i32 to vector<1x256xi32>
    %20 = arith.cmpi slt, %15, %19 : vector<1x256xi32>
    %21 = arith.andi %18, %20 : vector<1x256xi1>
    %c2_i32 = arith.constant 2 : i32
    %22 = vector.broadcast %c2_i32 : i32 to vector<1x256xi32>
    %23 = arith.cmpi sge, %15, %22 : vector<1x256xi32>
    %c18_i32 = arith.constant 18 : i32
    %24 = vector.broadcast %c18_i32 : i32 to vector<1x256xi32>
    %25 = arith.cmpi slt, %15, %24 : vector<1x256xi32>
    %26 = arith.andi %23, %25 : vector<1x256xi1>
    %c1_i32 = arith.constant 1 : i32
    %27 = vector.broadcast %c1_i32 : i32 to vector<1x256xi32>
    %28 = arith.cmpi sge, %15, %27 : vector<1x256xi32>
    %c17_i32 = arith.constant 17 : i32
    %29 = vector.broadcast %c17_i32 : i32 to vector<1x256xi32>
    %30 = arith.cmpi slt, %15, %29 : vector<1x256xi32>
    %31 = arith.andi %28, %30 : vector<1x256xi1>
    %c0_i32 = arith.constant 0 : i32
    %32 = vector.broadcast %c0_i32 : i32 to vector<1x256xi32>
    %33 = arith.cmpi sge, %15, %32 : vector<1x256xi32>
    %c16_i32 = arith.constant 16 : i32
    %34 = vector.broadcast %c16_i32 : i32 to vector<1x256xi32>
    %35 = arith.cmpi slt, %15, %34 : vector<1x256xi32>
    %36 = arith.andi %33, %35 : vector<1x256xi1>
    %c-1_i32 = arith.constant -1 : i32
    %37 = vector.broadcast %c-1_i32 : i32 to vector<1x256xi32>
    %38 = arith.cmpi sge, %15, %37 : vector<1x256xi32>
    %c15_i32 = arith.constant 15 : i32
    %39 = vector.broadcast %c15_i32 : i32 to vector<1x256xi32>
    %40 = arith.cmpi slt, %15, %39 : vector<1x256xi32>
    %41 = arith.andi %38, %40 : vector<1x256xi1>
    %c-2_i32 = arith.constant -2 : i32
    %42 = vector.broadcast %c-2_i32 : i32 to vector<1x256xi32>
    %43 = arith.cmpi sge, %15, %42 : vector<1x256xi32>
    %c14_i32 = arith.constant 14 : i32
    %44 = vector.broadcast %c14_i32 : i32 to vector<1x256xi32>
    %45 = arith.cmpi slt, %15, %44 : vector<1x256xi32>
    %46 = arith.andi %43, %45 : vector<1x256xi1>
    %c-3_i32 = arith.constant -3 : i32
    %47 = vector.broadcast %c-3_i32 : i32 to vector<1x256xi32>
    %48 = arith.cmpi sge, %15, %47 : vector<1x256xi32>
    %c13_i32 = arith.constant 13 : i32
    %49 = vector.broadcast %c13_i32 : i32 to vector<1x256xi32>
    %50 = arith.cmpi slt, %15, %49 : vector<1x256xi32>
    %51 = arith.andi %48, %50 : vector<1x256xi1>
    %c3_i32_17 = arith.constant 3 : i32
    %52 = vector.broadcast %c3_i32_17 : i32 to vector<1x256xi32>
    %53 = arith.cmpi sge, %16, %52 : vector<1x256xi32>
    %c19_i32_18 = arith.constant 19 : i32
    %54 = vector.broadcast %c19_i32_18 : i32 to vector<1x256xi32>
    %55 = arith.cmpi slt, %16, %54 : vector<1x256xi32>
    %56 = arith.andi %53, %55 : vector<1x256xi1>
    %c2_i32_19 = arith.constant 2 : i32
    %57 = vector.broadcast %c2_i32_19 : i32 to vector<1x256xi32>
    %58 = arith.cmpi sge, %16, %57 : vector<1x256xi32>
    %c18_i32_20 = arith.constant 18 : i32
    %59 = vector.broadcast %c18_i32_20 : i32 to vector<1x256xi32>
    %60 = arith.cmpi slt, %16, %59 : vector<1x256xi32>
    %61 = arith.andi %58, %60 : vector<1x256xi1>
    %c1_i32_21 = arith.constant 1 : i32
    %62 = vector.broadcast %c1_i32_21 : i32 to vector<1x256xi32>
    %63 = arith.cmpi sge, %16, %62 : vector<1x256xi32>
    %c17_i32_22 = arith.constant 17 : i32
    %64 = vector.broadcast %c17_i32_22 : i32 to vector<1x256xi32>
    %65 = arith.cmpi slt, %16, %64 : vector<1x256xi32>
    %66 = arith.andi %63, %65 : vector<1x256xi1>
    %c0_i32_23 = arith.constant 0 : i32
    %67 = vector.broadcast %c0_i32_23 : i32 to vector<1x256xi32>
    %68 = arith.cmpi sge, %16, %67 : vector<1x256xi32>
    %c16_i32_24 = arith.constant 16 : i32
    %69 = vector.broadcast %c16_i32_24 : i32 to vector<1x256xi32>
    %70 = arith.cmpi slt, %16, %69 : vector<1x256xi32>
    %71 = arith.andi %68, %70 : vector<1x256xi1>
    %c-1_i32_25 = arith.constant -1 : i32
    %72 = vector.broadcast %c-1_i32_25 : i32 to vector<1x256xi32>
    %73 = arith.cmpi sge, %16, %72 : vector<1x256xi32>
    %c15_i32_26 = arith.constant 15 : i32
    %74 = vector.broadcast %c15_i32_26 : i32 to vector<1x256xi32>
    %75 = arith.cmpi slt, %16, %74 : vector<1x256xi32>
    %76 = arith.andi %73, %75 : vector<1x256xi1>
    %c-2_i32_27 = arith.constant -2 : i32
    %77 = vector.broadcast %c-2_i32_27 : i32 to vector<1x256xi32>
    %78 = arith.cmpi sge, %16, %77 : vector<1x256xi32>
    %c14_i32_28 = arith.constant 14 : i32
    %79 = vector.broadcast %c14_i32_28 : i32 to vector<1x256xi32>
    %80 = arith.cmpi slt, %16, %79 : vector<1x256xi32>
    %81 = arith.andi %78, %80 : vector<1x256xi1>
    %c-3_i32_29 = arith.constant -3 : i32
    %82 = vector.broadcast %c-3_i32_29 : i32 to vector<1x256xi32>
    %83 = arith.cmpi sge, %16, %82 : vector<1x256xi32>
    %c13_i32_30 = arith.constant 13 : i32
    %84 = vector.broadcast %c13_i32_30 : i32 to vector<1x256xi32>
    %85 = arith.cmpi slt, %16, %84 : vector<1x256xi32>
    %86 = arith.andi %83, %85 : vector<1x256xi1>
    %cst_31 = arith.constant 0.000000e+00 : f32
    %87 = vector.broadcast %cst_31 : f32 to vector<8x256xf32>
    %c51_i32 = arith.constant 51 : i32
    %88 = tpu.dynamic_rotate %14 by %c51_i32 dim 1 : vector<8x256xf32>, i32 -> vector<8x256xf32>
    %89 = arith.andi %21, %56 : vector<1x256xi1>
    %90 = vector.extract_strided_slice %7 {offsets = [0, 0], sizes = [8, 1], strides = [1, 1]} : vector<8x49xf32> to vector<8x1xf32>
    %cst_32 = arith.constant 0.000000e+00 : f32
    %91 = vector.shape_cast %89 : vector<1x256xi1> to vector<1x256xi1>
    %92 = vector.broadcast %91 : vector<1x256xi1> to vector<8x256xi1>
    %93 = vector.broadcast %cst_32 : f32 to vector<8x256xf32>
    %94 = arith.select %92, %88, %93 : vector<8x256xi1>, vector<8x256xf32>
    %95 = vector.broadcast %90 : vector<8x1xf32> to vector<8x256xf32>
    %96 = arith.mulf %94, %95 : vector<8x256xf32>
    %97 = arith.addf %87, %96 : vector<8x256xf32>
    %c50_i32 = arith.constant 50 : i32
    %98 = tpu.dynamic_rotate %14 by %c50_i32 dim 1 : vector<8x256xf32>, i32 -> vector<8x256xf32>
    %99 = arith.andi %21, %61 : vector<1x256xi1>
    %100 = vector.extract_strided_slice %7 {offsets = [0, 1], sizes = [8, 1], strides = [1, 1]} : vector<8x49xf32> to vector<8x1xf32>
    %cst_33 = arith.constant 0.000000e+00 : f32
    %101 = vector.shape_cast %99 : vector<1x256xi1> to vector<1x256xi1>
    %102 = vector.broadcast %101 : vector<1x256xi1> to vector<8x256xi1>
    %103 = vector.broadcast %cst_33 : f32 to vector<8x256xf32>
    %104 = arith.select %102, %98, %103 : vector<8x256xi1>, vector<8x256xf32>
    %105 = vector.broadcast %100 : vector<8x1xf32> to vector<8x256xf32>
    %106 = arith.mulf %104, %105 : vector<8x256xf32>
    %107 = arith.addf %97, %106 : vector<8x256xf32>
    %c49_i32 = arith.constant 49 : i32
    %108 = tpu.dynamic_rotate %14 by %c49_i32 dim 1 : vector<8x256xf32>, i32 -> vector<8x256xf32>
    %109 = arith.andi %21, %66 : vector<1x256xi1>
    %110 = vector.extract_strided_slice %7 {offsets = [0, 2], sizes = [8, 1], strides = [1, 1]} : vector<8x49xf32> to vector<8x1xf32>
    %cst_34 = arith.constant 0.000000e+00 : f32
    %111 = vector.shape_cast %109 : vector<1x256xi1> to vector<1x256xi1>
    %112 = vector.broadcast %111 : vector<1x256xi1> to vector<8x256xi1>
    %113 = vector.broadcast %cst_34 : f32 to vector<8x256xf32>
    %114 = arith.select %112, %108, %113 : vector<8x256xi1>, vector<8x256xf32>
    %115 = vector.broadcast %110 : vector<8x1xf32> to vector<8x256xf32>
    %116 = arith.mulf %114, %115 : vector<8x256xf32>
    %117 = arith.addf %107, %116 : vector<8x256xf32>
    %c48_i32 = arith.constant 48 : i32
    %118 = tpu.dynamic_rotate %14 by %c48_i32 dim 1 : vector<8x256xf32>, i32 -> vector<8x256xf32>
    %119 = arith.andi %21, %71 : vector<1x256xi1>
    %120 = vector.extract_strided_slice %7 {offsets = [0, 3], sizes = [8, 1], strides = [1, 1]} : vector<8x49xf32> to vector<8x1xf32>
    %cst_35 = arith.constant 0.000000e+00 : f32
    %121 = vector.shape_cast %119 : vector<1x256xi1> to vector<1x256xi1>
    %122 = vector.broadcast %121 : vector<1x256xi1> to vector<8x256xi1>
    %123 = vector.broadcast %cst_35 : f32 to vector<8x256xf32>
    %124 = arith.select %122, %118, %123 : vector<8x256xi1>, vector<8x256xf32>
    %125 = vector.broadcast %120 : vector<8x1xf32> to vector<8x256xf32>
    %126 = arith.mulf %124, %125 : vector<8x256xf32>
    %127 = arith.addf %117, %126 : vector<8x256xf32>
    %c47_i32 = arith.constant 47 : i32
    %128 = tpu.dynamic_rotate %14 by %c47_i32 dim 1 : vector<8x256xf32>, i32 -> vector<8x256xf32>
    %129 = arith.andi %21, %76 : vector<1x256xi1>
    %130 = vector.extract_strided_slice %7 {offsets = [0, 4], sizes = [8, 1], strides = [1, 1]} : vector<8x49xf32> to vector<8x1xf32>
    %cst_36 = arith.constant 0.000000e+00 : f32
    %131 = vector.shape_cast %129 : vector<1x256xi1> to vector<1x256xi1>
    %132 = vector.broadcast %131 : vector<1x256xi1> to vector<8x256xi1>
    %133 = vector.broadcast %cst_36 : f32 to vector<8x256xf32>
    %134 = arith.select %132, %128, %133 : vector<8x256xi1>, vector<8x256xf32>
    %135 = vector.broadcast %130 : vector<8x1xf32> to vector<8x256xf32>
    %136 = arith.mulf %134, %135 : vector<8x256xf32>
    %137 = arith.addf %127, %136 : vector<8x256xf32>
    %c46_i32 = arith.constant 46 : i32
    %138 = tpu.dynamic_rotate %14 by %c46_i32 dim 1 : vector<8x256xf32>, i32 -> vector<8x256xf32>
    %139 = arith.andi %21, %81 : vector<1x256xi1>
    %140 = vector.extract_strided_slice %7 {offsets = [0, 5], sizes = [8, 1], strides = [1, 1]} : vector<8x49xf32> to vector<8x1xf32>
    %cst_37 = arith.constant 0.000000e+00 : f32
    %141 = vector.shape_cast %139 : vector<1x256xi1> to vector<1x256xi1>
    %142 = vector.broadcast %141 : vector<1x256xi1> to vector<8x256xi1>
    %143 = vector.broadcast %cst_37 : f32 to vector<8x256xf32>
    %144 = arith.select %142, %138, %143 : vector<8x256xi1>, vector<8x256xf32>
    %145 = vector.broadcast %140 : vector<8x1xf32> to vector<8x256xf32>
    %146 = arith.mulf %144, %145 : vector<8x256xf32>
    %147 = arith.addf %137, %146 : vector<8x256xf32>
    %c45_i32 = arith.constant 45 : i32
    %148 = tpu.dynamic_rotate %14 by %c45_i32 dim 1 : vector<8x256xf32>, i32 -> vector<8x256xf32>
    %149 = arith.andi %21, %86 : vector<1x256xi1>
    %150 = vector.extract_strided_slice %7 {offsets = [0, 6], sizes = [8, 1], strides = [1, 1]} : vector<8x49xf32> to vector<8x1xf32>
    %cst_38 = arith.constant 0.000000e+00 : f32
    %151 = vector.shape_cast %149 : vector<1x256xi1> to vector<1x256xi1>
    %152 = vector.broadcast %151 : vector<1x256xi1> to vector<8x256xi1>
    %153 = vector.broadcast %cst_38 : f32 to vector<8x256xf32>
    %154 = arith.select %152, %148, %153 : vector<8x256xi1>, vector<8x256xf32>
    %155 = vector.broadcast %150 : vector<8x1xf32> to vector<8x256xf32>
    %156 = arith.mulf %154, %155 : vector<8x256xf32>
    %157 = arith.addf %147, %156 : vector<8x256xf32>
    %c35_i32 = arith.constant 35 : i32
    %158 = tpu.dynamic_rotate %14 by %c35_i32 dim 1 : vector<8x256xf32>, i32 -> vector<8x256xf32>
    %159 = arith.andi %26, %56 : vector<1x256xi1>
    %160 = vector.extract_strided_slice %7 {offsets = [0, 7], sizes = [8, 1], strides = [1, 1]} : vector<8x49xf32> to vector<8x1xf32>
    %cst_39 = arith.constant 0.000000e+00 : f32
    %161 = vector.shape_cast %159 : vector<1x256xi1> to vector<1x256xi1>
    %162 = vector.broadcast %161 : vector<1x256xi1> to vector<8x256xi1>
    %163 = vector.broadcast %cst_39 : f32 to vector<8x256xf32>
    %164 = arith.select %162, %158, %163 : vector<8x256xi1>, vector<8x256xf32>
    %165 = vector.broadcast %160 : vector<8x1xf32> to vector<8x256xf32>
    %166 = arith.mulf %164, %165 : vector<8x256xf32>
    %167 = arith.addf %157, %166 : vector<8x256xf32>
    %c34_i32 = arith.constant 34 : i32
    %168 = tpu.dynamic_rotate %14 by %c34_i32 dim 1 : vector<8x256xf32>, i32 -> vector<8x256xf32>
    %169 = arith.andi %26, %61 : vector<1x256xi1>
    %170 = vector.extract_strided_slice %7 {offsets = [0, 8], sizes = [8, 1], strides = [1, 1]} : vector<8x49xf32> to vector<8x1xf32>
    %cst_40 = arith.constant 0.000000e+00 : f32
    %171 = vector.shape_cast %169 : vector<1x256xi1> to vector<1x256xi1>
    %172 = vector.broadcast %171 : vector<1x256xi1> to vector<8x256xi1>
    %173 = vector.broadcast %cst_40 : f32 to vector<8x256xf32>
    %174 = arith.select %172, %168, %173 : vector<8x256xi1>, vector<8x256xf32>
    %175 = vector.broadcast %170 : vector<8x1xf32> to vector<8x256xf32>
    %176 = arith.mulf %174, %175 : vector<8x256xf32>
    %177 = arith.addf %167, %176 : vector<8x256xf32>
    %c33_i32 = arith.constant 33 : i32
    %178 = tpu.dynamic_rotate %14 by %c33_i32 dim 1 : vector<8x256xf32>, i32 -> vector<8x256xf32>
    %179 = arith.andi %26, %66 : vector<1x256xi1>
    %180 = vector.extract_strided_slice %7 {offsets = [0, 9], sizes = [8, 1], strides = [1, 1]} : vector<8x49xf32> to vector<8x1xf32>
    %cst_41 = arith.constant 0.000000e+00 : f32
    %181 = vector.shape_cast %179 : vector<1x256xi1> to vector<1x256xi1>
    %182 = vector.broadcast %181 : vector<1x256xi1> to vector<8x256xi1>
    %183 = vector.broadcast %cst_41 : f32 to vector<8x256xf32>
    %184 = arith.select %182, %178, %183 : vector<8x256xi1>, vector<8x256xf32>
    %185 = vector.broadcast %180 : vector<8x1xf32> to vector<8x256xf32>
    %186 = arith.mulf %184, %185 : vector<8x256xf32>
    %187 = arith.addf %177, %186 : vector<8x256xf32>
    %c32_i32 = arith.constant 32 : i32
    %188 = tpu.dynamic_rotate %14 by %c32_i32 dim 1 : vector<8x256xf32>, i32 -> vector<8x256xf32>
    %189 = arith.andi %26, %71 : vector<1x256xi1>
    %190 = vector.extract_strided_slice %7 {offsets = [0, 10], sizes = [8, 1], strides = [1, 1]} : vector<8x49xf32> to vector<8x1xf32>
    %cst_42 = arith.constant 0.000000e+00 : f32
    %191 = vector.shape_cast %189 : vector<1x256xi1> to vector<1x256xi1>
    %192 = vector.broadcast %191 : vector<1x256xi1> to vector<8x256xi1>
    %193 = vector.broadcast %cst_42 : f32 to vector<8x256xf32>
    %194 = arith.select %192, %188, %193 : vector<8x256xi1>, vector<8x256xf32>
    %195 = vector.broadcast %190 : vector<8x1xf32> to vector<8x256xf32>
    %196 = arith.mulf %194, %195 : vector<8x256xf32>
    %197 = arith.addf %187, %196 : vector<8x256xf32>
    %c31_i32 = arith.constant 31 : i32
    %198 = tpu.dynamic_rotate %14 by %c31_i32 dim 1 : vector<8x256xf32>, i32 -> vector<8x256xf32>
    %199 = arith.andi %26, %76 : vector<1x256xi1>
    %200 = vector.extract_strided_slice %7 {offsets = [0, 11], sizes = [8, 1], strides = [1, 1]} : vector<8x49xf32> to vector<8x1xf32>
    %cst_43 = arith.constant 0.000000e+00 : f32
    %201 = vector.shape_cast %199 : vector<1x256xi1> to vector<1x256xi1>
    %202 = vector.broadcast %201 : vector<1x256xi1> to vector<8x256xi1>
    %203 = vector.broadcast %cst_43 : f32 to vector<8x256xf32>
    %204 = arith.select %202, %198, %203 : vector<8x256xi1>, vector<8x256xf32>
    %205 = vector.broadcast %200 : vector<8x1xf32> to vector<8x256xf32>
    %206 = arith.mulf %204, %205 : vector<8x256xf32>
    %207 = arith.addf %197, %206 : vector<8x256xf32>
    %c30_i32 = arith.constant 30 : i32
    %208 = tpu.dynamic_rotate %14 by %c30_i32 dim 1 : vector<8x256xf32>, i32 -> vector<8x256xf32>
    %209 = arith.andi %26, %81 : vector<1x256xi1>
    %210 = vector.extract_strided_slice %7 {offsets = [0, 12], sizes = [8, 1], strides = [1, 1]} : vector<8x49xf32> to vector<8x1xf32>
    %cst_44 = arith.constant 0.000000e+00 : f32
    %211 = vector.shape_cast %209 : vector<1x256xi1> to vector<1x256xi1>
    %212 = vector.broadcast %211 : vector<1x256xi1> to vector<8x256xi1>
    %213 = vector.broadcast %cst_44 : f32 to vector<8x256xf32>
    %214 = arith.select %212, %208, %213 : vector<8x256xi1>, vector<8x256xf32>
    %215 = vector.broadcast %210 : vector<8x1xf32> to vector<8x256xf32>
    %216 = arith.mulf %214, %215 : vector<8x256xf32>
    %217 = arith.addf %207, %216 : vector<8x256xf32>
    %c29_i32 = arith.constant 29 : i32
    %218 = tpu.dynamic_rotate %14 by %c29_i32 dim 1 : vector<8x256xf32>, i32 -> vector<8x256xf32>
    %219 = arith.andi %26, %86 : vector<1x256xi1>
    %220 = vector.extract_strided_slice %7 {offsets = [0, 13], sizes = [8, 1], strides = [1, 1]} : vector<8x49xf32> to vector<8x1xf32>
    %cst_45 = arith.constant 0.000000e+00 : f32
    %221 = vector.shape_cast %219 : vector<1x256xi1> to vector<1x256xi1>
    %222 = vector.broadcast %221 : vector<1x256xi1> to vector<8x256xi1>
    %223 = vector.broadcast %cst_45 : f32 to vector<8x256xf32>
    %224 = arith.select %222, %218, %223 : vector<8x256xi1>, vector<8x256xf32>
    %225 = vector.broadcast %220 : vector<8x1xf32> to vector<8x256xf32>
    %226 = arith.mulf %224, %225 : vector<8x256xf32>
    %227 = arith.addf %217, %226 : vector<8x256xf32>
    %c19_i32_46 = arith.constant 19 : i32
    %228 = tpu.dynamic_rotate %14 by %c19_i32_46 dim 1 : vector<8x256xf32>, i32 -> vector<8x256xf32>
    %229 = arith.andi %31, %56 : vector<1x256xi1>
    %230 = vector.extract_strided_slice %7 {offsets = [0, 14], sizes = [8, 1], strides = [1, 1]} : vector<8x49xf32> to vector<8x1xf32>
    %cst_47 = arith.constant 0.000000e+00 : f32
    %231 = vector.shape_cast %229 : vector<1x256xi1> to vector<1x256xi1>
    %232 = vector.broadcast %231 : vector<1x256xi1> to vector<8x256xi1>
    %233 = vector.broadcast %cst_47 : f32 to vector<8x256xf32>
    %234 = arith.select %232, %228, %233 : vector<8x256xi1>, vector<8x256xf32>
    %235 = vector.broadcast %230 : vector<8x1xf32> to vector<8x256xf32>
    %236 = arith.mulf %234, %235 : vector<8x256xf32>
    %237 = arith.addf %227, %236 : vector<8x256xf32>
    %c18_i32_48 = arith.constant 18 : i32
    %238 = tpu.dynamic_rotate %14 by %c18_i32_48 dim 1 : vector<8x256xf32>, i32 -> vector<8x256xf32>
    %239 = arith.andi %31, %61 : vector<1x256xi1>
    %240 = vector.extract_strided_slice %7 {offsets = [0, 15], sizes = [8, 1], strides = [1, 1]} : vector<8x49xf32> to vector<8x1xf32>
    %cst_49 = arith.constant 0.000000e+00 : f32
    %241 = vector.shape_cast %239 : vector<1x256xi1> to vector<1x256xi1>
    %242 = vector.broadcast %241 : vector<1x256xi1> to vector<8x256xi1>
    %243 = vector.broadcast %cst_49 : f32 to vector<8x256xf32>
    %244 = arith.select %242, %238, %243 : vector<8x256xi1>, vector<8x256xf32>
    %245 = vector.broadcast %240 : vector<8x1xf32> to vector<8x256xf32>
    %246 = arith.mulf %244, %245 : vector<8x256xf32>
    %247 = arith.addf %237, %246 : vector<8x256xf32>
    %c17_i32_50 = arith.constant 17 : i32
    %248 = tpu.dynamic_rotate %14 by %c17_i32_50 dim 1 : vector<8x256xf32>, i32 -> vector<8x256xf32>
    %249 = arith.andi %31, %66 : vector<1x256xi1>
    %250 = vector.extract_strided_slice %7 {offsets = [0, 16], sizes = [8, 1], strides = [1, 1]} : vector<8x49xf32> to vector<8x1xf32>
    %cst_51 = arith.constant 0.000000e+00 : f32
    %251 = vector.shape_cast %249 : vector<1x256xi1> to vector<1x256xi1>
    %252 = vector.broadcast %251 : vector<1x256xi1> to vector<8x256xi1>
    %253 = vector.broadcast %cst_51 : f32 to vector<8x256xf32>
    %254 = arith.select %252, %248, %253 : vector<8x256xi1>, vector<8x256xf32>
    %255 = vector.broadcast %250 : vector<8x1xf32> to vector<8x256xf32>
    %256 = arith.mulf %254, %255 : vector<8x256xf32>
    %257 = arith.addf %247, %256 : vector<8x256xf32>
    %c16_i32_52 = arith.constant 16 : i32
    %258 = tpu.dynamic_rotate %14 by %c16_i32_52 dim 1 : vector<8x256xf32>, i32 -> vector<8x256xf32>
    %259 = arith.andi %31, %71 : vector<1x256xi1>
    %260 = vector.extract_strided_slice %7 {offsets = [0, 17], sizes = [8, 1], strides = [1, 1]} : vector<8x49xf32> to vector<8x1xf32>
    %cst_53 = arith.constant 0.000000e+00 : f32
    %261 = vector.shape_cast %259 : vector<1x256xi1> to vector<1x256xi1>
    %262 = vector.broadcast %261 : vector<1x256xi1> to vector<8x256xi1>
    %263 = vector.broadcast %cst_53 : f32 to vector<8x256xf32>
    %264 = arith.select %262, %258, %263 : vector<8x256xi1>, vector<8x256xf32>
    %265 = vector.broadcast %260 : vector<8x1xf32> to vector<8x256xf32>
    %266 = arith.mulf %264, %265 : vector<8x256xf32>
    %267 = arith.addf %257, %266 : vector<8x256xf32>
    %c15_i32_54 = arith.constant 15 : i32
    %268 = tpu.dynamic_rotate %14 by %c15_i32_54 dim 1 : vector<8x256xf32>, i32 -> vector<8x256xf32>
    %269 = arith.andi %31, %76 : vector<1x256xi1>
    %270 = vector.extract_strided_slice %7 {offsets = [0, 18], sizes = [8, 1], strides = [1, 1]} : vector<8x49xf32> to vector<8x1xf32>
    %cst_55 = arith.constant 0.000000e+00 : f32
    %271 = vector.shape_cast %269 : vector<1x256xi1> to vector<1x256xi1>
    %272 = vector.broadcast %271 : vector<1x256xi1> to vector<8x256xi1>
    %273 = vector.broadcast %cst_55 : f32 to vector<8x256xf32>
    %274 = arith.select %272, %268, %273 : vector<8x256xi1>, vector<8x256xf32>
    %275 = vector.broadcast %270 : vector<8x1xf32> to vector<8x256xf32>
    %276 = arith.mulf %274, %275 : vector<8x256xf32>
    %277 = arith.addf %267, %276 : vector<8x256xf32>
    %c14_i32_56 = arith.constant 14 : i32
    %278 = tpu.dynamic_rotate %14 by %c14_i32_56 dim 1 : vector<8x256xf32>, i32 -> vector<8x256xf32>
    %279 = arith.andi %31, %81 : vector<1x256xi1>
    %280 = vector.extract_strided_slice %7 {offsets = [0, 19], sizes = [8, 1], strides = [1, 1]} : vector<8x49xf32> to vector<8x1xf32>
    %cst_57 = arith.constant 0.000000e+00 : f32
    %281 = vector.shape_cast %279 : vector<1x256xi1> to vector<1x256xi1>
    %282 = vector.broadcast %281 : vector<1x256xi1> to vector<8x256xi1>
    %283 = vector.broadcast %cst_57 : f32 to vector<8x256xf32>
    %284 = arith.select %282, %278, %283 : vector<8x256xi1>, vector<8x256xf32>
    %285 = vector.broadcast %280 : vector<8x1xf32> to vector<8x256xf32>
    %286 = arith.mulf %284, %285 : vector<8x256xf32>
    %287 = arith.addf %277, %286 : vector<8x256xf32>
    %c13_i32_58 = arith.constant 13 : i32
    %288 = tpu.dynamic_rotate %14 by %c13_i32_58 dim 1 : vector<8x256xf32>, i32 -> vector<8x256xf32>
    %289 = arith.andi %31, %86 : vector<1x256xi1>
    %290 = vector.extract_strided_slice %7 {offsets = [0, 20], sizes = [8, 1], strides = [1, 1]} : vector<8x49xf32> to vector<8x1xf32>
    %cst_59 = arith.constant 0.000000e+00 : f32
    %291 = vector.shape_cast %289 : vector<1x256xi1> to vector<1x256xi1>
    %292 = vector.broadcast %291 : vector<1x256xi1> to vector<8x256xi1>
    %293 = vector.broadcast %cst_59 : f32 to vector<8x256xf32>
    %294 = arith.select %292, %288, %293 : vector<8x256xi1>, vector<8x256xf32>
    %295 = vector.broadcast %290 : vector<8x1xf32> to vector<8x256xf32>
    %296 = arith.mulf %294, %295 : vector<8x256xf32>
    %297 = arith.addf %287, %296 : vector<8x256xf32>
    %c3_i32_60 = arith.constant 3 : i32
    %298 = tpu.dynamic_rotate %14 by %c3_i32_60 dim 1 : vector<8x256xf32>, i32 -> vector<8x256xf32>
    %299 = arith.andi %36, %56 : vector<1x256xi1>
    %300 = vector.extract_strided_slice %7 {offsets = [0, 21], sizes = [8, 1], strides = [1, 1]} : vector<8x49xf32> to vector<8x1xf32>
    %cst_61 = arith.constant 0.000000e+00 : f32
    %301 = vector.shape_cast %299 : vector<1x256xi1> to vector<1x256xi1>
    %302 = vector.broadcast %301 : vector<1x256xi1> to vector<8x256xi1>
    %303 = vector.broadcast %cst_61 : f32 to vector<8x256xf32>
    %304 = arith.select %302, %298, %303 : vector<8x256xi1>, vector<8x256xf32>
    %305 = vector.broadcast %300 : vector<8x1xf32> to vector<8x256xf32>
    %306 = arith.mulf %304, %305 : vector<8x256xf32>
    %307 = arith.addf %297, %306 : vector<8x256xf32>
    %c2_i32_62 = arith.constant 2 : i32
    %308 = tpu.dynamic_rotate %14 by %c2_i32_62 dim 1 : vector<8x256xf32>, i32 -> vector<8x256xf32>
    %309 = arith.andi %36, %61 : vector<1x256xi1>
    %310 = vector.extract_strided_slice %7 {offsets = [0, 22], sizes = [8, 1], strides = [1, 1]} : vector<8x49xf32> to vector<8x1xf32>
    %cst_63 = arith.constant 0.000000e+00 : f32
    %311 = vector.shape_cast %309 : vector<1x256xi1> to vector<1x256xi1>
    %312 = vector.broadcast %311 : vector<1x256xi1> to vector<8x256xi1>
    %313 = vector.broadcast %cst_63 : f32 to vector<8x256xf32>
    %314 = arith.select %312, %308, %313 : vector<8x256xi1>, vector<8x256xf32>
    %315 = vector.broadcast %310 : vector<8x1xf32> to vector<8x256xf32>
    %316 = arith.mulf %314, %315 : vector<8x256xf32>
    %317 = arith.addf %307, %316 : vector<8x256xf32>
    %c1_i32_64 = arith.constant 1 : i32
    %318 = tpu.dynamic_rotate %14 by %c1_i32_64 dim 1 : vector<8x256xf32>, i32 -> vector<8x256xf32>
    %319 = arith.andi %36, %66 : vector<1x256xi1>
    %320 = vector.extract_strided_slice %7 {offsets = [0, 23], sizes = [8, 1], strides = [1, 1]} : vector<8x49xf32> to vector<8x1xf32>
    %cst_65 = arith.constant 0.000000e+00 : f32
    %321 = vector.shape_cast %319 : vector<1x256xi1> to vector<1x256xi1>
    %322 = vector.broadcast %321 : vector<1x256xi1> to vector<8x256xi1>
    %323 = vector.broadcast %cst_65 : f32 to vector<8x256xf32>
    %324 = arith.select %322, %318, %323 : vector<8x256xi1>, vector<8x256xf32>
    %325 = vector.broadcast %320 : vector<8x1xf32> to vector<8x256xf32>
    %326 = arith.mulf %324, %325 : vector<8x256xf32>
    %327 = arith.addf %317, %326 : vector<8x256xf32>
    %328 = arith.andi %36, %71 : vector<1x256xi1>
    %329 = vector.extract_strided_slice %7 {offsets = [0, 24], sizes = [8, 1], strides = [1, 1]} : vector<8x49xf32> to vector<8x1xf32>
    %cst_66 = arith.constant 0.000000e+00 : f32
    %330 = vector.shape_cast %328 : vector<1x256xi1> to vector<1x256xi1>
    %331 = vector.broadcast %330 : vector<1x256xi1> to vector<8x256xi1>
    %332 = vector.broadcast %cst_66 : f32 to vector<8x256xf32>
    %333 = arith.select %331, %14, %332 : vector<8x256xi1>, vector<8x256xf32>
    %334 = vector.broadcast %329 : vector<8x1xf32> to vector<8x256xf32>
    %335 = arith.mulf %333, %334 : vector<8x256xf32>
    %336 = arith.addf %327, %335 : vector<8x256xf32>
    %c255_i32 = arith.constant 255 : i32
    %337 = tpu.dynamic_rotate %14 by %c255_i32 dim 1 : vector<8x256xf32>, i32 -> vector<8x256xf32>
    %338 = arith.andi %36, %76 : vector<1x256xi1>
    %339 = vector.extract_strided_slice %7 {offsets = [0, 25], sizes = [8, 1], strides = [1, 1]} : vector<8x49xf32> to vector<8x1xf32>
    %cst_67 = arith.constant 0.000000e+00 : f32
    %340 = vector.shape_cast %338 : vector<1x256xi1> to vector<1x256xi1>
    %341 = vector.broadcast %340 : vector<1x256xi1> to vector<8x256xi1>
    %342 = vector.broadcast %cst_67 : f32 to vector<8x256xf32>
    %343 = arith.select %341, %337, %342 : vector<8x256xi1>, vector<8x256xf32>
    %344 = vector.broadcast %339 : vector<8x1xf32> to vector<8x256xf32>
    %345 = arith.mulf %343, %344 : vector<8x256xf32>
    %346 = arith.addf %336, %345 : vector<8x256xf32>
    %c254_i32 = arith.constant 254 : i32
    %347 = tpu.dynamic_rotate %14 by %c254_i32 dim 1 : vector<8x256xf32>, i32 -> vector<8x256xf32>
    %348 = arith.andi %36, %81 : vector<1x256xi1>
    %349 = vector.extract_strided_slice %7 {offsets = [0, 26], sizes = [8, 1], strides = [1, 1]} : vector<8x49xf32> to vector<8x1xf32>
    %cst_68 = arith.constant 0.000000e+00 : f32
    %350 = vector.shape_cast %348 : vector<1x256xi1> to vector<1x256xi1>
    %351 = vector.broadcast %350 : vector<1x256xi1> to vector<8x256xi1>
    %352 = vector.broadcast %cst_68 : f32 to vector<8x256xf32>
    %353 = arith.select %351, %347, %352 : vector<8x256xi1>, vector<8x256xf32>
    %354 = vector.broadcast %349 : vector<8x1xf32> to vector<8x256xf32>
    %355 = arith.mulf %353, %354 : vector<8x256xf32>
    %356 = arith.addf %346, %355 : vector<8x256xf32>
    %c253_i32 = arith.constant 253 : i32
    %357 = tpu.dynamic_rotate %14 by %c253_i32 dim 1 : vector<8x256xf32>, i32 -> vector<8x256xf32>
    %358 = arith.andi %36, %86 : vector<1x256xi1>
    %359 = vector.extract_strided_slice %7 {offsets = [0, 27], sizes = [8, 1], strides = [1, 1]} : vector<8x49xf32> to vector<8x1xf32>
    %cst_69 = arith.constant 0.000000e+00 : f32
    %360 = vector.shape_cast %358 : vector<1x256xi1> to vector<1x256xi1>
    %361 = vector.broadcast %360 : vector<1x256xi1> to vector<8x256xi1>
    %362 = vector.broadcast %cst_69 : f32 to vector<8x256xf32>
    %363 = arith.select %361, %357, %362 : vector<8x256xi1>, vector<8x256xf32>
    %364 = vector.broadcast %359 : vector<8x1xf32> to vector<8x256xf32>
    %365 = arith.mulf %363, %364 : vector<8x256xf32>
    %366 = arith.addf %356, %365 : vector<8x256xf32>
    %c243_i32 = arith.constant 243 : i32
    %367 = tpu.dynamic_rotate %14 by %c243_i32 dim 1 : vector<8x256xf32>, i32 -> vector<8x256xf32>
    %368 = arith.andi %41, %56 : vector<1x256xi1>
    %369 = vector.extract_strided_slice %7 {offsets = [0, 28], sizes = [8, 1], strides = [1, 1]} : vector<8x49xf32> to vector<8x1xf32>
    %cst_70 = arith.constant 0.000000e+00 : f32
    %370 = vector.shape_cast %368 : vector<1x256xi1> to vector<1x256xi1>
    %371 = vector.broadcast %370 : vector<1x256xi1> to vector<8x256xi1>
    %372 = vector.broadcast %cst_70 : f32 to vector<8x256xf32>
    %373 = arith.select %371, %367, %372 : vector<8x256xi1>, vector<8x256xf32>
    %374 = vector.broadcast %369 : vector<8x1xf32> to vector<8x256xf32>
    %375 = arith.mulf %373, %374 : vector<8x256xf32>
    %376 = arith.addf %366, %375 : vector<8x256xf32>
    %c242_i32 = arith.constant 242 : i32
    %377 = tpu.dynamic_rotate %14 by %c242_i32 dim 1 : vector<8x256xf32>, i32 -> vector<8x256xf32>
    %378 = arith.andi %41, %61 : vector<1x256xi1>
    %379 = vector.extract_strided_slice %7 {offsets = [0, 29], sizes = [8, 1], strides = [1, 1]} : vector<8x49xf32> to vector<8x1xf32>
    %cst_71 = arith.constant 0.000000e+00 : f32
    %380 = vector.shape_cast %378 : vector<1x256xi1> to vector<1x256xi1>
    %381 = vector.broadcast %380 : vector<1x256xi1> to vector<8x256xi1>
    %382 = vector.broadcast %cst_71 : f32 to vector<8x256xf32>
    %383 = arith.select %381, %377, %382 : vector<8x256xi1>, vector<8x256xf32>
    %384 = vector.broadcast %379 : vector<8x1xf32> to vector<8x256xf32>
    %385 = arith.mulf %383, %384 : vector<8x256xf32>
    %386 = arith.addf %376, %385 : vector<8x256xf32>
    %c241_i32 = arith.constant 241 : i32
    %387 = tpu.dynamic_rotate %14 by %c241_i32 dim 1 : vector<8x256xf32>, i32 -> vector<8x256xf32>
    %388 = arith.andi %41, %66 : vector<1x256xi1>
    %389 = vector.extract_strided_slice %7 {offsets = [0, 30], sizes = [8, 1], strides = [1, 1]} : vector<8x49xf32> to vector<8x1xf32>
    %cst_72 = arith.constant 0.000000e+00 : f32
    %390 = vector.shape_cast %388 : vector<1x256xi1> to vector<1x256xi1>
    %391 = vector.broadcast %390 : vector<1x256xi1> to vector<8x256xi1>
    %392 = vector.broadcast %cst_72 : f32 to vector<8x256xf32>
    %393 = arith.select %391, %387, %392 : vector<8x256xi1>, vector<8x256xf32>
    %394 = vector.broadcast %389 : vector<8x1xf32> to vector<8x256xf32>
    %395 = arith.mulf %393, %394 : vector<8x256xf32>
    %396 = arith.addf %386, %395 : vector<8x256xf32>
    %c240_i32 = arith.constant 240 : i32
    %397 = tpu.dynamic_rotate %14 by %c240_i32 dim 1 : vector<8x256xf32>, i32 -> vector<8x256xf32>
    %398 = arith.andi %41, %71 : vector<1x256xi1>
    %399 = vector.extract_strided_slice %7 {offsets = [0, 31], sizes = [8, 1], strides = [1, 1]} : vector<8x49xf32> to vector<8x1xf32>
    %cst_73 = arith.constant 0.000000e+00 : f32
    %400 = vector.shape_cast %398 : vector<1x256xi1> to vector<1x256xi1>
    %401 = vector.broadcast %400 : vector<1x256xi1> to vector<8x256xi1>
    %402 = vector.broadcast %cst_73 : f32 to vector<8x256xf32>
    %403 = arith.select %401, %397, %402 : vector<8x256xi1>, vector<8x256xf32>
    %404 = vector.broadcast %399 : vector<8x1xf32> to vector<8x256xf32>
    %405 = arith.mulf %403, %404 : vector<8x256xf32>
    %406 = arith.addf %396, %405 : vector<8x256xf32>
    %c239_i32 = arith.constant 239 : i32
    %407 = tpu.dynamic_rotate %14 by %c239_i32 dim 1 : vector<8x256xf32>, i32 -> vector<8x256xf32>
    %408 = arith.andi %41, %76 : vector<1x256xi1>
    %409 = vector.extract_strided_slice %7 {offsets = [0, 32], sizes = [8, 1], strides = [1, 1]} : vector<8x49xf32> to vector<8x1xf32>
    %cst_74 = arith.constant 0.000000e+00 : f32
    %410 = vector.shape_cast %408 : vector<1x256xi1> to vector<1x256xi1>
    %411 = vector.broadcast %410 : vector<1x256xi1> to vector<8x256xi1>
    %412 = vector.broadcast %cst_74 : f32 to vector<8x256xf32>
    %413 = arith.select %411, %407, %412 : vector<8x256xi1>, vector<8x256xf32>
    %414 = vector.broadcast %409 : vector<8x1xf32> to vector<8x256xf32>
    %415 = arith.mulf %413, %414 : vector<8x256xf32>
    %416 = arith.addf %406, %415 : vector<8x256xf32>
    %c238_i32 = arith.constant 238 : i32
    %417 = tpu.dynamic_rotate %14 by %c238_i32 dim 1 : vector<8x256xf32>, i32 -> vector<8x256xf32>
    %418 = arith.andi %41, %81 : vector<1x256xi1>
    %419 = vector.extract_strided_slice %7 {offsets = [0, 33], sizes = [8, 1], strides = [1, 1]} : vector<8x49xf32> to vector<8x1xf32>
    %cst_75 = arith.constant 0.000000e+00 : f32
    %420 = vector.shape_cast %418 : vector<1x256xi1> to vector<1x256xi1>
    %421 = vector.broadcast %420 : vector<1x256xi1> to vector<8x256xi1>
    %422 = vector.broadcast %cst_75 : f32 to vector<8x256xf32>
    %423 = arith.select %421, %417, %422 : vector<8x256xi1>, vector<8x256xf32>
    %424 = vector.broadcast %419 : vector<8x1xf32> to vector<8x256xf32>
    %425 = arith.mulf %423, %424 : vector<8x256xf32>
    %426 = arith.addf %416, %425 : vector<8x256xf32>
    %c237_i32 = arith.constant 237 : i32
    %427 = tpu.dynamic_rotate %14 by %c237_i32 dim 1 : vector<8x256xf32>, i32 -> vector<8x256xf32>
    %428 = arith.andi %41, %86 : vector<1x256xi1>
    %429 = vector.extract_strided_slice %7 {offsets = [0, 34], sizes = [8, 1], strides = [1, 1]} : vector<8x49xf32> to vector<8x1xf32>
    %cst_76 = arith.constant 0.000000e+00 : f32
    %430 = vector.shape_cast %428 : vector<1x256xi1> to vector<1x256xi1>
    %431 = vector.broadcast %430 : vector<1x256xi1> to vector<8x256xi1>
    %432 = vector.broadcast %cst_76 : f32 to vector<8x256xf32>
    %433 = arith.select %431, %427, %432 : vector<8x256xi1>, vector<8x256xf32>
    %434 = vector.broadcast %429 : vector<8x1xf32> to vector<8x256xf32>
    %435 = arith.mulf %433, %434 : vector<8x256xf32>
    %436 = arith.addf %426, %435 : vector<8x256xf32>
    %c227_i32 = arith.constant 227 : i32
    %437 = tpu.dynamic_rotate %14 by %c227_i32 dim 1 : vector<8x256xf32>, i32 -> vector<8x256xf32>
    %438 = arith.andi %46, %56 : vector<1x256xi1>
    %439 = vector.extract_strided_slice %7 {offsets = [0, 35], sizes = [8, 1], strides = [1, 1]} : vector<8x49xf32> to vector<8x1xf32>
    %cst_77 = arith.constant 0.000000e+00 : f32
    %440 = vector.shape_cast %438 : vector<1x256xi1> to vector<1x256xi1>
    %441 = vector.broadcast %440 : vector<1x256xi1> to vector<8x256xi1>
    %442 = vector.broadcast %cst_77 : f32 to vector<8x256xf32>
    %443 = arith.select %441, %437, %442 : vector<8x256xi1>, vector<8x256xf32>
    %444 = vector.broadcast %439 : vector<8x1xf32> to vector<8x256xf32>
    %445 = arith.mulf %443, %444 : vector<8x256xf32>
    %446 = arith.addf %436, %445 : vector<8x256xf32>
    %c226_i32 = arith.constant 226 : i32
    %447 = tpu.dynamic_rotate %14 by %c226_i32 dim 1 : vector<8x256xf32>, i32 -> vector<8x256xf32>
    %448 = arith.andi %46, %61 : vector<1x256xi1>
    %449 = vector.extract_strided_slice %7 {offsets = [0, 36], sizes = [8, 1], strides = [1, 1]} : vector<8x49xf32> to vector<8x1xf32>
    %cst_78 = arith.constant 0.000000e+00 : f32
    %450 = vector.shape_cast %448 : vector<1x256xi1> to vector<1x256xi1>
    %451 = vector.broadcast %450 : vector<1x256xi1> to vector<8x256xi1>
    %452 = vector.broadcast %cst_78 : f32 to vector<8x256xf32>
    %453 = arith.select %451, %447, %452 : vector<8x256xi1>, vector<8x256xf32>
    %454 = vector.broadcast %449 : vector<8x1xf32> to vector<8x256xf32>
    %455 = arith.mulf %453, %454 : vector<8x256xf32>
    %456 = arith.addf %446, %455 : vector<8x256xf32>
    %c225_i32 = arith.constant 225 : i32
    %457 = tpu.dynamic_rotate %14 by %c225_i32 dim 1 : vector<8x256xf32>, i32 -> vector<8x256xf32>
    %458 = arith.andi %46, %66 : vector<1x256xi1>
    %459 = vector.extract_strided_slice %7 {offsets = [0, 37], sizes = [8, 1], strides = [1, 1]} : vector<8x49xf32> to vector<8x1xf32>
    %cst_79 = arith.constant 0.000000e+00 : f32
    %460 = vector.shape_cast %458 : vector<1x256xi1> to vector<1x256xi1>
    %461 = vector.broadcast %460 : vector<1x256xi1> to vector<8x256xi1>
    %462 = vector.broadcast %cst_79 : f32 to vector<8x256xf32>
    %463 = arith.select %461, %457, %462 : vector<8x256xi1>, vector<8x256xf32>
    %464 = vector.broadcast %459 : vector<8x1xf32> to vector<8x256xf32>
    %465 = arith.mulf %463, %464 : vector<8x256xf32>
    %466 = arith.addf %456, %465 : vector<8x256xf32>
    %c224_i32 = arith.constant 224 : i32
    %467 = tpu.dynamic_rotate %14 by %c224_i32 dim 1 : vector<8x256xf32>, i32 -> vector<8x256xf32>
    %468 = arith.andi %46, %71 : vector<1x256xi1>
    %469 = vector.extract_strided_slice %7 {offsets = [0, 38], sizes = [8, 1], strides = [1, 1]} : vector<8x49xf32> to vector<8x1xf32>
    %cst_80 = arith.constant 0.000000e+00 : f32
    %470 = vector.shape_cast %468 : vector<1x256xi1> to vector<1x256xi1>
    %471 = vector.broadcast %470 : vector<1x256xi1> to vector<8x256xi1>
    %472 = vector.broadcast %cst_80 : f32 to vector<8x256xf32>
    %473 = arith.select %471, %467, %472 : vector<8x256xi1>, vector<8x256xf32>
    %474 = vector.broadcast %469 : vector<8x1xf32> to vector<8x256xf32>
    %475 = arith.mulf %473, %474 : vector<8x256xf32>
    %476 = arith.addf %466, %475 : vector<8x256xf32>
    %c223_i32 = arith.constant 223 : i32
    %477 = tpu.dynamic_rotate %14 by %c223_i32 dim 1 : vector<8x256xf32>, i32 -> vector<8x256xf32>
    %478 = arith.andi %46, %76 : vector<1x256xi1>
    %479 = vector.extract_strided_slice %7 {offsets = [0, 39], sizes = [8, 1], strides = [1, 1]} : vector<8x49xf32> to vector<8x1xf32>
    %cst_81 = arith.constant 0.000000e+00 : f32
    %480 = vector.shape_cast %478 : vector<1x256xi1> to vector<1x256xi1>
    %481 = vector.broadcast %480 : vector<1x256xi1> to vector<8x256xi1>
    %482 = vector.broadcast %cst_81 : f32 to vector<8x256xf32>
    %483 = arith.select %481, %477, %482 : vector<8x256xi1>, vector<8x256xf32>
    %484 = vector.broadcast %479 : vector<8x1xf32> to vector<8x256xf32>
    %485 = arith.mulf %483, %484 : vector<8x256xf32>
    %486 = arith.addf %476, %485 : vector<8x256xf32>
    %c222_i32 = arith.constant 222 : i32
    %487 = tpu.dynamic_rotate %14 by %c222_i32 dim 1 : vector<8x256xf32>, i32 -> vector<8x256xf32>
    %488 = arith.andi %46, %81 : vector<1x256xi1>
    %489 = vector.extract_strided_slice %7 {offsets = [0, 40], sizes = [8, 1], strides = [1, 1]} : vector<8x49xf32> to vector<8x1xf32>
    %cst_82 = arith.constant 0.000000e+00 : f32
    %490 = vector.shape_cast %488 : vector<1x256xi1> to vector<1x256xi1>
    %491 = vector.broadcast %490 : vector<1x256xi1> to vector<8x256xi1>
    %492 = vector.broadcast %cst_82 : f32 to vector<8x256xf32>
    %493 = arith.select %491, %487, %492 : vector<8x256xi1>, vector<8x256xf32>
    %494 = vector.broadcast %489 : vector<8x1xf32> to vector<8x256xf32>
    %495 = arith.mulf %493, %494 : vector<8x256xf32>
    %496 = arith.addf %486, %495 : vector<8x256xf32>
    %c221_i32 = arith.constant 221 : i32
    %497 = tpu.dynamic_rotate %14 by %c221_i32 dim 1 : vector<8x256xf32>, i32 -> vector<8x256xf32>
    %498 = arith.andi %46, %86 : vector<1x256xi1>
    %499 = vector.extract_strided_slice %7 {offsets = [0, 41], sizes = [8, 1], strides = [1, 1]} : vector<8x49xf32> to vector<8x1xf32>
    %cst_83 = arith.constant 0.000000e+00 : f32
    %500 = vector.shape_cast %498 : vector<1x256xi1> to vector<1x256xi1>
    %501 = vector.broadcast %500 : vector<1x256xi1> to vector<8x256xi1>
    %502 = vector.broadcast %cst_83 : f32 to vector<8x256xf32>
    %503 = arith.select %501, %497, %502 : vector<8x256xi1>, vector<8x256xf32>
    %504 = vector.broadcast %499 : vector<8x1xf32> to vector<8x256xf32>
    %505 = arith.mulf %503, %504 : vector<8x256xf32>
    %506 = arith.addf %496, %505 : vector<8x256xf32>
    %c211_i32 = arith.constant 211 : i32
    %507 = tpu.dynamic_rotate %14 by %c211_i32 dim 1 : vector<8x256xf32>, i32 -> vector<8x256xf32>
    %508 = arith.andi %51, %56 : vector<1x256xi1>
    %509 = vector.extract_strided_slice %7 {offsets = [0, 42], sizes = [8, 1], strides = [1, 1]} : vector<8x49xf32> to vector<8x1xf32>
    %cst_84 = arith.constant 0.000000e+00 : f32
    %510 = vector.shape_cast %508 : vector<1x256xi1> to vector<1x256xi1>
    %511 = vector.broadcast %510 : vector<1x256xi1> to vector<8x256xi1>
    %512 = vector.broadcast %cst_84 : f32 to vector<8x256xf32>
    %513 = arith.select %511, %507, %512 : vector<8x256xi1>, vector<8x256xf32>
    %514 = vector.broadcast %509 : vector<8x1xf32> to vector<8x256xf32>
    %515 = arith.mulf %513, %514 : vector<8x256xf32>
    %516 = arith.addf %506, %515 : vector<8x256xf32>
    %c210_i32 = arith.constant 210 : i32
    %517 = tpu.dynamic_rotate %14 by %c210_i32 dim 1 : vector<8x256xf32>, i32 -> vector<8x256xf32>
    %518 = arith.andi %51, %61 : vector<1x256xi1>
    %519 = vector.extract_strided_slice %7 {offsets = [0, 43], sizes = [8, 1], strides = [1, 1]} : vector<8x49xf32> to vector<8x1xf32>
    %cst_85 = arith.constant 0.000000e+00 : f32
    %520 = vector.shape_cast %518 : vector<1x256xi1> to vector<1x256xi1>
    %521 = vector.broadcast %520 : vector<1x256xi1> to vector<8x256xi1>
    %522 = vector.broadcast %cst_85 : f32 to vector<8x256xf32>
    %523 = arith.select %521, %517, %522 : vector<8x256xi1>, vector<8x256xf32>
    %524 = vector.broadcast %519 : vector<8x1xf32> to vector<8x256xf32>
    %525 = arith.mulf %523, %524 : vector<8x256xf32>
    %526 = arith.addf %516, %525 : vector<8x256xf32>
    %c209_i32 = arith.constant 209 : i32
    %527 = tpu.dynamic_rotate %14 by %c209_i32 dim 1 : vector<8x256xf32>, i32 -> vector<8x256xf32>
    %528 = arith.andi %51, %66 : vector<1x256xi1>
    %529 = vector.extract_strided_slice %7 {offsets = [0, 44], sizes = [8, 1], strides = [1, 1]} : vector<8x49xf32> to vector<8x1xf32>
    %cst_86 = arith.constant 0.000000e+00 : f32
    %530 = vector.shape_cast %528 : vector<1x256xi1> to vector<1x256xi1>
    %531 = vector.broadcast %530 : vector<1x256xi1> to vector<8x256xi1>
    %532 = vector.broadcast %cst_86 : f32 to vector<8x256xf32>
    %533 = arith.select %531, %527, %532 : vector<8x256xi1>, vector<8x256xf32>
    %534 = vector.broadcast %529 : vector<8x1xf32> to vector<8x256xf32>
    %535 = arith.mulf %533, %534 : vector<8x256xf32>
    %536 = arith.addf %526, %535 : vector<8x256xf32>
    %c208_i32 = arith.constant 208 : i32
    %537 = tpu.dynamic_rotate %14 by %c208_i32 dim 1 : vector<8x256xf32>, i32 -> vector<8x256xf32>
    %538 = arith.andi %51, %71 : vector<1x256xi1>
    %539 = vector.extract_strided_slice %7 {offsets = [0, 45], sizes = [8, 1], strides = [1, 1]} : vector<8x49xf32> to vector<8x1xf32>
    %cst_87 = arith.constant 0.000000e+00 : f32
    %540 = vector.shape_cast %538 : vector<1x256xi1> to vector<1x256xi1>
    %541 = vector.broadcast %540 : vector<1x256xi1> to vector<8x256xi1>
    %542 = vector.broadcast %cst_87 : f32 to vector<8x256xf32>
    %543 = arith.select %541, %537, %542 : vector<8x256xi1>, vector<8x256xf32>
    %544 = vector.broadcast %539 : vector<8x1xf32> to vector<8x256xf32>
    %545 = arith.mulf %543, %544 : vector<8x256xf32>
    %546 = arith.addf %536, %545 : vector<8x256xf32>
    %c207_i32 = arith.constant 207 : i32
    %547 = tpu.dynamic_rotate %14 by %c207_i32 dim 1 : vector<8x256xf32>, i32 -> vector<8x256xf32>
    %548 = arith.andi %51, %76 : vector<1x256xi1>
    %549 = vector.extract_strided_slice %7 {offsets = [0, 46], sizes = [8, 1], strides = [1, 1]} : vector<8x49xf32> to vector<8x1xf32>
    %cst_88 = arith.constant 0.000000e+00 : f32
    %550 = vector.shape_cast %548 : vector<1x256xi1> to vector<1x256xi1>
    %551 = vector.broadcast %550 : vector<1x256xi1> to vector<8x256xi1>
    %552 = vector.broadcast %cst_88 : f32 to vector<8x256xf32>
    %553 = arith.select %551, %547, %552 : vector<8x256xi1>, vector<8x256xf32>
    %554 = vector.broadcast %549 : vector<8x1xf32> to vector<8x256xf32>
    %555 = arith.mulf %553, %554 : vector<8x256xf32>
    %556 = arith.addf %546, %555 : vector<8x256xf32>
    %c206_i32 = arith.constant 206 : i32
    %557 = tpu.dynamic_rotate %14 by %c206_i32 dim 1 : vector<8x256xf32>, i32 -> vector<8x256xf32>
    %558 = arith.andi %51, %81 : vector<1x256xi1>
    %559 = vector.extract_strided_slice %7 {offsets = [0, 47], sizes = [8, 1], strides = [1, 1]} : vector<8x49xf32> to vector<8x1xf32>
    %cst_89 = arith.constant 0.000000e+00 : f32
    %560 = vector.shape_cast %558 : vector<1x256xi1> to vector<1x256xi1>
    %561 = vector.broadcast %560 : vector<1x256xi1> to vector<8x256xi1>
    %562 = vector.broadcast %cst_89 : f32 to vector<8x256xf32>
    %563 = arith.select %561, %557, %562 : vector<8x256xi1>, vector<8x256xf32>
    %564 = vector.broadcast %559 : vector<8x1xf32> to vector<8x256xf32>
    %565 = arith.mulf %563, %564 : vector<8x256xf32>
    %566 = arith.addf %556, %565 : vector<8x256xf32>
    %c205_i32 = arith.constant 205 : i32
    %567 = tpu.dynamic_rotate %14 by %c205_i32 dim 1 : vector<8x256xf32>, i32 -> vector<8x256xf32>
    %568 = arith.andi %51, %86 : vector<1x256xi1>
    %569 = vector.extract_strided_slice %7 {offsets = [0, 48], sizes = [8, 1], strides = [1, 1]} : vector<8x49xf32> to vector<8x1xf32>
    %cst_90 = arith.constant 0.000000e+00 : f32
    %570 = vector.shape_cast %568 : vector<1x256xi1> to vector<1x256xi1>
    %571 = vector.broadcast %570 : vector<1x256xi1> to vector<8x256xi1>
    %572 = vector.broadcast %cst_90 : f32 to vector<8x256xf32>
    %573 = arith.select %571, %567, %572 : vector<8x256xi1>, vector<8x256xf32>
    %574 = vector.broadcast %569 : vector<8x1xf32> to vector<8x256xf32>
    %575 = arith.mulf %573, %574 : vector<8x256xf32>
    %576 = arith.addf %566, %575 : vector<8x256xf32>
    %577 = vector.broadcast %8 : vector<8x1xf32> to vector<8x256xf32>
    %578 = arith.addf %576, %577 : vector<8x256xf32>
    %c0_91 = arith.constant 0 : index
    %c0_92 = arith.constant 0 : index
    %c0_93 = arith.constant 0 : index
    %579 = vector.load %arg9[%c0_91, %c0_92, %c0_93] : memref<1x8x256xf32, #tpu.memory_space<vmem>>, vector<1x8x256xf32>
    %580 = vector.shape_cast %579 : vector<1x8x256xf32> to vector<8x256xf32>
    %581 = vector.shape_cast %578 : vector<8x256xf32> to vector<1x8x256xf32>
    tpu.vector_store %arg9[%c0_91, %c0_92, %c0_93], %581 {strides = array<i32>} : memref<1x8x256xf32, #tpu.memory_space<vmem>>, vector<1x8x256xf32>,
    return
  }
  func.func @transform_0(%arg0: i32) -> (i32, i32, i32) {
    %c0_i32 = arith.constant 0 : i32
    %c0_i32_0 = arith.constant 0 : i32
    %c0_i32_1 = arith.constant 0 : i32
    return %arg0, %c0_i32, %c0_i32_0 : i32, i32, i32
  }
  func.func @transform_1(%arg0: i32) -> (i32, i32) {
    %c0_i32 = arith.constant 0 : i32
    %c0_i32_0 = arith.constant 0 : i32
    %c0_i32_1 = arith.constant 0 : i32
    return %c0_i32, %c0_i32_0 : i32, i32
  }
  func.func @transform_2(%arg0: i32) -> (i32, i32) {
    %c0_i32 = arith.constant 0 : i32
    %c0_i32_0 = arith.constant 0 : i32
    %c0_i32_1 = arith.constant 0 : i32
    return %c0_i32, %c0_i32_0 : i32, i32
  }
  func.func @transform_3(%arg0: i32) -> (i32, i32) {
    %c0_i32 = arith.constant 0 : i32
    %c0_i32_0 = arith.constant 0 : i32
    %c0_i32_1 = arith.constant 0 : i32
    return %c0_i32, %c0_i32_0 : i32, i32
  }
  func.func @transform_4(%arg0: i32) -> (i32, i32) {
    %c0_i32 = arith.constant 0 : i32
    %c0_i32_0 = arith.constant 0 : i32
    %c0_i32_1 = arith.constant 0 : i32
    return %c0_i32, %c0_i32_0 : i32, i32
  }
  func.func @transform_5(%arg0: i32) -> (i32, i32) {
    %c0_i32 = arith.constant 0 : i32
    %c0_i32_0 = arith.constant 0 : i32
    %c0_i32_1 = arith.constant 0 : i32
    return %c0_i32, %c0_i32_0 : i32, i32
  }
  func.func @transform_6(%arg0: i32) -> (i32, i32) {
    %c0_i32 = arith.constant 0 : i32
    %c0_i32_0 = arith.constant 0 : i32
    %c0_i32_1 = arith.constant 0 : i32
    return %c0_i32, %c0_i32_0 : i32, i32
  }
  func.func @transform_7(%arg0: i32) -> (i32, i32) {
    %c0_i32 = arith.constant 0 : i32
    %c0_i32_0 = arith.constant 0 : i32
    %c0_i32_1 = arith.constant 0 : i32
    return %c0_i32, %c0_i32_0 : i32, i32
  }
  func.func @transform_8(%arg0: i32) -> (i32, i32, i32) {
    %c0_i32 = arith.constant 0 : i32
    %c0_i32_0 = arith.constant 0 : i32
    %c0_i32_1 = arith.constant 0 : i32
    return %arg0, %c0_i32, %c0_i32_0 : i32, i32, i32
  }
}

</mosaic_0001>

<llo_original>
// kernel: bsc_s_muti_cat_forward.1
$region0: #{bsc_s_muti_cat_forward.1}
  #allocation0 [shape = 'u32[]', space=smem, size = 0x4, offset = 0x4, fixed_abs, tag = 'smem constant byte address 0x4 - core index']
  #allocation1 [shape = 'u32[144,128]{1,0:T(1,128)}', space=vmem, size = 0x12000, scoped, tag = 'internal scratch']
  %s0 = inlined_call_operand.vmem [shape: f32[2,8,256], index: 0, kind: input, shape index: {}]
  %s1 = inlined_call_operand.vmem [shape: s32[2,256], index: 1, kind: input, shape index: {}]
  %s2 = inlined_call_operand.vmem [shape: f32[32,8], index: 2, kind: input, shape index: {}]
  %s3 = inlined_call_operand.vmem [shape: f32[32,1], index: 3, kind: input, shape index: {}]
  %s4 = inlined_call_operand.vmem [shape: f32[8,32], index: 4, kind: input, shape index: {}]
  %s5 = inlined_call_operand.vmem [shape: f32[8,1], index: 5, kind: input, shape index: {}]
  %s6 = inlined_call_operand.vmem [shape: f32[8,49], index: 6, kind: input, shape index: {}]
  %s7 = inlined_call_operand.vmem [shape: f32[8,1], index: 7, kind: input, shape index: {}]
  %s8 = inlined_call_operand.vmem [shape: f32[2,8,256], index: 8, kind: output, shape index: {}]
  %s9 = sld [smem:[#allocation0]]
  $region65: #{bsc_s_muti_cat_forward.1} parent=0
    _
  %s11 = ssub.s32 1, %s9
  %s12 = scalar_select 0, %s11, %s9
  loop: start=0, step=1, limit=4
  $region2: #{bsc_s_muti_cat_forward.1} parent=0 // loop_pre_header
    _
  $region3: #{bsc_s_muti_cat_forward.1} parent=0 // loop_header
    %s14 = sphi 0, %s18
    %p15 = scmp.ge.s32.totalorder %s14, 4
    %s24 = sphi 0, %s26
    %s27 = sphi 0, %s24
    %s28 = sphi 0, %s27
    %s44 = sphi 0, %s28
    %s48 = sphi 0, %s48
    %s50 = sphi 0, %s48
    %s51 = sphi 0, %s50
    %s65 = sphi 0, %s51
    %s69 = sphi 0, %s69
    %s71 = sphi 0, %s69
    %s72 = sphi 0, %s71
    %s86 = sphi 0, %s72
    %s90 = sphi 0, %s90
    %s92 = sphi 0, %s90
    %s93 = sphi 0, %s92
    %s107 = sphi 0, %s93
    %s111 = sphi 0, %s111
    %s113 = sphi 0, %s111
    %s114 = sphi 0, %s113
    %s128 = sphi 0, %s114
    %s132 = sphi 0, %s132
    %s134 = sphi 0, %s132
    %s135 = sphi 0, %s134
    %s149 = sphi 0, %s135
    %s153 = sphi 0, %s153
    %s155 = sphi 0, %s153
    %s156 = sphi 0, %s155
    %s170 = sphi 0, %s156
    %s174 = sphi 0, %s174
    %s176 = sphi 0, %s174
    %s177 = sphi 0, %s176
    %s191 = sphi 0, %s177
    %s197 = sphi 0, %s199
    %s200 = sphi 0, %s197
    %s201 = sphi 0, %s200
    %s217 = sphi 0, %s201
  $region4: #{bsc_s_muti_cat_forward.1} parent=0 // loop_header_branch
    %17 = sbr.rel (%p15) target = $region8
  $region5: #{bsc_s_muti_cat_forward.1} parent=0 // loop_body
    %s19 = ssub.s32 %s14, 1
    %s20 = ssub.s32 %s14, 2
    %s21 = sadd.s32 %s14, 1
    %s22 = ssub.s32 %s14, %s21
    %p23 = scmp.eq.s32.totalorder %s22, 0
    %s25 = sadd.s32 %s24, 1
    %s26 = scalar_select %p23, %s24, %s25
    %p29 = pneg %p23
    %p30 = scmp.eq.s32.totalorder %s14, 1
    %p31 = por %p29, %p30
    %p32 = scmp.ne.s32.totalorder %s24, %s27
    %p33 = scmp.eq.s32.totalorder %s14, 0
    %p34 = por %p32, %p33
    %p35 = scmp.ne.s32.totalorder %s24, %s27
    %p36 = scmp.eq.s32.totalorder %s19, 1
    %p37 = por %p35, %p36
    %p38 = scmp.ne.s32.totalorder %s27, %s28
    %p39 = scmp.eq.s32.totalorder %s19, 0
    %p40 = por %p38, %p39
    %p41 = scmp.ne.s32.totalorder %s27, %s28
    %p42 = scmp.eq.s32.totalorder %s20, 1
    %p43 = por %p41, %p42
    %p45 = scmp.ne.s32.totalorder %s28, %s44
    %p46 = scmp.eq.s32.totalorder %s20, 0
    %p47 = por %p45, %p46
    %s49 = sadd.s32 %s48, 1
    %p52 = scmp.eq.s32.totalorder %s14, 1
    %p53 = scmp.ne.s32.totalorder %s48, %s50
    %p54 = scmp.eq.s32.totalorder %s14, 0
    %p55 = por %p53, %p54
    %p56 = scmp.ne.s32.totalorder %s48, %s50
    %p57 = scmp.eq.s32.totalorder %s19, 1
    %p58 = por %p56, %p57
    %p59 = scmp.ne.s32.totalorder %s50, %s51
    %p60 = scmp.eq.s32.totalorder %s19, 0
    %p61 = por %p59, %p60
    %p62 = scmp.ne.s32.totalorder %s50, %s51
    %p63 = scmp.eq.s32.totalorder %s20, 1
    %p64 = por %p62, %p63
    %p66 = scmp.ne.s32.totalorder %s51, %s65
    %p67 = scmp.eq.s32.totalorder %s20, 0
    %p68 = por %p66, %p67
    %s70 = sadd.s32 %s69, 1
    %p73 = scmp.eq.s32.totalorder %s14, 1
    %p74 = scmp.ne.s32.totalorder %s69, %s71
    %p75 = scmp.eq.s32.totalorder %s14, 0
    %p76 = por %p74, %p75
    %p77 = scmp.ne.s32.totalorder %s69, %s71
    %p78 = scmp.eq.s32.totalorder %s19, 1
    %p79 = por %p77, %p78
    %p80 = scmp.ne.s32.totalorder %s71, %s72
    %p81 = scmp.eq.s32.totalorder %s19, 0
    %p82 = por %p80, %p81
    %p83 = scmp.ne.s32.totalorder %s71, %s72
    %p84 = scmp.eq.s32.totalorder %s20, 1
    %p85 = por %p83, %p84
    %p87 = scmp.ne.s32.totalorder %s72, %s86
    %p88 = scmp.eq.s32.totalorder %s20, 0
    %p89 = por %p87, %p88
    %s91 = sadd.s32 %s90, 1
    %p94 = scmp.eq.s32.totalorder %s14, 1
    %p95 = scmp.ne.s32.totalorder %s90, %s92
    %p96 = scmp.eq.s32.totalorder %s14, 0
    %p97 = por %p95, %p96
    %p98 = scmp.ne.s32.totalorder %s90, %s92
    %p99 = scmp.eq.s32.totalorder %s19, 1
    %p100 = por %p98, %p99
    %p101 = scmp.ne.s32.totalorder %s92, %s93
    %p102 = scmp.eq.s32.totalorder %s19, 0
    %p103 = por %p101, %p102
    %p104 = scmp.ne.s32.totalorder %s92, %s93
    %p105 = scmp.eq.s32.totalorder %s20, 1
    %p106 = por %p104, %p105
    %p108 = scmp.ne.s32.totalorder %s93, %s107
    %p109 = scmp.eq.s32.totalorder %s20, 0
    %p110 = por %p108, %p109
    %s112 = sadd.s32 %s111, 1
    %p115 = scmp.eq.s32.totalorder %s14, 1
    %p116 = scmp.ne.s32.totalorder %s111, %s113
    %p117 = scmp.eq.s32.totalorder %s14, 0
    %p118 = por %p116, %p117
    %p119 = scmp.ne.s32.totalorder %s111, %s113
    %p120 = scmp.eq.s32.totalorder %s19, 1
    %p121 = por %p119, %p120
    %p122 = scmp.ne.s32.totalorder %s113, %s114
    %p123 = scmp.eq.s32.totalorder %s19, 0
    %p124 = por %p122, %p123
    %p125 = scmp.ne.s32.totalorder %s113, %s114
    %p126 = scmp.eq.s32.totalorder %s20, 1
    %p127 = por %p125, %p126
    %p129 = scmp.ne.s32.totalorder %s114, %s128
    %p130 = scmp.eq.s32.totalorder %s20, 0
    %p131 = por %p129, %p130
    %s133 = sadd.s32 %s132, 1
    %p136 = scmp.eq.s32.totalorder %s14, 1
    %p137 = scmp.ne.s32.totalorder %s132, %s134
    %p138 = scmp.eq.s32.totalorder %s14, 0
    %p139 = por %p137, %p138
    %p140 = scmp.ne.s32.totalorder %s132, %s134
    %p141 = scmp.eq.s32.totalorder %s19, 1
    %p142 = por %p140, %p141
    %p143 = scmp.ne.s32.totalorder %s134, %s135
    %p144 = scmp.eq.s32.totalorder %s19, 0
    %p145 = por %p143, %p144
    %p146 = scmp.ne.s32.totalorder %s134, %s135
    %p147 = scmp.eq.s32.totalorder %s20, 1
    %p148 = por %p146, %p147
    %p150 = scmp.ne.s32.totalorder %s135, %s149
    %p151 = scmp.eq.s32.totalorder %s20, 0
    %p152 = por %p150, %p151
    %s154 = sadd.s32 %s153, 1
    %p157 = scmp.eq.s32.totalorder %s14, 1
    %p158 = scmp.ne.s32.totalorder %s153, %s155
    %p159 = scmp.eq.s32.totalorder %s14, 0
    %p160 = por %p158, %p159
    %p161 = scmp.ne.s32.totalorder %s153, %s155
    %p162 = scmp.eq.s32.totalorder %s19, 1
    %p163 = por %p161, %p162
    %p164 = scmp.ne.s32.totalorder %s155, %s156
    %p165 = scmp.eq.s32.totalorder %s19, 0
    %p166 = por %p164, %p165
    %p167 = scmp.ne.s32.totalorder %s155, %s156
    %p168 = scmp.eq.s32.totalorder %s20, 1
    %p169 = por %p167, %p168
    %p171 = scmp.ne.s32.totalorder %s156, %s170
    %p172 = scmp.eq.s32.totalorder %s20, 0
    %p173 = por %p171, %p172
    %s175 = sadd.s32 %s174, 1
    %p178 = scmp.eq.s32.totalorder %s14, 1
    %p179 = scmp.ne.s32.totalorder %s174, %s176
    %p180 = scmp.eq.s32.totalorder %s14, 0
    %p181 = por %p179, %p180
    %p182 = scmp.ne.s32.totalorder %s174, %s176
    %p183 = scmp.eq.s32.totalorder %s19, 1
    %p184 = por %p182, %p183
    %p185 = scmp.ne.s32.totalorder %s176, %s177
    %p186 = scmp.eq.s32.totalorder %s19, 0
    %p187 = por %p185, %p186
    %p188 = scmp.ne.s32.totalorder %s176, %s177
    %p189 = scmp.eq.s32.totalorder %s20, 1
    %p190 = por %p188, %p189
    %p192 = scmp.ne.s32.totalorder %s177, %s191
    %p193 = scmp.eq.s32.totalorder %s20, 0
    %p194 = por %p192, %p193
    %s195 = ssub.s32 %s14, %s21
    %p196 = scmp.eq.s32.totalorder %s195, 0
    %s198 = sadd.s32 %s197, 1
    %s199 = scalar_select %p196, %s197, %s198
    %p202 = pneg %p196
    %p203 = scmp.eq.s32.totalorder %s14, 1
    %p204 = por %p202, %p203
    %p205 = scmp.ne.s32.totalorder %s197, %s200
    %p206 = scmp.eq.s32.totalorder %s14, 0
    %p207 = por %p205, %p206
    %p208 = scmp.ne.s32.totalorder %s197, %s200
    %p209 = scmp.eq.s32.totalorder %s19, 1
    %p210 = por %p208, %p209
    %p211 = scmp.ne.s32.totalorder %s200, %s201
    %p212 = scmp.eq.s32.totalorder %s19, 0
    %p213 = por %p211, %p212
    %p214 = scmp.ne.s32.totalorder %s200, %s201
    %p215 = scmp.eq.s32.totalorder %s20, 1
    %p216 = por %p214, %p215
    %p218 = scmp.ne.s32.totalorder %s201, %s217
    %p219 = scmp.eq.s32.totalorder %s20, 0
    %p220 = por %p218, %p219
    %p221 = scmp.le.s32.totalorder 1, %s14
    %p222 = scmp.lt.s32.totalorder %s14, 3
    %p223 = pnand %p221, %p222
    %p224 = pneg %p223
    // Predicated region
    $region9: #{bsc_s_muti_cat_forward.1} parent=5 // pred_check
      _
    $region10: #{bsc_s_muti_cat_forward.1} parent=5 // pred_check_branch
      %226 = sbr.rel (%p223) target = $region12
    $region11: #{bsc_s_muti_cat_forward.1} parent=5 // pred_region
      %s227 = ssub.s32 %s14, 1
      // Predicated region
      $region13: #{bsc_s_muti_cat_forward.1} parent=11 // pred_check
        %p228 = pneg %p61
      $region14: #{bsc_s_muti_cat_forward.1} parent=11 // pred_check_branch
        %230 = sbr.rel (%p228) target = $region16
      $region15: #{bsc_s_muti_cat_forward.1} parent=11 // pred_region
        _
      $region16: #{bsc_s_muti_cat_forward.1} parent=11 // pred_fallthru
        _
      // Predicated region
      $region17: #{bsc_s_muti_cat_forward.1} parent=11 // pred_check
        %p231 = pneg %p82
      $region18: #{bsc_s_muti_cat_forward.1} parent=11 // pred_check_branch
        %233 = sbr.rel (%p231) target = $region20
      $region19: #{bsc_s_muti_cat_forward.1} parent=11 // pred_region
        _
      $region20: #{bsc_s_muti_cat_forward.1} parent=11 // pred_fallthru
        _
      // Predicated region
      $region21: #{bsc_s_muti_cat_forward.1} parent=11 // pred_check
        %p234 = pneg %p103
      $region22: #{bsc_s_muti_cat_forward.1} parent=11 // pred_check_branch
        %236 = sbr.rel (%p234) target = $region24
      $region23: #{bsc_s_muti_cat_forward.1} parent=11 // pred_region
        _
      $region24: #{bsc_s_muti_cat_forward.1} parent=11 // pred_fallthru
        _
      // Predicated region
      $region25: #{bsc_s_muti_cat_forward.1} parent=11 // pred_check
        %p237 = pneg %p124
      $region26: #{bsc_s_muti_cat_forward.1} parent=11 // pred_check_branch
        %239 = sbr.rel (%p237) target = $region28
      $region27: #{bsc_s_muti_cat_forward.1} parent=11 // pred_region
        _
      $region28: #{bsc_s_muti_cat_forward.1} parent=11 // pred_fallthru
        _
      // Predicated region
      $region29: #{bsc_s_muti_cat_forward.1} parent=11 // pred_check
        %p240 = pneg %p145
      $region30: #{bsc_s_muti_cat_forward.1} parent=11 // pred_check_branch
        %242 = sbr.rel (%p240) target = $region32
      $region31: #{bsc_s_muti_cat_forward.1} parent=11 // pred_region
        _
      $region32: #{bsc_s_muti_cat_forward.1} parent=11 // pred_fallthru
        _
      // Predicated region
      $region33: #{bsc_s_muti_cat_forward.1} parent=11 // pred_check
        %p243 = pneg %p166
      $region34: #{bsc_s_muti_cat_forward.1} parent=11 // pred_check_branch
        %245 = sbr.rel (%p243) target = $region36
      $region35: #{bsc_s_muti_cat_forward.1} parent=11 // pred_region
        _
      $region36: #{bsc_s_muti_cat_forward.1} parent=11 // pred_fallthru
        _
      // Predicated region
      $region37: #{bsc_s_muti_cat_forward.1} parent=11 // pred_check
        %p246 = pneg %p187
      $region38: #{bsc_s_muti_cat_forward.1} parent=11 // pred_check_branch
        %248 = sbr.rel (%p246) target = $region40
      $region39: #{bsc_s_muti_cat_forward.1} parent=11 // pred_region
        _
      $region40: #{bsc_s_muti_cat_forward.1} parent=11 // pred_fallthru
        _
    $region12: #{bsc_s_muti_cat_forward.1} parent=5 // pred_fallthru
      _
    %p249 = scmp.lt.s32.totalorder %s14, 2
    // Predicated region
    $region41: #{bsc_s_muti_cat_forward.1} parent=5 // pred_check
      %p250 = pneg %p249
    $region42: #{bsc_s_muti_cat_forward.1} parent=5 // pred_check_branch
      %252 = sbr.rel (%p250) target = $region44
    $region43: #{bsc_s_muti_cat_forward.1} parent=5 // pred_region
      // Predicated region
      $region45: #{bsc_s_muti_cat_forward.1} parent=43 // pred_check
        %p253 = pneg %p34
      $region46: #{bsc_s_muti_cat_forward.1} parent=43 // pred_check_branch
        %255 = sbr.rel (%p253) target = $region48
      $region47: #{bsc_s_muti_cat_forward.1} parent=43 // pred_region
        %p256 = scmp.lt.s32.totalorder %s14, 1
        %s257 = scalar_select %p256, %s14, 1
        %s258 = smul.addr %s257, 2
        %s259 = smul.addr %s258, 8
        %s260 = scalar_lea.vmem %s0, %s259
      $region48: #{bsc_s_muti_cat_forward.1} parent=43 // pred_fallthru
        _
    $region44: #{bsc_s_muti_cat_forward.1} parent=5 // pred_fallthru
      _
    %p261 = scmp.le.s32.totalorder 1, %s14
    %p262 = scmp.lt.s32.totalorder %s14, 3
    %p263 = pnand %p261, %p262
    %p264 = pneg %p263
    // Predicated region
    $region49: #{bsc_s_muti_cat_forward.1} parent=5 // pred_check
      _
    $region50: #{bsc_s_muti_cat_forward.1} parent=5 // pred_check_branch
      %266 = sbr.rel (%p263) target = $region52
    $region51: #{bsc_s_muti_cat_forward.1} parent=5 // pred_region
      %s267 = ssub.s32 %s14, 1
      %p268 = scmp.lt.s32.totalorder %s19, 1
      %s269 = scalar_select %p268, %s19, 1
      %s270 = smul.addr %s269, 2
      %s271 = smul.addr %s270, 8
      %s272 = scalar_lea.vmem %s0, %s271
      %p273 = pneg %p40
      %p274 = pneg %p37
      %p275 = pneg %p61
      %p276 = pneg %p58
      %p277 = pneg %p82
      %p278 = pneg %p79
      %p279 = pneg %p103
      %p280 = pneg %p100
      %p281 = pneg %p124
      %p282 = pneg %p121
      %p283 = pneg %p145
      %p284 = pneg %p142
      %p285 = pneg %p166
      %p286 = pneg %p163
      %p287 = pneg %p187
      %p288 = pneg %p184
      %p289 = pneg %p213
      %p290 = pneg %p210
      %p291 = scmp.lt.s32.totalorder %s19, 1
      %s292 = scalar_select %p291, %s19, 1
      %s293 = smul.addr %s292, 2
      %s294 = smul.addr %s293, 8
      %s295 = scalar_lea.vmem %s8, %s294
      %p296 = scmp.lt.s32.totalorder %s19, 1
      %s297 = scalar_select %p296, %s19, 1
      %s298 = smul.addr %s297, 2
      %s299 = smul.addr %s298, 8
      %s300 = scalar_lea.vmem %s0, %s299
      %p301 = scmp.lt.s32.totalorder %s19, 1
      %s302 = scalar_select %p301, %s19, 1
      %s303 = smul.addr %s302, 2
      %s304 = smul.addr %s303, 8
      %s305 = scalar_lea.vmem %s8, %s304
      %v306 = vld [vmem:[%s300] sm:$0xff]
      %v307 = vld [vmem:[%s300 + $0x8] sm:$0xff]
      %v308 = vld [vmem:[%s1] sm:$0xf]
      %v309 = vld [vmem:[%s2] sm:$0xff]
      %v310 = vld [vmem:[%s2 + $0x8] sm:$0xff]
      %v311 = vld [vmem:[%s2 + $0x10] sm:$0xff]
      %v312 = vld [vmem:[%s2 + $0x18] sm:$0xff]
      %v313 = vld [vmem:[%s3] sm:$0xff]
      %v314 = vld [vmem:[%s3 + $0x8] sm:$0xff]
      %v315 = vld [vmem:[%s3 + $0x10] sm:$0xff]
      %v316 = vld [vmem:[%s3 + $0x18] sm:$0xff]
      %v317 = vld [vmem:[%s4] sm:$0xff]
      %v318 = vld [vmem:[%s5] sm:$0xff]
      %v319 = vld [vmem:[%s6] sm:$0xff]
      %v320 = vld [vmem:[%s7] sm:$0xff]
      %322 = vset.pattern.permute.xlu0 0
      %323 = vperm.xlu0 %322, %v313
      %v324 = vpop.permute.xlu0 %323
      %327 = vset.pattern.permute.xlu0 0
      %328 = vperm.xlu0 %327, %v314
      %v329 = vpop.permute.xlu0 %328
      %332 = vset.pattern.permute.xlu0 0
      %333 = vperm.xlu0 %332, %v315
      %v334 = vpop.permute.xlu0 %333
      %337 = vset.pattern.permute.xlu0 0
      %338 = vperm.xlu0 %337, %v316
      %v339 = vpop.permute.xlu0 %338
      %vm341 = vcmask 64512
      %v343 = vsel %vm341, %v309, 0
      %v346 = vsel %vm341, %v310, 0
      %v349 = vsel %vm341, %v311, 0
      %v352 = vsel %vm341, %v312, 0
      %354 = vmatprep.subr.mxu0 0.0
      %355 = vmatpush1.msra.mxu0 0.0
      %356 = vmatprep.subr.mxu0 0.0
      %357 = vmatpush1.msra.mxu0 0.0
      %358 = vmatprep.subr.mxu0 0.0
      %359 = vmatpush1.msra.mxu0 0.0
      %360 = vmatprep.subr.mxu0 0.0
      %361 = vmatpush1.msra.mxu0 0.0
      %362 = vmatprep.subr.mxu0 0.0
      %363 = vmatpush1.msra.mxu0 0.0
      %364 = vmatprep.subr.mxu0 0.0
      %365 = vmatpush1.msra.mxu0 0.0
      %366 = vmatprep.subr.mxu0 0.0
      %367 = vmatpush1.msra.mxu0 0.0
      %368 = vmatprep.subr.mxu0 0.0
      %369 = vmatpush1.msra.mxu0 0.0
      %370 = vmatprep.subr.mxu0 0.0
      %371 = vmatpush1.msra.mxu0 0.0
      %372 = vmatprep.subr.mxu0 0.0
      %373 = vmatpush1.msra.mxu0 0.0
      %374 = vmatprep.subr.mxu0 0.0
      %375 = vmatpush1.msra.mxu0 0.0
      %376 = vmatprep.subr.mxu0 0.0
      %377 = vmatpush1.msra.mxu0 0.0
      %378 = vmatprep.subr.mxu0 0.0
      %379 = vmatpush1.msra.mxu0 0.0
      %380 = vmatprep.subr.mxu0 0.0
      %381 = vmatpush1.msra.mxu0 0.0
      %382 = vmatprep.subr.mxu0 0.0
      %383 = vmatpush1.msra.mxu0 0.0
      %384 = vmatprep.subr.mxu0 %v307
      %385 = vmatpush1.msra.mxu0 %v306
      %386 = vmatprep.subr.mxu0 0.0
      %387 = vmatpush2.msra.mxu0 0.0
      %388 = vmatprep.subr.mxu0 0.0
      %389 = vmatpush2.msra.mxu0 0.0
      %390 = vmatprep.subr.mxu0 0.0
      %391 = vmatpush2.msra.mxu0 0.0
      %392 = vmatprep.subr.mxu0 0.0
      %393 = vmatpush2.msra.mxu0 0.0
      %394 = vmatprep.subr.mxu0 0.0
      %395 = vmatpush2.msra.mxu0 0.0
      %396 = vmatprep.subr.mxu0 0.0
      %397 = vmatpush2.msra.mxu0 0.0
      %398 = vmatprep.subr.mxu0 0.0
      %399 = vmatpush2.msra.mxu0 0.0
      %400 = vmatprep.subr.mxu0 0.0
      %401 = vmatpush2.msra.mxu0 0.0
      %402 = vmatprep.subr.mxu0 0.0
      %403 = vmatpush2.msra.mxu0 0.0
      %404 = vmatprep.subr.mxu0 0.0
      %405 = vmatpush2.msra.mxu0 0.0
      %406 = vmatprep.subr.mxu0 0.0
      %407 = vmatpush2.msra.mxu0 0.0
      %408 = vmatprep.subr.mxu0 0.0
      %409 = vmatpush2.msra.mxu0 0.0
      %410 = vmatprep.subr.mxu0 0.0
      %411 = vmatpush2.msra.mxu0 0.0
      %412 = vmatprep.subr.mxu0 0.0
      %413 = vmatpush2.msra.mxu0 0.0
      %414 = vmatprep.subr.mxu0 0.0
      %415 = vmatpush2.msra.mxu0 0.0
      %416 = vmatprep.subr.mxu0 0.0
      %417 = vmatpush2.msra.mxu0 0.0
      %418 = vmatprep.mubr.f32.mxu0 0.0
      %419 = vmatmul.mubr.f32.gmra.mxu0 %v343
      %v420 = vpop.f32.mrf.mxu0
      %v421 = vadd.f32 %v324, %v420
      %v422 = vpop.f32.mrf.mxu0
      %v423 = vadd.f32 %v324, %v422
      %424 = vmatprep.mubr.f32.mxu0 0.0
      %425 = vmatmul.mubr.f32.gmra.mxu0 %v346
      %v426 = vpop.f32.mrf.mxu0
      %v427 = vadd.f32 %v329, %v426
      %v428 = vpop.f32.mrf.mxu0
      %v429 = vadd.f32 %v329, %v428
      %430 = vmatprep.mubr.f32.mxu0 0.0
      %431 = vmatmul.mubr.f32.gmra.mxu0 %v349
      %v432 = vpop.f32.mrf.mxu0
      %v433 = vadd.f32 %v334, %v432
      %v434 = vpop.f32.mrf.mxu0
      %v435 = vadd.f32 %v334, %v434
      %436 = vmatprep.mubr.f32.mxu0 0.0
      %437 = vmatmul.mubr.f32.gmra.mxu0 %v352
      %v438 = vpop.f32.mrf.mxu0
      %v439 = vadd.f32 %v339, %v438
      %v440 = vpop.f32.mrf.mxu0
      %v441 = vadd.f32 %v339, %v440
      %442 = vdwg.mxu0
      %444 = vset.pattern.permute.xlu0 0
      %445 = vperm.xlu0 %444, %v318
      %v446 = vpop.permute.xlu0 %445
      %vm448 = vcmask 261120
      %v450 = vsel %vm448, %v317, 0
      %452 = vmatprep.subr.mxu0 0.0
      %453 = vmatpush1.msra.mxu0 0.0
      %454 = vmatprep.subr.mxu0 0.0
      %455 = vmatpush1.msra.mxu0 0.0
      %456 = vmatprep.subr.mxu0 0.0
      %457 = vmatpush1.msra.mxu0 0.0
      %458 = vmatprep.subr.mxu0 0.0
      %459 = vmatpush1.msra.mxu0 0.0
      %460 = vmatprep.subr.mxu0 0.0
      %461 = vmatpush1.msra.mxu0 0.0
      %462 = vmatprep.subr.mxu0 0.0
      %463 = vmatpush1.msra.mxu0 0.0
      %464 = vmatprep.subr.mxu0 0.0
      %465 = vmatpush1.msra.mxu0 0.0
      %466 = vmatprep.subr.mxu0 0.0
      %467 = vmatpush1.msra.mxu0 0.0
      %468 = vmatprep.subr.mxu0 0.0
      %469 = vmatpush1.msra.mxu0 0.0
      %470 = vmatprep.subr.mxu0 0.0
      %471 = vmatpush1.msra.mxu0 0.0
      %472 = vmatprep.subr.mxu0 0.0
      %473 = vmatpush1.msra.mxu0 0.0
      %474 = vmatprep.subr.mxu0 0.0
      %475 = vmatpush1.msra.mxu0 0.0
      %476 = vmatprep.subr.mxu0 %v441
      %477 = vmatpush1.msra.mxu0 %v439
      %478 = vmatprep.subr.mxu0 %v435
      %479 = vmatpush1.msra.mxu0 %v433
      %480 = vmatprep.subr.mxu0 %v429
      %481 = vmatpush1.msra.mxu0 %v427
      %482 = vmatprep.subr.mxu0 %v423
      %483 = vmatpush1.msra.mxu0 %v421
      %484 = vmatprep.subr.mxu0 0.0
      %485 = vmatpush2.msra.mxu0 0.0
      %486 = vmatprep.subr.mxu0 0.0
      %487 = vmatpush2.msra.mxu0 0.0
      %488 = vmatprep.subr.mxu0 0.0
      %489 = vmatpush2.msra.mxu0 0.0
      %490 = vmatprep.subr.mxu0 0.0
      %491 = vmatpush2.msra.mxu0 0.0
      %492 = vmatprep.subr.mxu0 0.0
      %493 = vmatpush2.msra.mxu0 0.0
      %494 = vmatprep.subr.mxu0 0.0
      %495 = vmatpush2.msra.mxu0 0.0
      %496 = vmatprep.subr.mxu0 0.0
      %497 = vmatpush2.msra.mxu0 0.0
      %498 = vmatprep.subr.mxu0 0.0
      %499 = vmatpush2.msra.mxu0 0.0
      %500 = vmatprep.subr.mxu0 0.0
      %501 = vmatpush2.msra.mxu0 0.0
      %502 = vmatprep.subr.mxu0 0.0
      %503 = vmatpush2.msra.mxu0 0.0
      %504 = vmatprep.subr.mxu0 0.0
      %505 = vmatpush2.msra.mxu0 0.0
      %506 = vmatprep.subr.mxu0 0.0
      %507 = vmatpush2.msra.mxu0 0.0
      %508 = vmatprep.subr.mxu0 0.0
      %509 = vmatpush2.msra.mxu0 0.0
      %510 = vmatprep.subr.mxu0 0.0
      %511 = vmatpush2.msra.mxu0 0.0
      %512 = vmatprep.subr.mxu0 0.0
      %513 = vmatpush2.msra.mxu0 0.0
      %514 = vmatprep.subr.mxu0 0.0
      %515 = vmatpush2.msra.mxu0 0.0
      %516 = vmatprep.mubr.f32.mxu0 0.0
      %517 = vmatmul.mubr.f32.gmra.mxu0 %v450
      %v518 = vpop.f32.mrf.mxu0
      %v519 = vadd.f32 %v446, %v518
      %v520 = vpop.f32.mrf.mxu0
      %v521 = vadd.f32 %v446, %v520
      %522 = vdwg.mxu0
      %vm523 = vcmp.ge.s32.totalorder %v308, 3
      %vm524 = vcmp.lt.s32.totalorder %v308, 19
      %vm525 = vmand %vm523, %vm524
      %vm526 = vcmp.ge.s32.totalorder %v308, 2
      %vm527 = vcmp.lt.s32.totalorder %v308, 18
      %vm528 = vmand %vm526, %vm527
      %vm529 = vcmp.ge.s32.totalorder %v308, 1
      %vm530 = vcmp.lt.s32.totalorder %v308, 17
      %vm531 = vmand %vm529, %vm530
      %vm532 = vcmp.ge.s32.totalorder %v308, 0
      %vm533 = vcmp.lt.s32.totalorder %v308, 16
      %vm534 = vmand %vm532, %vm533
      %vm535 = vcmp.ge.s32.totalorder %v308, 4294967295
      %vm536 = vcmp.lt.s32.totalorder %v308, 15
      %vm537 = vmand %vm535, %vm536
      %vm538 = vcmp.ge.s32.totalorder %v308, 4294967294
      %vm539 = vcmp.lt.s32.totalorder %v308, 14
      %vm540 = vmand %vm538, %vm539
      %vm541 = vcmp.ge.s32.totalorder %v308, 4294967293
      %vm542 = vcmp.lt.s32.totalorder %v308, 13
      %vm543 = vmand %vm541, %vm542
      %544 = vrot.lane.b32.xlu0 %v519, 51
      %v545 = vpop.permute.xlu0 %544
      %546 = vrot.lane.b32.xlu0 %v521, 51
      %v547 = vpop.permute.xlu0 %546
      %v548 = vlaneseq
      %v549 = vand.u32 %v548, 127
      %vm550 = vcmp.lt.s32.totalorder %v549, 51
      %v551 = vsel %vm550, %v545, %v547
      %v552 = vsel %vm550, %v547, %v545
      %v553 = vsel %vm525, 1, 0
      %v554 = vrot.slane %v553, 7
      %v555 = vrot.slane %v554, 2
      %vm556 = vcmp.ne.s32.totalorder %v555, 0
      %vm557 = vmand %vm525, %vm556
      %v558 = vsel %vm557, 1, 0
      %v559 = vlaneseq
      %v560 = vshrl.u32 %v559, 7
      %v561 = vsub.s32 0, %v560
      %v562 = vrot.slane %v558, %v561
      %v563 = vlaneseq
      %v564 = vshrl.u32 %v563, 7
      %v565 = vsub.s32 2, %v564
      %v566 = vrot.slane %v558, %v565
      %v567 = vlaneseq
      %v568 = vshrl.u32 %v567, 7
      %v569 = vsub.s32 0, %v568
      %v570 = vrot.slane %v562, %v569
      %v571 = vlaneseq
      %v572 = vshrl.u32 %v571, 7
      %v573 = vsub.s32 0, %v572
      %v574 = vrot.slane %v566, %v573
      %vm575 = vcmp.eq.s32.totalorder %v570, 1
      %vm576 = vcmp.eq.s32.totalorder %v574, 1
      %v577 = vsel %vm575, %v552, 0.0
      %v578 = vsel %vm576, %v551, 0.0
      %580 = vset.pattern.permute.xlu0 0
      %581 = vperm.xlu0 %580, %v319
      %v582 = vpop.permute.xlu0 %581
      %v584 = vmul.f32 %v577, %v582
      %v585 = vmul.f32 %v578, %v582
      %v586 = vadd.f32 %v584, 0.0
      %v587 = vadd.f32 %v585, 0.0
      %588 = vrot.lane.b32.xlu0 %v519, 50
      %v589 = vpop.permute.xlu0 %588
      %590 = vrot.lane.b32.xlu0 %v521, 50
      %v591 = vpop.permute.xlu0 %590
      %vm592 = vcmp.lt.s32.totalorder %v549, 50
      %v593 = vsel %vm592, %v589, %v591
      %v594 = vsel %vm592, %v591, %v589
      %v595 = vsel %vm528, 1, 0
      %v596 = vrot.slane %v595, 7
      %v597 = vrot.slane %v596, 2
      %vm598 = vcmp.ne.s32.totalorder %v597, 0
      %vm599 = vmand %vm525, %vm598
      %v600 = vsel %vm599, 1, 0
      %v601 = vlaneseq
      %v602 = vshrl.u32 %v601, 7
      %v603 = vsub.s32 0, %v602
      %v604 = vrot.slane %v600, %v603
      %v605 = vlaneseq
      %v606 = vshrl.u32 %v605, 7
      %v607 = vsub.s32 2, %v606
      %v608 = vrot.slane %v600, %v607
      %v609 = vlaneseq
      %v610 = vshrl.u32 %v609, 7
      %v611 = vsub.s32 0, %v610
      %v612 = vrot.slane %v604, %v611
      %v613 = vlaneseq
      %v614 = vshrl.u32 %v613, 7
      %v615 = vsub.s32 0, %v614
      %v616 = vrot.slane %v608, %v615
      %vm617 = vcmp.eq.s32.totalorder %v612, 1
      %vm618 = vcmp.eq.s32.totalorder %v616, 1
      %v619 = vsel %vm617, %v594, 0.0
      %v620 = vsel %vm618, %v593, 0.0
      %621 = vset.pattern.permute.xlu0 1
      %622 = vperm.xlu0 %621, %v319
      %v623 = vpop.permute.xlu0 %622
      %v625 = vmul.f32 %v619, %v623
      %v626 = vmul.f32 %v620, %v623
      %v627 = vadd.f32 %v586, %v625
      %v628 = vadd.f32 %v587, %v626
      %629 = vrot.lane.b32.xlu0 %v519, 49
      %v630 = vpop.permute.xlu0 %629
      %631 = vrot.lane.b32.xlu0 %v521, 49
      %v632 = vpop.permute.xlu0 %631
      %vm633 = vcmp.lt.s32.totalorder %v549, 49
      %v634 = vsel %vm633, %v630, %v632
      %v635 = vsel %vm633, %v632, %v630
      %v636 = vsel %vm531, 1, 0
      %v637 = vrot.slane %v636, 7
      %v638 = vrot.slane %v637, 2
      %vm639 = vcmp.ne.s32.totalorder %v638, 0
      %vm640 = vmand %vm525, %vm639
      %v641 = vsel %vm640, 1, 0
      %v642 = vlaneseq
      %v643 = vshrl.u32 %v642, 7
      %v644 = vsub.s32 0, %v643
      %v645 = vrot.slane %v641, %v644
      %v646 = vlaneseq
      %v647 = vshrl.u32 %v646, 7
      %v648 = vsub.s32 2, %v647
      %v649 = vrot.slane %v641, %v648
      %v650 = vlaneseq
      %v651 = vshrl.u32 %v650, 7
      %v652 = vsub.s32 0, %v651
      %v653 = vrot.slane %v645, %v652
      %v654 = vlaneseq
      %v655 = vshrl.u32 %v654, 7
      %v656 = vsub.s32 0, %v655
      %v657 = vrot.slane %v649, %v656
      %vm658 = vcmp.eq.s32.totalorder %v653, 1
      %vm659 = vcmp.eq.s32.totalorder %v657, 1
      %v660 = vsel %vm658, %v635, 0.0
      %v661 = vsel %vm659, %v634, 0.0
      %662 = vset.pattern.permute.xlu0 2
      %663 = vperm.xlu0 %662, %v319
      %v664 = vpop.permute.xlu0 %663
      %v666 = vmul.f32 %v660, %v664
      %v667 = vmul.f32 %v661, %v664
      %v668 = vadd.f32 %v627, %v666
      %v669 = vadd.f32 %v628, %v667
      %670 = vrot.lane.b32.xlu0 %v519, 48
      %v671 = vpop.permute.xlu0 %670
      %672 = vrot.lane.b32.xlu0 %v521, 48
      %v673 = vpop.permute.xlu0 %672
      %vm674 = vcmp.lt.s32.totalorder %v549, 48
      %v675 = vsel %vm674, %v671, %v673
      %v676 = vsel %vm674, %v673, %v671
      %v677 = vsel %vm534, 1, 0
      %v678 = vrot.slane %v677, 7
      %v679 = vrot.slane %v678, 2
      %vm680 = vcmp.ne.s32.totalorder %v679, 0
      %vm681 = vmand %vm525, %vm680
      %v682 = vsel %vm681, 1, 0
      %v683 = vlaneseq
      %v684 = vshrl.u32 %v683, 7
      %v685 = vsub.s32 0, %v684
      %v686 = vrot.slane %v682, %v685
      %v687 = vlaneseq
      %v688 = vshrl.u32 %v687, 7
      %v689 = vsub.s32 2, %v688
      %v690 = vrot.slane %v682, %v689
      %v691 = vlaneseq
      %v692 = vshrl.u32 %v691, 7
      %v693 = vsub.s32 0, %v692
      %v694 = vrot.slane %v686, %v693
      %v695 = vlaneseq
      %v696 = vshrl.u32 %v695, 7
      %v697 = vsub.s32 0, %v696
      %v698 = vrot.slane %v690, %v697
      %vm699 = vcmp.eq.s32.totalorder %v694, 1
      %vm700 = vcmp.eq.s32.totalorder %v698, 1
      %v701 = vsel %vm699, %v676, 0.0
      %v702 = vsel %vm700, %v675, 0.0
      %703 = vset.pattern.permute.xlu0 3
      %704 = vperm.xlu0 %703, %v319
      %v705 = vpop.permute.xlu0 %704
      %v707 = vmul.f32 %v701, %v705
      %v708 = vmul.f32 %v702, %v705
      %v709 = vadd.f32 %v668, %v707
      %v710 = vadd.f32 %v669, %v708
      %711 = vrot.lane.b32.xlu0 %v519, 47
      %v712 = vpop.permute.xlu0 %711
      %713 = vrot.lane.b32.xlu0 %v521, 47
      %v714 = vpop.permute.xlu0 %713
      %vm715 = vcmp.lt.s32.totalorder %v549, 47
      %v716 = vsel %vm715, %v712, %v714
      %v717 = vsel %vm715, %v714, %v712
      %v718 = vsel %vm537, 1, 0
      %v719 = vrot.slane %v718, 7
      %v720 = vrot.slane %v719, 2
      %vm721 = vcmp.ne.s32.totalorder %v720, 0
      %vm722 = vmand %vm525, %vm721
      %v723 = vsel %vm722, 1, 0
      %v724 = vlaneseq
      %v725 = vshrl.u32 %v724, 7
      %v726 = vsub.s32 0, %v725
      %v727 = vrot.slane %v723, %v726
      %v728 = vlaneseq
      %v729 = vshrl.u32 %v728, 7
      %v730 = vsub.s32 2, %v729
      %v731 = vrot.slane %v723, %v730
      %v732 = vlaneseq
      %v733 = vshrl.u32 %v732, 7
      %v734 = vsub.s32 0, %v733
      %v735 = vrot.slane %v727, %v734
      %v736 = vlaneseq
      %v737 = vshrl.u32 %v736, 7
      %v738 = vsub.s32 0, %v737
      %v739 = vrot.slane %v731, %v738
      %vm740 = vcmp.eq.s32.totalorder %v735, 1
      %vm741 = vcmp.eq.s32.totalorder %v739, 1
      %v742 = vsel %vm740, %v717, 0.0
      %v743 = vsel %vm741, %v716, 0.0
      %744 = vset.pattern.permute.xlu0 4
      %745 = vperm.xlu0 %744, %v319
      %v746 = vpop.permute.xlu0 %745
      %v748 = vmul.f32 %v742, %v746
      %v749 = vmul.f32 %v743, %v746
      %v750 = vadd.f32 %v709, %v748
      %v751 = vadd.f32 %v710, %v749
      %752 = vrot.lane.b32.xlu0 %v519, 46
      %v753 = vpop.permute.xlu0 %752
      %754 = vrot.lane.b32.xlu0 %v521, 46
      %v755 = vpop.permute.xlu0 %754
      %vm756 = vcmp.lt.s32.totalorder %v549, 46
      %v757 = vsel %vm756, %v753, %v755
      %v758 = vsel %vm756, %v755, %v753
      %v759 = vsel %vm540, 1, 0
      %v760 = vrot.slane %v759, 7
      %v761 = vrot.slane %v760, 2
      %vm762 = vcmp.ne.s32.totalorder %v761, 0
      %vm763 = vmand %vm525, %vm762
      %v764 = vsel %vm763, 1, 0
      %v765 = vlaneseq
      %v766 = vshrl.u32 %v765, 7
      %v767 = vsub.s32 0, %v766
      %v768 = vrot.slane %v764, %v767
      %v769 = vlaneseq
      %v770 = vshrl.u32 %v769, 7
      %v771 = vsub.s32 2, %v770
      %v772 = vrot.slane %v764, %v771
      %v773 = vlaneseq
      %v774 = vshrl.u32 %v773, 7
      %v775 = vsub.s32 0, %v774
      %v776 = vrot.slane %v768, %v775
      %v777 = vlaneseq
      %v778 = vshrl.u32 %v777, 7
      %v779 = vsub.s32 0, %v778
      %v780 = vrot.slane %v772, %v779
      %vm781 = vcmp.eq.s32.totalorder %v776, 1
      %vm782 = vcmp.eq.s32.totalorder %v780, 1
      %v783 = vsel %vm781, %v758, 0.0
      %v784 = vsel %vm782, %v757, 0.0
      %785 = vset.pattern.permute.xlu0 5
      %786 = vperm.xlu0 %785, %v319
      %v787 = vpop.permute.xlu0 %786
      %v789 = vmul.f32 %v783, %v787
      %v790 = vmul.f32 %v784, %v787
      %v791 = vadd.f32 %v750, %v789
      %v792 = vadd.f32 %v751, %v790
      %793 = vrot.lane.b32.xlu0 %v519, 45
      %v794 = vpop.permute.xlu0 %793
      %795 = vrot.lane.b32.xlu0 %v521, 45
      %v796 = vpop.permute.xlu0 %795
      %vm797 = vcmp.lt.s32.totalorder %v549, 45
      %v798 = vsel %vm797, %v794, %v796
      %v799 = vsel %vm797, %v796, %v794
      %v800 = vsel %vm543, 1, 0
      %v801 = vrot.slane %v800, 7
      %v802 = vrot.slane %v801, 2
      %vm803 = vcmp.ne.s32.totalorder %v802, 0
      %vm804 = vmand %vm525, %vm803
      %v805 = vsel %vm804, 1, 0
      %v806 = vlaneseq
      %v807 = vshrl.u32 %v806, 7
      %v808 = vsub.s32 0, %v807
      %v809 = vrot.slane %v805, %v808
      %v810 = vlaneseq
      %v811 = vshrl.u32 %v810, 7
      %v812 = vsub.s32 2, %v811
      %v813 = vrot.slane %v805, %v812
      %v814 = vlaneseq
      %v815 = vshrl.u32 %v814, 7
      %v816 = vsub.s32 0, %v815
      %v817 = vrot.slane %v809, %v816
      %v818 = vlaneseq
      %v819 = vshrl.u32 %v818, 7
      %v820 = vsub.s32 0, %v819
      %v821 = vrot.slane %v813, %v820
      %vm822 = vcmp.eq.s32.totalorder %v817, 1
      %vm823 = vcmp.eq.s32.totalorder %v821, 1
      %v824 = vsel %vm822, %v799, 0.0
      %v825 = vsel %vm823, %v798, 0.0
      %826 = vset.pattern.permute.xlu0 6
      %827 = vperm.xlu0 %826, %v319
      %v828 = vpop.permute.xlu0 %827
      %v830 = vmul.f32 %v824, %v828
      %v831 = vmul.f32 %v825, %v828
      %v832 = vadd.f32 %v791, %v830
      %v833 = vadd.f32 %v792, %v831
      %834 = vrot.lane.b32.xlu0 %v519, 35
      %v835 = vpop.permute.xlu0 %834
      %836 = vrot.lane.b32.xlu0 %v521, 35
      %v837 = vpop.permute.xlu0 %836
      %vm838 = vcmp.lt.s32.totalorder %v549, 35
      %v839 = vsel %vm838, %v835, %v837
      %v840 = vsel %vm838, %v837, %v835
      %vm841 = vmand %vm528, %vm556
      %v842 = vsel %vm841, 1, 0
      %v843 = vlaneseq
      %v844 = vshrl.u32 %v843, 7
      %v845 = vsub.s32 0, %v844
      %v846 = vrot.slane %v842, %v845
      %v847 = vlaneseq
      %v848 = vshrl.u32 %v847, 7
      %v849 = vsub.s32 2, %v848
      %v850 = vrot.slane %v842, %v849
      %v851 = vlaneseq
      %v852 = vshrl.u32 %v851, 7
      %v853 = vsub.s32 0, %v852
      %v854 = vrot.slane %v846, %v853
      %v855 = vlaneseq
      %v856 = vshrl.u32 %v855, 7
      %v857 = vsub.s32 0, %v856
      %v858 = vrot.slane %v850, %v857
      %vm859 = vcmp.eq.s32.totalorder %v854, 1
      %vm860 = vcmp.eq.s32.totalorder %v858, 1
      %v861 = vsel %vm859, %v840, 0.0
      %v862 = vsel %vm860, %v839, 0.0
      %863 = vset.pattern.permute.xlu0 7
      %864 = vperm.xlu0 %863, %v319
      %v865 = vpop.permute.xlu0 %864
      %v867 = vmul.f32 %v861, %v865
      %v868 = vmul.f32 %v862, %v865
      %v869 = vadd.f32 %v832, %v867
      %v870 = vadd.f32 %v833, %v868
      %871 = vrot.lane.b32.xlu0 %v519, 34
      %v872 = vpop.permute.xlu0 %871
      %873 = vrot.lane.b32.xlu0 %v521, 34
      %v874 = vpop.permute.xlu0 %873
      %vm875 = vcmp.lt.s32.totalorder %v549, 34
      %v876 = vsel %vm875, %v872, %v874
      %v877 = vsel %vm875, %v874, %v872
      %vm878 = vmand %vm528, %vm598
      %v879 = vsel %vm878, 1, 0
      %v880 = vlaneseq
      %v881 = vshrl.u32 %v880, 7
      %v882 = vsub.s32 0, %v881
      %v883 = vrot.slane %v879, %v882
      %v884 = vlaneseq
      %v885 = vshrl.u32 %v884, 7
      %v886 = vsub.s32 2, %v885
      %v887 = vrot.slane %v879, %v886
      %v888 = vlaneseq
      %v889 = vshrl.u32 %v888, 7
      %v890 = vsub.s32 0, %v889
      %v891 = vrot.slane %v883, %v890
      %v892 = vlaneseq
      %v893 = vshrl.u32 %v892, 7
      %v894 = vsub.s32 0, %v893
      %v895 = vrot.slane %v887, %v894
      %vm896 = vcmp.eq.s32.totalorder %v891, 1
      %vm897 = vcmp.eq.s32.totalorder %v895, 1
      %v898 = vsel %vm896, %v877, 0.0
      %v899 = vsel %vm897, %v876, 0.0
      %900 = vset.pattern.permute.xlu0 8
      %901 = vperm.xlu0 %900, %v319
      %v902 = vpop.permute.xlu0 %901
      %v904 = vmul.f32 %v898, %v902
      %v905 = vmul.f32 %v899, %v902
      %v906 = vadd.f32 %v869, %v904
      %v907 = vadd.f32 %v870, %v905
      %908 = vrot.lane.b32.xlu0 %v519, 33
      %v909 = vpop.permute.xlu0 %908
      %910 = vrot.lane.b32.xlu0 %v521, 33
      %v911 = vpop.permute.xlu0 %910
      %vm912 = vcmp.lt.s32.totalorder %v549, 33
      %v913 = vsel %vm912, %v909, %v911
      %v914 = vsel %vm912, %v911, %v909
      %vm915 = vmand %vm528, %vm639
      %v916 = vsel %vm915, 1, 0
      %v917 = vlaneseq
      %v918 = vshrl.u32 %v917, 7
      %v919 = vsub.s32 0, %v918
      %v920 = vrot.slane %v916, %v919
      %v921 = vlaneseq
      %v922 = vshrl.u32 %v921, 7
      %v923 = vsub.s32 2, %v922
      %v924 = vrot.slane %v916, %v923
      %v925 = vlaneseq
      %v926 = vshrl.u32 %v925, 7
      %v927 = vsub.s32 0, %v926
      %v928 = vrot.slane %v920, %v927
      %v929 = vlaneseq
      %v930 = vshrl.u32 %v929, 7
      %v931 = vsub.s32 0, %v930
      %v932 = vrot.slane %v924, %v931
      %vm933 = vcmp.eq.s32.totalorder %v928, 1
      %vm934 = vcmp.eq.s32.totalorder %v932, 1
      %v935 = vsel %vm933, %v914, 0.0
      %v936 = vsel %vm934, %v913, 0.0
      %937 = vset.pattern.permute.xlu0 9
      %938 = vperm.xlu0 %937, %v319
      %v939 = vpop.permute.xlu0 %938
      %v941 = vmul.f32 %v935, %v939
      %v942 = vmul.f32 %v936, %v939
      %v943 = vadd.f32 %v906, %v941
      %v944 = vadd.f32 %v907, %v942
      %945 = vrot.lane.b32.xlu0 %v519, 32
      %v946 = vpop.permute.xlu0 %945
      %947 = vrot.lane.b32.xlu0 %v521, 32
      %v948 = vpop.permute.xlu0 %947
      %vm949 = vcmp.lt.s32.totalorder %v549, 32
      %v950 = vsel %vm949, %v946, %v948
      %v951 = vsel %vm949, %v948, %v946
      %vm952 = vmand %vm528, %vm680
      %v953 = vsel %vm952, 1, 0
      %v954 = vlaneseq
      %v955 = vshrl.u32 %v954, 7
      %v956 = vsub.s32 0, %v955
      %v957 = vrot.slane %v953, %v956
      %v958 = vlaneseq
      %v959 = vshrl.u32 %v958, 7
      %v960 = vsub.s32 2, %v959
      %v961 = vrot.slane %v953, %v960
      %v962 = vlaneseq
      %v963 = vshrl.u32 %v962, 7
      %v964 = vsub.s32 0, %v963
      %v965 = vrot.slane %v957, %v964
      %v966 = vlaneseq
      %v967 = vshrl.u32 %v966, 7
      %v968 = vsub.s32 0, %v967
      %v969 = vrot.slane %v961, %v968
      %vm970 = vcmp.eq.s32.totalorder %v965, 1
      %vm971 = vcmp.eq.s32.totalorder %v969, 1
      %v972 = vsel %vm970, %v951, 0.0
      %v973 = vsel %vm971, %v950, 0.0
      %974 = vset.pattern.permute.xlu0 10
      %975 = vperm.xlu0 %974, %v319
      %v976 = vpop.permute.xlu0 %975
      %v978 = vmul.f32 %v972, %v976
      %v979 = vmul.f32 %v973, %v976
      %v980 = vadd.f32 %v943, %v978
      %v981 = vadd.f32 %v944, %v979
      %982 = vrot.lane.b32.xlu0 %v519, 31
      %v983 = vpop.permute.xlu0 %982
      %984 = vrot.lane.b32.xlu0 %v521, 31
      %v985 = vpop.permute.xlu0 %984
      %vm986 = vcmp.lt.s32.totalorder %v549, 31
      %v987 = vsel %vm986, %v983, %v985
      %v988 = vsel %vm986, %v985, %v983
      %vm989 = vmand %vm528, %vm721
      %v990 = vsel %vm989, 1, 0
      %v991 = vlaneseq
      %v992 = vshrl.u32 %v991, 7
      %v993 = vsub.s32 0, %v992
      %v994 = vrot.slane %v990, %v993
      %v995 = vlaneseq
      %v996 = vshrl.u32 %v995, 7
      %v997 = vsub.s32 2, %v996
      %v998 = vrot.slane %v990, %v997
      %v999 = vlaneseq
      %v1000 = vshrl.u32 %v999, 7
      %v1001 = vsub.s32 0, %v1000
      %v1002 = vrot.slane %v994, %v1001
      %v1003 = vlaneseq
      %v1004 = vshrl.u32 %v1003, 7
      %v1005 = vsub.s32 0, %v1004
      %v1006 = vrot.slane %v998, %v1005
      %vm1007 = vcmp.eq.s32.totalorder %v1002, 1
      %vm1008 = vcmp.eq.s32.totalorder %v1006, 1
      %v1009 = vsel %vm1007, %v988, 0.0
      %v1010 = vsel %vm1008, %v987, 0.0
      %1011 = vset.pattern.permute.xlu0 11
      %1012 = vperm.xlu0 %1011, %v319
      %v1013 = vpop.permute.xlu0 %1012
      %v1015 = vmul.f32 %v1009, %v1013
      %v1016 = vmul.f32 %v1010, %v1013
      %v1017 = vadd.f32 %v980, %v1015
      %v1018 = vadd.f32 %v981, %v1016
      %1019 = vrot.lane.b32.xlu0 %v519, 30
      %v1020 = vpop.permute.xlu0 %1019
      %1021 = vrot.lane.b32.xlu0 %v521, 30
      %v1022 = vpop.permute.xlu0 %1021
      %vm1023 = vcmp.lt.s32.totalorder %v549, 30
      %v1024 = vsel %vm1023, %v1020, %v1022
      %v1025 = vsel %vm1023, %v1022, %v1020
      %vm1026 = vmand %vm528, %vm762
      %v1027 = vsel %vm1026, 1, 0
      %v1028 = vlaneseq
      %v1029 = vshrl.u32 %v1028, 7
      %v1030 = vsub.s32 0, %v1029
      %v1031 = vrot.slane %v1027, %v1030
      %v1032 = vlaneseq
      %v1033 = vshrl.u32 %v1032, 7
      %v1034 = vsub.s32 2, %v1033
      %v1035 = vrot.slane %v1027, %v1034
      %v1036 = vlaneseq
      %v1037 = vshrl.u32 %v1036, 7
      %v1038 = vsub.s32 0, %v1037
      %v1039 = vrot.slane %v1031, %v1038
      %v1040 = vlaneseq
      %v1041 = vshrl.u32 %v1040, 7
      %v1042 = vsub.s32 0, %v1041
      %v1043 = vrot.slane %v1035, %v1042
      %vm1044 = vcmp.eq.s32.totalorder %v1039, 1
      %vm1045 = vcmp.eq.s32.totalorder %v1043, 1
      %v1046 = vsel %vm1044, %v1025, 0.0
      %v1047 = vsel %vm1045, %v1024, 0.0
      %1048 = vset.pattern.permute.xlu0 12
      %1049 = vperm.xlu0 %1048, %v319
      %v1050 = vpop.permute.xlu0 %1049
      %v1052 = vmul.f32 %v1046, %v1050
      %v1053 = vmul.f32 %v1047, %v1050
      %v1054 = vadd.f32 %v1017, %v1052
      %v1055 = vadd.f32 %v1018, %v1053
      %1056 = vrot.lane.b32.xlu0 %v519, 29
      %v1057 = vpop.permute.xlu0 %1056
      %1058 = vrot.lane.b32.xlu0 %v521, 29
      %v1059 = vpop.permute.xlu0 %1058
      %vm1060 = vcmp.lt.s32.totalorder %v549, 29
      %v1061 = vsel %vm1060, %v1057, %v1059
      %v1062 = vsel %vm1060, %v1059, %v1057
      %vm1063 = vmand %vm528, %vm803
      %v1064 = vsel %vm1063, 1, 0
      %v1065 = vlaneseq
      %v1066 = vshrl.u32 %v1065, 7
      %v1067 = vsub.s32 0, %v1066
      %v1068 = vrot.slane %v1064, %v1067
      %v1069 = vlaneseq
      %v1070 = vshrl.u32 %v1069, 7
      %v1071 = vsub.s32 2, %v1070
      %v1072 = vrot.slane %v1064, %v1071
      %v1073 = vlaneseq
      %v1074 = vshrl.u32 %v1073, 7
      %v1075 = vsub.s32 0, %v1074
      %v1076 = vrot.slane %v1068, %v1075
      %v1077 = vlaneseq
      %v1078 = vshrl.u32 %v1077, 7
      %v1079 = vsub.s32 0, %v1078
      %v1080 = vrot.slane %v1072, %v1079
      %vm1081 = vcmp.eq.s32.totalorder %v1076, 1
      %vm1082 = vcmp.eq.s32.totalorder %v1080, 1
      %v1083 = vsel %vm1081, %v1062, 0.0
      %v1084 = vsel %vm1082, %v1061, 0.0
      %1085 = vset.pattern.permute.xlu0 13
      %1086 = vperm.xlu0 %1085, %v319
      %v1087 = vpop.permute.xlu0 %1086
      %v1089 = vmul.f32 %v1083, %v1087
      %v1090 = vmul.f32 %v1084, %v1087
      %v1091 = vadd.f32 %v1054, %v1089
      %v1092 = vadd.f32 %v1055, %v1090
      %1093 = vrot.lane.b32.xlu0 %v519, 19
      %v1094 = vpop.permute.xlu0 %1093
      %1095 = vrot.lane.b32.xlu0 %v521, 19
      %v1096 = vpop.permute.xlu0 %1095
      %vm1097 = vcmp.lt.s32.totalorder %v549, 19
      %v1098 = vsel %vm1097, %v1094, %v1096
      %v1099 = vsel %vm1097, %v1096, %v1094
      %vm1100 = vmand %vm531, %vm556
      %v1101 = vsel %vm1100, 1, 0
      %v1102 = vlaneseq
      %v1103 = vshrl.u32 %v1102, 7
      %v1104 = vsub.s32 0, %v1103
      %v1105 = vrot.slane %v1101, %v1104
      %v1106 = vlaneseq
      %v1107 = vshrl.u32 %v1106, 7
      %v1108 = vsub.s32 2, %v1107
      %v1109 = vrot.slane %v1101, %v1108
      %v1110 = vlaneseq
      %v1111 = vshrl.u32 %v1110, 7
      %v1112 = vsub.s32 0, %v1111
      %v1113 = vrot.slane %v1105, %v1112
      %v1114 = vlaneseq
      %v1115 = vshrl.u32 %v1114, 7
      %v1116 = vsub.s32 0, %v1115
      %v1117 = vrot.slane %v1109, %v1116
      %vm1118 = vcmp.eq.s32.totalorder %v1113, 1
      %vm1119 = vcmp.eq.s32.totalorder %v1117, 1
      %v1120 = vsel %vm1118, %v1099, 0.0
      %v1121 = vsel %vm1119, %v1098, 0.0
      %1122 = vset.pattern.permute.xlu0 14
      %1123 = vperm.xlu0 %1122, %v319
      %v1124 = vpop.permute.xlu0 %1123
      %v1126 = vmul.f32 %v1120, %v1124
      %v1127 = vmul.f32 %v1121, %v1124
      %v1128 = vadd.f32 %v1091, %v1126
      %v1129 = vadd.f32 %v1092, %v1127
      %1130 = vrot.lane.b32.xlu0 %v519, 18
      %v1131 = vpop.permute.xlu0 %1130
      %1132 = vrot.lane.b32.xlu0 %v521, 18
      %v1133 = vpop.permute.xlu0 %1132
      %vm1134 = vcmp.lt.s32.totalorder %v549, 18
      %v1135 = vsel %vm1134, %v1131, %v1133
      %v1136 = vsel %vm1134, %v1133, %v1131
      %vm1137 = vmand %vm531, %vm598
      %v1138 = vsel %vm1137, 1, 0
      %v1139 = vlaneseq
      %v1140 = vshrl.u32 %v1139, 7
      %v1141 = vsub.s32 0, %v1140
      %v1142 = vrot.slane %v1138, %v1141
      %v1143 = vlaneseq
      %v1144 = vshrl.u32 %v1143, 7
      %v1145 = vsub.s32 2, %v1144
      %v1146 = vrot.slane %v1138, %v1145
      %v1147 = vlaneseq
      %v1148 = vshrl.u32 %v1147, 7
      %v1149 = vsub.s32 0, %v1148
      %v1150 = vrot.slane %v1142, %v1149
      %v1151 = vlaneseq
      %v1152 = vshrl.u32 %v1151, 7
      %v1153 = vsub.s32 0, %v1152
      %v1154 = vrot.slane %v1146, %v1153
      %vm1155 = vcmp.eq.s32.totalorder %v1150, 1
      %vm1156 = vcmp.eq.s32.totalorder %v1154, 1
      %v1157 = vsel %vm1155, %v1136, 0.0
      %v1158 = vsel %vm1156, %v1135, 0.0
      %1159 = vset.pattern.permute.xlu0 15
      %1160 = vperm.xlu0 %1159, %v319
      %v1161 = vpop.permute.xlu0 %1160
      %v1163 = vmul.f32 %v1157, %v1161
      %v1164 = vmul.f32 %v1158, %v1161
      %v1165 = vadd.f32 %v1128, %v1163
      %v1166 = vadd.f32 %v1129, %v1164
      %1167 = vrot.lane.b32.xlu0 %v519, 17
      %v1168 = vpop.permute.xlu0 %1167
      %1169 = vrot.lane.b32.xlu0 %v521, 17
      %v1170 = vpop.permute.xlu0 %1169
      %vm1171 = vcmp.lt.s32.totalorder %v549, 17
      %v1172 = vsel %vm1171, %v1168, %v1170
      %v1173 = vsel %vm1171, %v1170, %v1168
      %vm1174 = vmand %vm531, %vm639
      %v1175 = vsel %vm1174, 1, 0
      %v1176 = vlaneseq
      %v1177 = vshrl.u32 %v1176, 7
      %v1178 = vsub.s32 0, %v1177
      %v1179 = vrot.slane %v1175, %v1178
      %v1180 = vlaneseq
      %v1181 = vshrl.u32 %v1180, 7
      %v1182 = vsub.s32 2, %v1181
      %v1183 = vrot.slane %v1175, %v1182
      %v1184 = vlaneseq
      %v1185 = vshrl.u32 %v1184, 7
      %v1186 = vsub.s32 0, %v1185
      %v1187 = vrot.slane %v1179, %v1186
      %v1188 = vlaneseq
      %v1189 = vshrl.u32 %v1188, 7
      %v1190 = vsub.s32 0, %v1189
      %v1191 = vrot.slane %v1183, %v1190
      %vm1192 = vcmp.eq.s32.totalorder %v1187, 1
      %vm1193 = vcmp.eq.s32.totalorder %v1191, 1
      %v1194 = vsel %vm1192, %v1173, 0.0
      %v1195 = vsel %vm1193, %v1172, 0.0
      %1196 = vset.pattern.permute.xlu0 16
      %1197 = vperm.xlu0 %1196, %v319
      %v1198 = vpop.permute.xlu0 %1197
      %v1200 = vmul.f32 %v1194, %v1198
      %v1201 = vmul.f32 %v1195, %v1198
      %v1202 = vadd.f32 %v1165, %v1200
      %v1203 = vadd.f32 %v1166, %v1201
      %1204 = vrot.lane.b32.xlu0 %v519, 16
      %v1205 = vpop.permute.xlu0 %1204
      %1206 = vrot.lane.b32.xlu0 %v521, 16
      %v1207 = vpop.permute.xlu0 %1206
      %vm1208 = vcmp.lt.s32.totalorder %v549, 16
      %v1209 = vsel %vm1208, %v1205, %v1207
      %v1210 = vsel %vm1208, %v1207, %v1205
      %vm1211 = vmand %vm531, %vm680
      %v1212 = vsel %vm1211, 1, 0
      %v1213 = vlaneseq
      %v1214 = vshrl.u32 %v1213, 7
      %v1215 = vsub.s32 0, %v1214
      %v1216 = vrot.slane %v1212, %v1215
      %v1217 = vlaneseq
      %v1218 = vshrl.u32 %v1217, 7
      %v1219 = vsub.s32 2, %v1218
      %v1220 = vrot.slane %v1212, %v1219
      %v1221 = vlaneseq
      %v1222 = vshrl.u32 %v1221, 7
      %v1223 = vsub.s32 0, %v1222
      %v1224 = vrot.slane %v1216, %v1223
      %v1225 = vlaneseq
      %v1226 = vshrl.u32 %v1225, 7
      %v1227 = vsub.s32 0, %v1226
      %v1228 = vrot.slane %v1220, %v1227
      %vm1229 = vcmp.eq.s32.totalorder %v1224, 1
      %vm1230 = vcmp.eq.s32.totalorder %v1228, 1
      %v1231 = vsel %vm1229, %v1210, 0.0
      %v1232 = vsel %vm1230, %v1209, 0.0
      %1233 = vset.pattern.permute.xlu0 17
      %1234 = vperm.xlu0 %1233, %v319
      %v1235 = vpop.permute.xlu0 %1234
      %v1237 = vmul.f32 %v1231, %v1235
      %v1238 = vmul.f32 %v1232, %v1235
      %v1239 = vadd.f32 %v1202, %v1237
      %v1240 = vadd.f32 %v1203, %v1238
      %1241 = vrot.lane.b32.xlu0 %v519, 15
      %v1242 = vpop.permute.xlu0 %1241
      %1243 = vrot.lane.b32.xlu0 %v521, 15
      %v1244 = vpop.permute.xlu0 %1243
      %vm1245 = vcmp.lt.s32.totalorder %v549, 15
      %v1246 = vsel %vm1245, %v1242, %v1244
      %v1247 = vsel %vm1245, %v1244, %v1242
      %vm1248 = vmand %vm531, %vm721
      %v1249 = vsel %vm1248, 1, 0
      %v1250 = vlaneseq
      %v1251 = vshrl.u32 %v1250, 7
      %v1252 = vsub.s32 0, %v1251
      %v1253 = vrot.slane %v1249, %v1252
      %v1254 = vlaneseq
      %v1255 = vshrl.u32 %v1254, 7
      %v1256 = vsub.s32 2, %v1255
      %v1257 = vrot.slane %v1249, %v1256
      %v1258 = vlaneseq
      %v1259 = vshrl.u32 %v1258, 7
      %v1260 = vsub.s32 0, %v1259
      %v1261 = vrot.slane %v1253, %v1260
      %v1262 = vlaneseq
      %v1263 = vshrl.u32 %v1262, 7
      %v1264 = vsub.s32 0, %v1263
      %v1265 = vrot.slane %v1257, %v1264
      %vm1266 = vcmp.eq.s32.totalorder %v1261, 1
      %vm1267 = vcmp.eq.s32.totalorder %v1265, 1
      %v1268 = vsel %vm1266, %v1247, 0.0
      %v1269 = vsel %vm1267, %v1246, 0.0
      %1270 = vset.pattern.permute.xlu0 18
      %1271 = vperm.xlu0 %1270, %v319
      %v1272 = vpop.permute.xlu0 %1271
      %v1274 = vmul.f32 %v1268, %v1272
      %v1275 = vmul.f32 %v1269, %v1272
      %v1276 = vadd.f32 %v1239, %v1274
      %v1277 = vadd.f32 %v1240, %v1275
      %1278 = vrot.lane.b32.xlu0 %v519, 14
      %v1279 = vpop.permute.xlu0 %1278
      %1280 = vrot.lane.b32.xlu0 %v521, 14
      %v1281 = vpop.permute.xlu0 %1280
      %vm1282 = vcmp.lt.s32.totalorder %v549, 14
      %v1283 = vsel %vm1282, %v1279, %v1281
      %v1284 = vsel %vm1282, %v1281, %v1279
      %vm1285 = vmand %vm531, %vm762
      %v1286 = vsel %vm1285, 1, 0
      %v1287 = vlaneseq
      %v1288 = vshrl.u32 %v1287, 7
      %v1289 = vsub.s32 0, %v1288
      %v1290 = vrot.slane %v1286, %v1289
      %v1291 = vlaneseq
      %v1292 = vshrl.u32 %v1291, 7
      %v1293 = vsub.s32 2, %v1292
      %v1294 = vrot.slane %v1286, %v1293
      %v1295 = vlaneseq
      %v1296 = vshrl.u32 %v1295, 7
      %v1297 = vsub.s32 0, %v1296
      %v1298 = vrot.slane %v1290, %v1297
      %v1299 = vlaneseq
      %v1300 = vshrl.u32 %v1299, 7
      %v1301 = vsub.s32 0, %v1300
      %v1302 = vrot.slane %v1294, %v1301
      %vm1303 = vcmp.eq.s32.totalorder %v1298, 1
      %vm1304 = vcmp.eq.s32.totalorder %v1302, 1
      %v1305 = vsel %vm1303, %v1284, 0.0
      %v1306 = vsel %vm1304, %v1283, 0.0
      %1307 = vset.pattern.permute.xlu0 19
      %1308 = vperm.xlu0 %1307, %v319
      %v1309 = vpop.permute.xlu0 %1308
      %v1311 = vmul.f32 %v1305, %v1309
      %v1312 = vmul.f32 %v1306, %v1309
      %v1313 = vadd.f32 %v1276, %v1311
      %v1314 = vadd.f32 %v1277, %v1312
      %1315 = vrot.lane.b32.xlu0 %v519, 13
      %v1316 = vpop.permute.xlu0 %1315
      %1317 = vrot.lane.b32.xlu0 %v521, 13
      %v1318 = vpop.permute.xlu0 %1317
      %vm1319 = vcmp.lt.s32.totalorder %v549, 13
      %v1320 = vsel %vm1319, %v1316, %v1318
      %v1321 = vsel %vm1319, %v1318, %v1316
      %vm1322 = vmand %vm531, %vm803
      %v1323 = vsel %vm1322, 1, 0
      %v1324 = vlaneseq
      %v1325 = vshrl.u32 %v1324, 7
      %v1326 = vsub.s32 0, %v1325
      %v1327 = vrot.slane %v1323, %v1326
      %v1328 = vlaneseq
      %v1329 = vshrl.u32 %v1328, 7
      %v1330 = vsub.s32 2, %v1329
      %v1331 = vrot.slane %v1323, %v1330
      %v1332 = vlaneseq
      %v1333 = vshrl.u32 %v1332, 7
      %v1334 = vsub.s32 0, %v1333
      %v1335 = vrot.slane %v1327, %v1334
      %v1336 = vlaneseq
      %v1337 = vshrl.u32 %v1336, 7
      %v1338 = vsub.s32 0, %v1337
      %v1339 = vrot.slane %v1331, %v1338
      %vm1340 = vcmp.eq.s32.totalorder %v1335, 1
      %vm1341 = vcmp.eq.s32.totalorder %v1339, 1
      %v1342 = vsel %vm1340, %v1321, 0.0
      %v1343 = vsel %vm1341, %v1320, 0.0
      %1344 = vset.pattern.permute.xlu0 20
      %1345 = vperm.xlu0 %1344, %v319
      %v1346 = vpop.permute.xlu0 %1345
      %v1348 = vmul.f32 %v1342, %v1346
      %v1349 = vmul.f32 %v1343, %v1346
      %v1350 = vadd.f32 %v1313, %v1348
      %v1351 = vadd.f32 %v1314, %v1349
      %1352 = vrot.lane.b32.xlu0 %v519, 3
      %v1353 = vpop.permute.xlu0 %1352
      %1354 = vrot.lane.b32.xlu0 %v521, 3
      %v1355 = vpop.permute.xlu0 %1354
      %vm1356 = vcmp.lt.s32.totalorder %v549, 3
      %v1357 = vsel %vm1356, %v1353, %v1355
      %v1358 = vsel %vm1356, %v1355, %v1353
      %vm1359 = vmand %vm534, %vm556
      %v1360 = vsel %vm1359, 1, 0
      %v1361 = vlaneseq
      %v1362 = vshrl.u32 %v1361, 7
      %v1363 = vsub.s32 0, %v1362
      %v1364 = vrot.slane %v1360, %v1363
      %v1365 = vlaneseq
      %v1366 = vshrl.u32 %v1365, 7
      %v1367 = vsub.s32 2, %v1366
      %v1368 = vrot.slane %v1360, %v1367
      %v1369 = vlaneseq
      %v1370 = vshrl.u32 %v1369, 7
      %v1371 = vsub.s32 0, %v1370
      %v1372 = vrot.slane %v1364, %v1371
      %v1373 = vlaneseq
      %v1374 = vshrl.u32 %v1373, 7
      %v1375 = vsub.s32 0, %v1374
      %v1376 = vrot.slane %v1368, %v1375
      %vm1377 = vcmp.eq.s32.totalorder %v1372, 1
      %vm1378 = vcmp.eq.s32.totalorder %v1376, 1
      %v1379 = vsel %vm1377, %v1358, 0.0
      %v1380 = vsel %vm1378, %v1357, 0.0
      %1381 = vset.pattern.permute.xlu0 21
      %1382 = vperm.xlu0 %1381, %v319
      %v1383 = vpop.permute.xlu0 %1382
      %v1385 = vmul.f32 %v1379, %v1383
      %v1386 = vmul.f32 %v1380, %v1383
      %v1387 = vadd.f32 %v1350, %v1385
      %v1388 = vadd.f32 %v1351, %v1386
      %1389 = vrot.lane.b32.xlu0 %v519, 2
      %v1390 = vpop.permute.xlu0 %1389
      %1391 = vrot.lane.b32.xlu0 %v521, 2
      %v1392 = vpop.permute.xlu0 %1391
      %vm1393 = vcmp.lt.s32.totalorder %v549, 2
      %v1394 = vsel %vm1393, %v1390, %v1392
      %v1395 = vsel %vm1393, %v1392, %v1390
      %vm1396 = vmand %vm534, %vm598
      %v1397 = vsel %vm1396, 1, 0
      %v1398 = vlaneseq
      %v1399 = vshrl.u32 %v1398, 7
      %v1400 = vsub.s32 0, %v1399
      %v1401 = vrot.slane %v1397, %v1400
      %v1402 = vlaneseq
      %v1403 = vshrl.u32 %v1402, 7
      %v1404 = vsub.s32 2, %v1403
      %v1405 = vrot.slane %v1397, %v1404
      %v1406 = vlaneseq
      %v1407 = vshrl.u32 %v1406, 7
      %v1408 = vsub.s32 0, %v1407
      %v1409 = vrot.slane %v1401, %v1408
      %v1410 = vlaneseq
      %v1411 = vshrl.u32 %v1410, 7
      %v1412 = vsub.s32 0, %v1411
      %v1413 = vrot.slane %v1405, %v1412
      %vm1414 = vcmp.eq.s32.totalorder %v1409, 1
      %vm1415 = vcmp.eq.s32.totalorder %v1413, 1
      %v1416 = vsel %vm1414, %v1395, 0.0
      %v1417 = vsel %vm1415, %v1394, 0.0
      %1418 = vset.pattern.permute.xlu0 22
      %1419 = vperm.xlu0 %1418, %v319
      %v1420 = vpop.permute.xlu0 %1419
      %v1422 = vmul.f32 %v1416, %v1420
      %v1423 = vmul.f32 %v1417, %v1420
      %v1424 = vadd.f32 %v1387, %v1422
      %v1425 = vadd.f32 %v1388, %v1423
      %1426 = vrot.lane.b32.xlu0 %v519, 1
      %v1427 = vpop.permute.xlu0 %1426
      %1428 = vrot.lane.b32.xlu0 %v521, 1
      %v1429 = vpop.permute.xlu0 %1428
      %vm1430 = vcmp.lt.s32.totalorder %v549, 1
      %v1431 = vsel %vm1430, %v1427, %v1429
      %v1432 = vsel %vm1430, %v1429, %v1427
      %vm1433 = vmand %vm534, %vm639
      %v1434 = vsel %vm1433, 1, 0
      %v1435 = vlaneseq
      %v1436 = vshrl.u32 %v1435, 7
      %v1437 = vsub.s32 0, %v1436
      %v1438 = vrot.slane %v1434, %v1437
      %v1439 = vlaneseq
      %v1440 = vshrl.u32 %v1439, 7
      %v1441 = vsub.s32 2, %v1440
      %v1442 = vrot.slane %v1434, %v1441
      %v1443 = vlaneseq
      %v1444 = vshrl.u32 %v1443, 7
      %v1445 = vsub.s32 0, %v1444
      %v1446 = vrot.slane %v1438, %v1445
      %v1447 = vlaneseq
      %v1448 = vshrl.u32 %v1447, 7
      %v1449 = vsub.s32 0, %v1448
      %v1450 = vrot.slane %v1442, %v1449
      %vm1451 = vcmp.eq.s32.totalorder %v1446, 1
      %vm1452 = vcmp.eq.s32.totalorder %v1450, 1
      %v1453 = vsel %vm1451, %v1432, 0.0
      %v1454 = vsel %vm1452, %v1431, 0.0
      %1455 = vset.pattern.permute.xlu0 23
      %1456 = vperm.xlu0 %1455, %v319
      %v1457 = vpop.permute.xlu0 %1456
      %v1459 = vmul.f32 %v1453, %v1457
      %v1460 = vmul.f32 %v1454, %v1457
      %v1461 = vadd.f32 %v1424, %v1459
      %v1462 = vadd.f32 %v1425, %v1460
      %vm1463 = vmand %vm534, %vm680
      %v1464 = vsel %vm1463, 1, 0
      %v1465 = vlaneseq
      %v1466 = vshrl.u32 %v1465, 7
      %v1467 = vsub.s32 0, %v1466
      %v1468 = vrot.slane %v1464, %v1467
      %v1469 = vlaneseq
      %v1470 = vshrl.u32 %v1469, 7
      %v1471 = vsub.s32 2, %v1470
      %v1472 = vrot.slane %v1464, %v1471
      %v1473 = vlaneseq
      %v1474 = vshrl.u32 %v1473, 7
      %v1475 = vsub.s32 0, %v1474
      %v1476 = vrot.slane %v1468, %v1475
      %v1477 = vlaneseq
      %v1478 = vshrl.u32 %v1477, 7
      %v1479 = vsub.s32 0, %v1478
      %v1480 = vrot.slane %v1472, %v1479
      %vm1481 = vcmp.eq.s32.totalorder %v1476, 1
      %vm1482 = vcmp.eq.s32.totalorder %v1480, 1
      %v1483 = vsel %vm1481, %v519, 0.0
      %v1484 = vsel %vm1482, %v521, 0.0
      %1485 = vset.pattern.permute.xlu0 24
      %1486 = vperm.xlu0 %1485, %v319
      %v1487 = vpop.permute.xlu0 %1486
      %v1489 = vmul.f32 %v1483, %v1487
      %v1490 = vmul.f32 %v1484, %v1487
      %v1491 = vadd.f32 %v1461, %v1489
      %v1492 = vadd.f32 %v1462, %v1490
      %1493 = vrot.lane.b32.xlu0 %v519, 127
      %v1494 = vpop.permute.xlu0 %1493
      %1495 = vrot.lane.b32.xlu0 %v521, 127
      %v1496 = vpop.permute.xlu0 %1495
      %vm1497 = vcmp.lt.s32.totalorder %v549, 127
      %v1498 = vsel %vm1497, %v1494, %v1496
      %v1499 = vsel %vm1497, %v1496, %v1494
      %vm1500 = vmand %vm534, %vm721
      %v1501 = vsel %vm1500, 1, 0
      %v1502 = vlaneseq
      %v1503 = vshrl.u32 %v1502, 7
      %v1504 = vsub.s32 0, %v1503
      %v1505 = vrot.slane %v1501, %v1504
      %v1506 = vlaneseq
      %v1507 = vshrl.u32 %v1506, 7
      %v1508 = vsub.s32 2, %v1507
      %v1509 = vrot.slane %v1501, %v1508
      %v1510 = vlaneseq
      %v1511 = vshrl.u32 %v1510, 7
      %v1512 = vsub.s32 0, %v1511
      %v1513 = vrot.slane %v1505, %v1512
      %v1514 = vlaneseq
      %v1515 = vshrl.u32 %v1514, 7
      %v1516 = vsub.s32 0, %v1515
      %v1517 = vrot.slane %v1509, %v1516
      %vm1518 = vcmp.eq.s32.totalorder %v1513, 1
      %vm1519 = vcmp.eq.s32.totalorder %v1517, 1
      %v1520 = vsel %vm1518, %v1498, 0.0
      %v1521 = vsel %vm1519, %v1499, 0.0
      %1522 = vset.pattern.permute.xlu0 25
      %1523 = vperm.xlu0 %1522, %v319
      %v1524 = vpop.permute.xlu0 %1523
      %v1526 = vmul.f32 %v1520, %v1524
      %v1527 = vmul.f32 %v1521, %v1524
      %v1528 = vadd.f32 %v1491, %v1526
      %v1529 = vadd.f32 %v1492, %v1527
      %1530 = vrot.lane.b32.xlu0 %v519, 126
      %v1531 = vpop.permute.xlu0 %1530
      %1532 = vrot.lane.b32.xlu0 %v521, 126
      %v1533 = vpop.permute.xlu0 %1532
      %vm1534 = vcmp.lt.s32.totalorder %v549, 126
      %v1535 = vsel %vm1534, %v1531, %v1533
      %v1536 = vsel %vm1534, %v1533, %v1531
      %vm1537 = vmand %vm534, %vm762
      %v1538 = vsel %vm1537, 1, 0
      %v1539 = vlaneseq
      %v1540 = vshrl.u32 %v1539, 7
      %v1541 = vsub.s32 0, %v1540
      %v1542 = vrot.slane %v1538, %v1541
      %v1543 = vlaneseq
      %v1544 = vshrl.u32 %v1543, 7
      %v1545 = vsub.s32 2, %v1544
      %v1546 = vrot.slane %v1538, %v1545
      %v1547 = vlaneseq
      %v1548 = vshrl.u32 %v1547, 7
      %v1549 = vsub.s32 0, %v1548
      %v1550 = vrot.slane %v1542, %v1549
      %v1551 = vlaneseq
      %v1552 = vshrl.u32 %v1551, 7
      %v1553 = vsub.s32 0, %v1552
      %v1554 = vrot.slane %v1546, %v1553
      %vm1555 = vcmp.eq.s32.totalorder %v1550, 1
      %vm1556 = vcmp.eq.s32.totalorder %v1554, 1
      %v1557 = vsel %vm1555, %v1535, 0.0
      %v1558 = vsel %vm1556, %v1536, 0.0
      %1559 = vset.pattern.permute.xlu0 26
      %1560 = vperm.xlu0 %1559, %v319
      %v1561 = vpop.permute.xlu0 %1560
      %v1563 = vmul.f32 %v1557, %v1561
      %v1564 = vmul.f32 %v1558, %v1561
      %v1565 = vadd.f32 %v1528, %v1563
      %v1566 = vadd.f32 %v1529, %v1564
      %1567 = vrot.lane.b32.xlu0 %v519, 125
      %v1568 = vpop.permute.xlu0 %1567
      %1569 = vrot.lane.b32.xlu0 %v521, 125
      %v1570 = vpop.permute.xlu0 %1569
      %vm1571 = vcmp.lt.s32.totalorder %v549, 125
      %v1572 = vsel %vm1571, %v1568, %v1570
      %v1573 = vsel %vm1571, %v1570, %v1568
      %vm1574 = vmand %vm534, %vm803
      %v1575 = vsel %vm1574, 1, 0
      %v1576 = vlaneseq
      %v1577 = vshrl.u32 %v1576, 7
      %v1578 = vsub.s32 0, %v1577
      %v1579 = vrot.slane %v1575, %v1578
      %v1580 = vlaneseq
      %v1581 = vshrl.u32 %v1580, 7
      %v1582 = vsub.s32 2, %v1581
      %v1583 = vrot.slane %v1575, %v1582
      %v1584 = vlaneseq
      %v1585 = vshrl.u32 %v1584, 7
      %v1586 = vsub.s32 0, %v1585
      %v1587 = vrot.slane %v1579, %v1586
      %v1588 = vlaneseq
      %v1589 = vshrl.u32 %v1588, 7
      %v1590 = vsub.s32 0, %v1589
      %v1591 = vrot.slane %v1583, %v1590
      %vm1592 = vcmp.eq.s32.totalorder %v1587, 1
      %vm1593 = vcmp.eq.s32.totalorder %v1591, 1
      %v1594 = vsel %vm1592, %v1572, 0.0
      %v1595 = vsel %vm1593, %v1573, 0.0
      %1596 = vset.pattern.permute.xlu0 27
      %1597 = vperm.xlu0 %1596, %v319
      %v1598 = vpop.permute.xlu0 %1597
      %v1600 = vmul.f32 %v1594, %v1598
      %v1601 = vmul.f32 %v1595, %v1598
      %v1602 = vadd.f32 %v1565, %v1600
      %v1603 = vadd.f32 %v1566, %v1601
      %1604 = vrot.lane.b32.xlu0 %v519, 115
      %v1605 = vpop.permute.xlu0 %1604
      %1606 = vrot.lane.b32.xlu0 %v521, 115
      %v1607 = vpop.permute.xlu0 %1606
      %vm1608 = vcmp.lt.s32.totalorder %v549, 115
      %v1609 = vsel %vm1608, %v1605, %v1607
      %v1610 = vsel %vm1608, %v1607, %v1605
      %vm1611 = vmand %vm537, %vm556
      %v1612 = vsel %vm1611, 1, 0
      %v1613 = vlaneseq
      %v1614 = vshrl.u32 %v1613, 7
      %v1615 = vsub.s32 0, %v1614
      %v1616 = vrot.slane %v1612, %v1615
      %v1617 = vlaneseq
      %v1618 = vshrl.u32 %v1617, 7
      %v1619 = vsub.s32 2, %v1618
      %v1620 = vrot.slane %v1612, %v1619
      %v1621 = vlaneseq
      %v1622 = vshrl.u32 %v1621, 7
      %v1623 = vsub.s32 0, %v1622
      %v1624 = vrot.slane %v1616, %v1623
      %v1625 = vlaneseq
      %v1626 = vshrl.u32 %v1625, 7
      %v1627 = vsub.s32 0, %v1626
      %v1628 = vrot.slane %v1620, %v1627
      %vm1629 = vcmp.eq.s32.totalorder %v1624, 1
      %vm1630 = vcmp.eq.s32.totalorder %v1628, 1
      %v1631 = vsel %vm1629, %v1609, 0.0
      %v1632 = vsel %vm1630, %v1610, 0.0
      %1633 = vset.pattern.permute.xlu0 28
      %1634 = vperm.xlu0 %1633, %v319
      %v1635 = vpop.permute.xlu0 %1634
      %v1637 = vmul.f32 %v1631, %v1635
      %v1638 = vmul.f32 %v1632, %v1635
      %v1639 = vadd.f32 %v1602, %v1637
      %v1640 = vadd.f32 %v1603, %v1638
      %1641 = vrot.lane.b32.xlu0 %v519, 114
      %v1642 = vpop.permute.xlu0 %1641
      %1643 = vrot.lane.b32.xlu0 %v521, 114
      %v1644 = vpop.permute.xlu0 %1643
      %vm1645 = vcmp.lt.s32.totalorder %v549, 114
      %v1646 = vsel %vm1645, %v1642, %v1644
      %v1647 = vsel %vm1645, %v1644, %v1642
      %vm1648 = vmand %vm537, %vm598
      %v1649 = vsel %vm1648, 1, 0
      %v1650 = vlaneseq
      %v1651 = vshrl.u32 %v1650, 7
      %v1652 = vsub.s32 0, %v1651
      %v1653 = vrot.slane %v1649, %v1652
      %v1654 = vlaneseq
      %v1655 = vshrl.u32 %v1654, 7
      %v1656 = vsub.s32 2, %v1655
      %v1657 = vrot.slane %v1649, %v1656
      %v1658 = vlaneseq
      %v1659 = vshrl.u32 %v1658, 7
      %v1660 = vsub.s32 0, %v1659
      %v1661 = vrot.slane %v1653, %v1660
      %v1662 = vlaneseq
      %v1663 = vshrl.u32 %v1662, 7
      %v1664 = vsub.s32 0, %v1663
      %v1665 = vrot.slane %v1657, %v1664
      %vm1666 = vcmp.eq.s32.totalorder %v1661, 1
      %vm1667 = vcmp.eq.s32.totalorder %v1665, 1
      %v1668 = vsel %vm1666, %v1646, 0.0
      %v1669 = vsel %vm1667, %v1647, 0.0
      %1670 = vset.pattern.permute.xlu0 29
      %1671 = vperm.xlu0 %1670, %v319
      %v1672 = vpop.permute.xlu0 %1671
      %v1674 = vmul.f32 %v1668, %v1672
      %v1675 = vmul.f32 %v1669, %v1672
      %v1676 = vadd.f32 %v1639, %v1674
      %v1677 = vadd.f32 %v1640, %v1675
      %1678 = vrot.lane.b32.xlu0 %v519, 113
      %v1679 = vpop.permute.xlu0 %1678
      %1680 = vrot.lane.b32.xlu0 %v521, 113
      %v1681 = vpop.permute.xlu0 %1680
      %vm1682 = vcmp.lt.s32.totalorder %v549, 113
      %v1683 = vsel %vm1682, %v1679, %v1681
      %v1684 = vsel %vm1682, %v1681, %v1679
      %vm1685 = vmand %vm537, %vm639
      %v1686 = vsel %vm1685, 1, 0
      %v1687 = vlaneseq
      %v1688 = vshrl.u32 %v1687, 7
      %v1689 = vsub.s32 0, %v1688
      %v1690 = vrot.slane %v1686, %v1689
      %v1691 = vlaneseq
      %v1692 = vshrl.u32 %v1691, 7
      %v1693 = vsub.s32 2, %v1692
      %v1694 = vrot.slane %v1686, %v1693
      %v1695 = vlaneseq
      %v1696 = vshrl.u32 %v1695, 7
      %v1697 = vsub.s32 0, %v1696
      %v1698 = vrot.slane %v1690, %v1697
      %v1699 = vlaneseq
      %v1700 = vshrl.u32 %v1699, 7
      %v1701 = vsub.s32 0, %v1700
      %v1702 = vrot.slane %v1694, %v1701
      %vm1703 = vcmp.eq.s32.totalorder %v1698, 1
      %vm1704 = vcmp.eq.s32.totalorder %v1702, 1
      %v1705 = vsel %vm1703, %v1683, 0.0
      %v1706 = vsel %vm1704, %v1684, 0.0
      %1707 = vset.pattern.permute.xlu0 30
      %1708 = vperm.xlu0 %1707, %v319
      %v1709 = vpop.permute.xlu0 %1708
      %v1711 = vmul.f32 %v1705, %v1709
      %v1712 = vmul.f32 %v1706, %v1709
      %v1713 = vadd.f32 %v1676, %v1711
      %v1714 = vadd.f32 %v1677, %v1712
      %1715 = vrot.lane.b32.xlu0 %v519, 112
      %v1716 = vpop.permute.xlu0 %1715
      %1717 = vrot.lane.b32.xlu0 %v521, 112
      %v1718 = vpop.permute.xlu0 %1717
      %vm1719 = vcmp.lt.s32.totalorder %v549, 112
      %v1720 = vsel %vm1719, %v1716, %v1718
      %v1721 = vsel %vm1719, %v1718, %v1716
      %vm1722 = vmand %vm537, %vm680
      %v1723 = vsel %vm1722, 1, 0
      %v1724 = vlaneseq
      %v1725 = vshrl.u32 %v1724, 7
      %v1726 = vsub.s32 0, %v1725
      %v1727 = vrot.slane %v1723, %v1726
      %v1728 = vlaneseq
      %v1729 = vshrl.u32 %v1728, 7
      %v1730 = vsub.s32 2, %v1729
      %v1731 = vrot.slane %v1723, %v1730
      %v1732 = vlaneseq
      %v1733 = vshrl.u32 %v1732, 7
      %v1734 = vsub.s32 0, %v1733
      %v1735 = vrot.slane %v1727, %v1734
      %v1736 = vlaneseq
      %v1737 = vshrl.u32 %v1736, 7
      %v1738 = vsub.s32 0, %v1737
      %v1739 = vrot.slane %v1731, %v1738
      %vm1740 = vcmp.eq.s32.totalorder %v1735, 1
      %vm1741 = vcmp.eq.s32.totalorder %v1739, 1
      %v1742 = vsel %vm1740, %v1720, 0.0
      %v1743 = vsel %vm1741, %v1721, 0.0
      %1744 = vset.pattern.permute.xlu0 31
      %1745 = vperm.xlu0 %1744, %v319
      %v1746 = vpop.permute.xlu0 %1745
      %v1748 = vmul.f32 %v1742, %v1746
      %v1749 = vmul.f32 %v1743, %v1746
      %v1750 = vadd.f32 %v1713, %v1748
      %v1751 = vadd.f32 %v1714, %v1749
      %1752 = vrot.lane.b32.xlu0 %v519, 111
      %v1753 = vpop.permute.xlu0 %1752
      %1754 = vrot.lane.b32.xlu0 %v521, 111
      %v1755 = vpop.permute.xlu0 %1754
      %vm1756 = vcmp.lt.s32.totalorder %v549, 111
      %v1757 = vsel %vm1756, %v1753, %v1755
      %v1758 = vsel %vm1756, %v1755, %v1753
      %vm1759 = vmand %vm537, %vm721
      %v1760 = vsel %vm1759, 1, 0
      %v1761 = vlaneseq
      %v1762 = vshrl.u32 %v1761, 7
      %v1763 = vsub.s32 0, %v1762
      %v1764 = vrot.slane %v1760, %v1763
      %v1765 = vlaneseq
      %v1766 = vshrl.u32 %v1765, 7
      %v1767 = vsub.s32 2, %v1766
      %v1768 = vrot.slane %v1760, %v1767
      %v1769 = vlaneseq
      %v1770 = vshrl.u32 %v1769, 7
      %v1771 = vsub.s32 0, %v1770
      %v1772 = vrot.slane %v1764, %v1771
      %v1773 = vlaneseq
      %v1774 = vshrl.u32 %v1773, 7
      %v1775 = vsub.s32 0, %v1774
      %v1776 = vrot.slane %v1768, %v1775
      %vm1777 = vcmp.eq.s32.totalorder %v1772, 1
      %vm1778 = vcmp.eq.s32.totalorder %v1776, 1
      %v1779 = vsel %vm1777, %v1757, 0.0
      %v1780 = vsel %vm1778, %v1758, 0.0
      %1781 = vset.pattern.permute.xlu0 32
      %1782 = vperm.xlu0 %1781, %v319
      %v1783 = vpop.permute.xlu0 %1782
      %v1785 = vmul.f32 %v1779, %v1783
      %v1786 = vmul.f32 %v1780, %v1783
      %v1787 = vadd.f32 %v1750, %v1785
      %v1788 = vadd.f32 %v1751, %v1786
      %1789 = vrot.lane.b32.xlu0 %v519, 110
      %v1790 = vpop.permute.xlu0 %1789
      %1791 = vrot.lane.b32.xlu0 %v521, 110
      %v1792 = vpop.permute.xlu0 %1791
      %vm1793 = vcmp.lt.s32.totalorder %v549, 110
      %v1794 = vsel %vm1793, %v1790, %v1792
      %v1795 = vsel %vm1793, %v1792, %v1790
      %vm1796 = vmand %vm537, %vm762
      %v1797 = vsel %vm1796, 1, 0
      %v1798 = vlaneseq
      %v1799 = vshrl.u32 %v1798, 7
      %v1800 = vsub.s32 0, %v1799
      %v1801 = vrot.slane %v1797, %v1800
      %v1802 = vlaneseq
      %v1803 = vshrl.u32 %v1802, 7
      %v1804 = vsub.s32 2, %v1803
      %v1805 = vrot.slane %v1797, %v1804
      %v1806 = vlaneseq
      %v1807 = vshrl.u32 %v1806, 7
      %v1808 = vsub.s32 0, %v1807
      %v1809 = vrot.slane %v1801, %v1808
      %v1810 = vlaneseq
      %v1811 = vshrl.u32 %v1810, 7
      %v1812 = vsub.s32 0, %v1811
      %v1813 = vrot.slane %v1805, %v1812
      %vm1814 = vcmp.eq.s32.totalorder %v1809, 1
      %vm1815 = vcmp.eq.s32.totalorder %v1813, 1
      %v1816 = vsel %vm1814, %v1794, 0.0
      %v1817 = vsel %vm1815, %v1795, 0.0
      %1818 = vset.pattern.permute.xlu0 33
      %1819 = vperm.xlu0 %1818, %v319
      %v1820 = vpop.permute.xlu0 %1819
      %v1822 = vmul.f32 %v1816, %v1820
      %v1823 = vmul.f32 %v1817, %v1820
      %v1824 = vadd.f32 %v1787, %v1822
      %v1825 = vadd.f32 %v1788, %v1823
      %1826 = vrot.lane.b32.xlu0 %v519, 109
      %v1827 = vpop.permute.xlu0 %1826
      %1828 = vrot.lane.b32.xlu0 %v521, 109
      %v1829 = vpop.permute.xlu0 %1828
      %vm1830 = vcmp.lt.s32.totalorder %v549, 109
      %v1831 = vsel %vm1830, %v1827, %v1829
      %v1832 = vsel %vm1830, %v1829, %v1827
      %vm1833 = vmand %vm537, %vm803
      %v1834 = vsel %vm1833, 1, 0
      %v1835 = vlaneseq
      %v1836 = vshrl.u32 %v1835, 7
      %v1837 = vsub.s32 0, %v1836
      %v1838 = vrot.slane %v1834, %v1837
      %v1839 = vlaneseq
      %v1840 = vshrl.u32 %v1839, 7
      %v1841 = vsub.s32 2, %v1840
      %v1842 = vrot.slane %v1834, %v1841
      %v1843 = vlaneseq
      %v1844 = vshrl.u32 %v1843, 7
      %v1845 = vsub.s32 0, %v1844
      %v1846 = vrot.slane %v1838, %v1845
      %v1847 = vlaneseq
      %v1848 = vshrl.u32 %v1847, 7
      %v1849 = vsub.s32 0, %v1848
      %v1850 = vrot.slane %v1842, %v1849
      %vm1851 = vcmp.eq.s32.totalorder %v1846, 1
      %vm1852 = vcmp.eq.s32.totalorder %v1850, 1
      %v1853 = vsel %vm1851, %v1831, 0.0
      %v1854 = vsel %vm1852, %v1832, 0.0
      %1855 = vset.pattern.permute.xlu0 34
      %1856 = vperm.xlu0 %1855, %v319
      %v1857 = vpop.permute.xlu0 %1856
      %v1859 = vmul.f32 %v1853, %v1857
      %v1860 = vmul.f32 %v1854, %v1857
      %v1861 = vadd.f32 %v1824, %v1859
      %v1862 = vadd.f32 %v1825, %v1860
      %1863 = vrot.lane.b32.xlu0 %v519, 99
      %v1864 = vpop.permute.xlu0 %1863
      %1865 = vrot.lane.b32.xlu0 %v521, 99
      %v1866 = vpop.permute.xlu0 %1865
      %vm1867 = vcmp.lt.s32.totalorder %v549, 99
      %v1868 = vsel %vm1867, %v1864, %v1866
      %v1869 = vsel %vm1867, %v1866, %v1864
      %vm1870 = vmand %vm540, %vm556
      %v1871 = vsel %vm1870, 1, 0
      %v1872 = vlaneseq
      %v1873 = vshrl.u32 %v1872, 7
      %v1874 = vsub.s32 0, %v1873
      %v1875 = vrot.slane %v1871, %v1874
      %v1876 = vlaneseq
      %v1877 = vshrl.u32 %v1876, 7
      %v1878 = vsub.s32 2, %v1877
      %v1879 = vrot.slane %v1871, %v1878
      %v1880 = vlaneseq
      %v1881 = vshrl.u32 %v1880, 7
      %v1882 = vsub.s32 0, %v1881
      %v1883 = vrot.slane %v1875, %v1882
      %v1884 = vlaneseq
      %v1885 = vshrl.u32 %v1884, 7
      %v1886 = vsub.s32 0, %v1885
      %v1887 = vrot.slane %v1879, %v1886
      %vm1888 = vcmp.eq.s32.totalorder %v1883, 1
      %vm1889 = vcmp.eq.s32.totalorder %v1887, 1
      %v1890 = vsel %vm1888, %v1868, 0.0
      %v1891 = vsel %vm1889, %v1869, 0.0
      %1892 = vset.pattern.permute.xlu0 35
      %1893 = vperm.xlu0 %1892, %v319
      %v1894 = vpop.permute.xlu0 %1893
      %v1896 = vmul.f32 %v1890, %v1894
      %v1897 = vmul.f32 %v1891, %v1894
      %v1898 = vadd.f32 %v1861, %v1896
      %v1899 = vadd.f32 %v1862, %v1897
      %1900 = vrot.lane.b32.xlu0 %v519, 98
      %v1901 = vpop.permute.xlu0 %1900
      %1902 = vrot.lane.b32.xlu0 %v521, 98
      %v1903 = vpop.permute.xlu0 %1902
      %vm1904 = vcmp.lt.s32.totalorder %v549, 98
      %v1905 = vsel %vm1904, %v1901, %v1903
      %v1906 = vsel %vm1904, %v1903, %v1901
      %vm1907 = vmand %vm540, %vm598
      %v1908 = vsel %vm1907, 1, 0
      %v1909 = vlaneseq
      %v1910 = vshrl.u32 %v1909, 7
      %v1911 = vsub.s32 0, %v1910
      %v1912 = vrot.slane %v1908, %v1911
      %v1913 = vlaneseq
      %v1914 = vshrl.u32 %v1913, 7
      %v1915 = vsub.s32 2, %v1914
      %v1916 = vrot.slane %v1908, %v1915
      %v1917 = vlaneseq
      %v1918 = vshrl.u32 %v1917, 7
      %v1919 = vsub.s32 0, %v1918
      %v1920 = vrot.slane %v1912, %v1919
      %v1921 = vlaneseq
      %v1922 = vshrl.u32 %v1921, 7
      %v1923 = vsub.s32 0, %v1922
      %v1924 = vrot.slane %v1916, %v1923
      %vm1925 = vcmp.eq.s32.totalorder %v1920, 1
      %vm1926 = vcmp.eq.s32.totalorder %v1924, 1
      %v1927 = vsel %vm1925, %v1905, 0.0
      %v1928 = vsel %vm1926, %v1906, 0.0
      %1929 = vset.pattern.permute.xlu0 36
      %1930 = vperm.xlu0 %1929, %v319
      %v1931 = vpop.permute.xlu0 %1930
      %v1933 = vmul.f32 %v1927, %v1931
      %v1934 = vmul.f32 %v1928, %v1931
      %v1935 = vadd.f32 %v1898, %v1933
      %v1936 = vadd.f32 %v1899, %v1934
      %1937 = vrot.lane.b32.xlu0 %v519, 97
      %v1938 = vpop.permute.xlu0 %1937
      %1939 = vrot.lane.b32.xlu0 %v521, 97
      %v1940 = vpop.permute.xlu0 %1939
      %vm1941 = vcmp.lt.s32.totalorder %v549, 97
      %v1942 = vsel %vm1941, %v1938, %v1940
      %v1943 = vsel %vm1941, %v1940, %v1938
      %vm1944 = vmand %vm540, %vm639
      %v1945 = vsel %vm1944, 1, 0
      %v1946 = vlaneseq
      %v1947 = vshrl.u32 %v1946, 7
      %v1948 = vsub.s32 0, %v1947
      %v1949 = vrot.slane %v1945, %v1948
      %v1950 = vlaneseq
      %v1951 = vshrl.u32 %v1950, 7
      %v1952 = vsub.s32 2, %v1951
      %v1953 = vrot.slane %v1945, %v1952
      %v1954 = vlaneseq
      %v1955 = vshrl.u32 %v1954, 7
      %v1956 = vsub.s32 0, %v1955
      %v1957 = vrot.slane %v1949, %v1956
      %v1958 = vlaneseq
      %v1959 = vshrl.u32 %v1958, 7
      %v1960 = vsub.s32 0, %v1959
      %v1961 = vrot.slane %v1953, %v1960
      %vm1962 = vcmp.eq.s32.totalorder %v1957, 1
      %vm1963 = vcmp.eq.s32.totalorder %v1961, 1
      %v1964 = vsel %vm1962, %v1942, 0.0
      %v1965 = vsel %vm1963, %v1943, 0.0
      %1966 = vset.pattern.permute.xlu0 37
      %1967 = vperm.xlu0 %1966, %v319
      %v1968 = vpop.permute.xlu0 %1967
      %v1970 = vmul.f32 %v1964, %v1968
      %v1971 = vmul.f32 %v1965, %v1968
      %v1972 = vadd.f32 %v1935, %v1970
      %v1973 = vadd.f32 %v1936, %v1971
      %1974 = vrot.lane.b32.xlu0 %v519, 96
      %v1975 = vpop.permute.xlu0 %1974
      %1976 = vrot.lane.b32.xlu0 %v521, 96
      %v1977 = vpop.permute.xlu0 %1976
      %vm1978 = vcmp.lt.s32.totalorder %v549, 96
      %v1979 = vsel %vm1978, %v1975, %v1977
      %v1980 = vsel %vm1978, %v1977, %v1975
      %vm1981 = vmand %vm540, %vm680
      %v1982 = vsel %vm1981, 1, 0
      %v1983 = vlaneseq
      %v1984 = vshrl.u32 %v1983, 7
      %v1985 = vsub.s32 0, %v1984
      %v1986 = vrot.slane %v1982, %v1985
      %v1987 = vlaneseq
      %v1988 = vshrl.u32 %v1987, 7
      %v1989 = vsub.s32 2, %v1988
      %v1990 = vrot.slane %v1982, %v1989
      %v1991 = vlaneseq
      %v1992 = vshrl.u32 %v1991, 7
      %v1993 = vsub.s32 0, %v1992
      %v1994 = vrot.slane %v1986, %v1993
      %v1995 = vlaneseq
      %v1996 = vshrl.u32 %v1995, 7
      %v1997 = vsub.s32 0, %v1996
      %v1998 = vrot.slane %v1990, %v1997
      %vm1999 = vcmp.eq.s32.totalorder %v1994, 1
      %vm2000 = vcmp.eq.s32.totalorder %v1998, 1
      %v2001 = vsel %vm1999, %v1979, 0.0
      %v2002 = vsel %vm2000, %v1980, 0.0
      %2003 = vset.pattern.permute.xlu0 38
      %2004 = vperm.xlu0 %2003, %v319
      %v2005 = vpop.permute.xlu0 %2004
      %v2007 = vmul.f32 %v2001, %v2005
      %v2008 = vmul.f32 %v2002, %v2005
      %v2009 = vadd.f32 %v1972, %v2007
      %v2010 = vadd.f32 %v1973, %v2008
      %2011 = vrot.lane.b32.xlu0 %v519, 95
      %v2012 = vpop.permute.xlu0 %2011
      %2013 = vrot.lane.b32.xlu0 %v521, 95
      %v2014 = vpop.permute.xlu0 %2013
      %vm2015 = vcmp.lt.s32.totalorder %v549, 95
      %v2016 = vsel %vm2015, %v2012, %v2014
      %v2017 = vsel %vm2015, %v2014, %v2012
      %vm2018 = vmand %vm540, %vm721
      %v2019 = vsel %vm2018, 1, 0
      %v2020 = vlaneseq
      %v2021 = vshrl.u32 %v2020, 7
      %v2022 = vsub.s32 0, %v2021
      %v2023 = vrot.slane %v2019, %v2022
      %v2024 = vlaneseq
      %v2025 = vshrl.u32 %v2024, 7
      %v2026 = vsub.s32 2, %v2025
      %v2027 = vrot.slane %v2019, %v2026
      %v2028 = vlaneseq
      %v2029 = vshrl.u32 %v2028, 7
      %v2030 = vsub.s32 0, %v2029
      %v2031 = vrot.slane %v2023, %v2030
      %v2032 = vlaneseq
      %v2033 = vshrl.u32 %v2032, 7
      %v2034 = vsub.s32 0, %v2033
      %v2035 = vrot.slane %v2027, %v2034
      %vm2036 = vcmp.eq.s32.totalorder %v2031, 1
      %vm2037 = vcmp.eq.s32.totalorder %v2035, 1
      %v2038 = vsel %vm2036, %v2016, 0.0
      %v2039 = vsel %vm2037, %v2017, 0.0
      %2040 = vset.pattern.permute.xlu0 39
      %2041 = vperm.xlu0 %2040, %v319
      %v2042 = vpop.permute.xlu0 %2041
      %v2044 = vmul.f32 %v2038, %v2042
      %v2045 = vmul.f32 %v2039, %v2042
      %v2046 = vadd.f32 %v2009, %v2044
      %v2047 = vadd.f32 %v2010, %v2045
      %2048 = vrot.lane.b32.xlu0 %v519, 94
      %v2049 = vpop.permute.xlu0 %2048
      %2050 = vrot.lane.b32.xlu0 %v521, 94
      %v2051 = vpop.permute.xlu0 %2050
      %vm2052 = vcmp.lt.s32.totalorder %v549, 94
      %v2053 = vsel %vm2052, %v2049, %v2051
      %v2054 = vsel %vm2052, %v2051, %v2049
      %vm2055 = vmand %vm540, %vm762
      %v2056 = vsel %vm2055, 1, 0
      %v2057 = vlaneseq
      %v2058 = vshrl.u32 %v2057, 7
      %v2059 = vsub.s32 0, %v2058
      %v2060 = vrot.slane %v2056, %v2059
      %v2061 = vlaneseq
      %v2062 = vshrl.u32 %v2061, 7
      %v2063 = vsub.s32 2, %v2062
      %v2064 = vrot.slane %v2056, %v2063
      %v2065 = vlaneseq
      %v2066 = vshrl.u32 %v2065, 7
      %v2067 = vsub.s32 0, %v2066
      %v2068 = vrot.slane %v2060, %v2067
      %v2069 = vlaneseq
      %v2070 = vshrl.u32 %v2069, 7
      %v2071 = vsub.s32 0, %v2070
      %v2072 = vrot.slane %v2064, %v2071
      %vm2073 = vcmp.eq.s32.totalorder %v2068, 1
      %vm2074 = vcmp.eq.s32.totalorder %v2072, 1
      %v2075 = vsel %vm2073, %v2053, 0.0
      %v2076 = vsel %vm2074, %v2054, 0.0
      %2077 = vset.pattern.permute.xlu0 40
      %2078 = vperm.xlu0 %2077, %v319
      %v2079 = vpop.permute.xlu0 %2078
      %v2081 = vmul.f32 %v2075, %v2079
      %v2082 = vmul.f32 %v2076, %v2079
      %v2083 = vadd.f32 %v2046, %v2081
      %v2084 = vadd.f32 %v2047, %v2082
      %2085 = vrot.lane.b32.xlu0 %v519, 93
      %v2086 = vpop.permute.xlu0 %2085
      %2087 = vrot.lane.b32.xlu0 %v521, 93
      %v2088 = vpop.permute.xlu0 %2087
      %vm2089 = vcmp.lt.s32.totalorder %v549, 93
      %v2090 = vsel %vm2089, %v2086, %v2088
      %v2091 = vsel %vm2089, %v2088, %v2086
      %vm2092 = vmand %vm540, %vm803
      %v2093 = vsel %vm2092, 1, 0
      %v2094 = vlaneseq
      %v2095 = vshrl.u32 %v2094, 7
      %v2096 = vsub.s32 0, %v2095
      %v2097 = vrot.slane %v2093, %v2096
      %v2098 = vlaneseq
      %v2099 = vshrl.u32 %v2098, 7
      %v2100 = vsub.s32 2, %v2099
      %v2101 = vrot.slane %v2093, %v2100
      %v2102 = vlaneseq
      %v2103 = vshrl.u32 %v2102, 7
      %v2104 = vsub.s32 0, %v2103
      %v2105 = vrot.slane %v2097, %v2104
      %v2106 = vlaneseq
      %v2107 = vshrl.u32 %v2106, 7
      %v2108 = vsub.s32 0, %v2107
      %v2109 = vrot.slane %v2101, %v2108
      %vm2110 = vcmp.eq.s32.totalorder %v2105, 1
      %vm2111 = vcmp.eq.s32.totalorder %v2109, 1
      %v2112 = vsel %vm2110, %v2090, 0.0
      %v2113 = vsel %vm2111, %v2091, 0.0
      %2114 = vset.pattern.permute.xlu0 41
      %2115 = vperm.xlu0 %2114, %v319
      %v2116 = vpop.permute.xlu0 %2115
      %v2118 = vmul.f32 %v2112, %v2116
      %v2119 = vmul.f32 %v2113, %v2116
      %v2120 = vadd.f32 %v2083, %v2118
      %v2121 = vadd.f32 %v2084, %v2119
      %2122 = vrot.lane.b32.xlu0 %v519, 83
      %v2123 = vpop.permute.xlu0 %2122
      %2124 = vrot.lane.b32.xlu0 %v521, 83
      %v2125 = vpop.permute.xlu0 %2124
      %vm2126 = vcmp.lt.s32.totalorder %v549, 83
      %v2127 = vsel %vm2126, %v2123, %v2125
      %v2128 = vsel %vm2126, %v2125, %v2123
      %vm2129 = vmand %vm543, %vm556
      %v2130 = vsel %vm2129, 1, 0
      %v2131 = vlaneseq
      %v2132 = vshrl.u32 %v2131, 7
      %v2133 = vsub.s32 0, %v2132
      %v2134 = vrot.slane %v2130, %v2133
      %v2135 = vlaneseq
      %v2136 = vshrl.u32 %v2135, 7
      %v2137 = vsub.s32 2, %v2136
      %v2138 = vrot.slane %v2130, %v2137
      %v2139 = vlaneseq
      %v2140 = vshrl.u32 %v2139, 7
      %v2141 = vsub.s32 0, %v2140
      %v2142 = vrot.slane %v2134, %v2141
      %v2143 = vlaneseq
      %v2144 = vshrl.u32 %v2143, 7
      %v2145 = vsub.s32 0, %v2144
      %v2146 = vrot.slane %v2138, %v2145
      %vm2147 = vcmp.eq.s32.totalorder %v2142, 1
      %vm2148 = vcmp.eq.s32.totalorder %v2146, 1
      %v2149 = vsel %vm2147, %v2127, 0.0
      %v2150 = vsel %vm2148, %v2128, 0.0
      %2151 = vset.pattern.permute.xlu0 42
      %2152 = vperm.xlu0 %2151, %v319
      %v2153 = vpop.permute.xlu0 %2152
      %v2155 = vmul.f32 %v2149, %v2153
      %v2156 = vmul.f32 %v2150, %v2153
      %v2157 = vadd.f32 %v2120, %v2155
      %v2158 = vadd.f32 %v2121, %v2156
      %2159 = vrot.lane.b32.xlu0 %v519, 82
      %v2160 = vpop.permute.xlu0 %2159
      %2161 = vrot.lane.b32.xlu0 %v521, 82
      %v2162 = vpop.permute.xlu0 %2161
      %vm2163 = vcmp.lt.s32.totalorder %v549, 82
      %v2164 = vsel %vm2163, %v2160, %v2162
      %v2165 = vsel %vm2163, %v2162, %v2160
      %vm2166 = vmand %vm543, %vm598
      %v2167 = vsel %vm2166, 1, 0
      %v2168 = vlaneseq
      %v2169 = vshrl.u32 %v2168, 7
      %v2170 = vsub.s32 0, %v2169
      %v2171 = vrot.slane %v2167, %v2170
      %v2172 = vlaneseq
      %v2173 = vshrl.u32 %v2172, 7
      %v2174 = vsub.s32 2, %v2173
      %v2175 = vrot.slane %v2167, %v2174
      %v2176 = vlaneseq
      %v2177 = vshrl.u32 %v2176, 7
      %v2178 = vsub.s32 0, %v2177
      %v2179 = vrot.slane %v2171, %v2178
      %v2180 = vlaneseq
      %v2181 = vshrl.u32 %v2180, 7
      %v2182 = vsub.s32 0, %v2181
      %v2183 = vrot.slane %v2175, %v2182
      %vm2184 = vcmp.eq.s32.totalorder %v2179, 1
      %vm2185 = vcmp.eq.s32.totalorder %v2183, 1
      %v2186 = vsel %vm2184, %v2164, 0.0
      %v2187 = vsel %vm2185, %v2165, 0.0
      %2188 = vset.pattern.permute.xlu0 43
      %2189 = vperm.xlu0 %2188, %v319
      %v2190 = vpop.permute.xlu0 %2189
      %v2192 = vmul.f32 %v2186, %v2190
      %v2193 = vmul.f32 %v2187, %v2190
      %v2194 = vadd.f32 %v2157, %v2192
      %v2195 = vadd.f32 %v2158, %v2193
      %2196 = vrot.lane.b32.xlu0 %v519, 81
      %v2197 = vpop.permute.xlu0 %2196
      %2198 = vrot.lane.b32.xlu0 %v521, 81
      %v2199 = vpop.permute.xlu0 %2198
      %vm2200 = vcmp.lt.s32.totalorder %v549, 81
      %v2201 = vsel %vm2200, %v2197, %v2199
      %v2202 = vsel %vm2200, %v2199, %v2197
      %vm2203 = vmand %vm543, %vm639
      %v2204 = vsel %vm2203, 1, 0
      %v2205 = vlaneseq
      %v2206 = vshrl.u32 %v2205, 7
      %v2207 = vsub.s32 0, %v2206
      %v2208 = vrot.slane %v2204, %v2207
      %v2209 = vlaneseq
      %v2210 = vshrl.u32 %v2209, 7
      %v2211 = vsub.s32 2, %v2210
      %v2212 = vrot.slane %v2204, %v2211
      %v2213 = vlaneseq
      %v2214 = vshrl.u32 %v2213, 7
      %v2215 = vsub.s32 0, %v2214
      %v2216 = vrot.slane %v2208, %v2215
      %v2217 = vlaneseq
      %v2218 = vshrl.u32 %v2217, 7
      %v2219 = vsub.s32 0, %v2218
      %v2220 = vrot.slane %v2212, %v2219
      %vm2221 = vcmp.eq.s32.totalorder %v2216, 1
      %vm2222 = vcmp.eq.s32.totalorder %v2220, 1
      %v2223 = vsel %vm2221, %v2201, 0.0
      %v2224 = vsel %vm2222, %v2202, 0.0
      %2225 = vset.pattern.permute.xlu0 44
      %2226 = vperm.xlu0 %2225, %v319
      %v2227 = vpop.permute.xlu0 %2226
      %v2229 = vmul.f32 %v2223, %v2227
      %v2230 = vmul.f32 %v2224, %v2227
      %v2231 = vadd.f32 %v2194, %v2229
      %v2232 = vadd.f32 %v2195, %v2230
      %2233 = vrot.lane.b32.xlu0 %v519, 80
      %v2234 = vpop.permute.xlu0 %2233
      %2235 = vrot.lane.b32.xlu0 %v521, 80
      %v2236 = vpop.permute.xlu0 %2235
      %vm2237 = vcmp.lt.s32.totalorder %v549, 80
      %v2238 = vsel %vm2237, %v2234, %v2236
      %v2239 = vsel %vm2237, %v2236, %v2234
      %vm2240 = vmand %vm543, %vm680
      %v2241 = vsel %vm2240, 1, 0
      %v2242 = vlaneseq
      %v2243 = vshrl.u32 %v2242, 7
      %v2244 = vsub.s32 0, %v2243
      %v2245 = vrot.slane %v2241, %v2244
      %v2246 = vlaneseq
      %v2247 = vshrl.u32 %v2246, 7
      %v2248 = vsub.s32 2, %v2247
      %v2249 = vrot.slane %v2241, %v2248
      %v2250 = vlaneseq
      %v2251 = vshrl.u32 %v2250, 7
      %v2252 = vsub.s32 0, %v2251
      %v2253 = vrot.slane %v2245, %v2252
      %v2254 = vlaneseq
      %v2255 = vshrl.u32 %v2254, 7
      %v2256 = vsub.s32 0, %v2255
      %v2257 = vrot.slane %v2249, %v2256
      %vm2258 = vcmp.eq.s32.totalorder %v2253, 1
      %vm2259 = vcmp.eq.s32.totalorder %v2257, 1
      %v2260 = vsel %vm2258, %v2238, 0.0
      %v2261 = vsel %vm2259, %v2239, 0.0
      %2262 = vset.pattern.permute.xlu0 45
      %2263 = vperm.xlu0 %2262, %v319
      %v2264 = vpop.permute.xlu0 %2263
      %v2266 = vmul.f32 %v2260, %v2264
      %v2267 = vmul.f32 %v2261, %v2264
      %v2268 = vadd.f32 %v2231, %v2266
      %v2269 = vadd.f32 %v2232, %v2267
      %2270 = vrot.lane.b32.xlu0 %v519, 79
      %v2271 = vpop.permute.xlu0 %2270
      %2272 = vrot.lane.b32.xlu0 %v521, 79
      %v2273 = vpop.permute.xlu0 %2272
      %vm2274 = vcmp.lt.s32.totalorder %v549, 79
      %v2275 = vsel %vm2274, %v2271, %v2273
      %v2276 = vsel %vm2274, %v2273, %v2271
      %vm2277 = vmand %vm543, %vm721
      %v2278 = vsel %vm2277, 1, 0
      %v2279 = vlaneseq
      %v2280 = vshrl.u32 %v2279, 7
      %v2281 = vsub.s32 0, %v2280
      %v2282 = vrot.slane %v2278, %v2281
      %v2283 = vlaneseq
      %v2284 = vshrl.u32 %v2283, 7
      %v2285 = vsub.s32 2, %v2284
      %v2286 = vrot.slane %v2278, %v2285
      %v2287 = vlaneseq
      %v2288 = vshrl.u32 %v2287, 7
      %v2289 = vsub.s32 0, %v2288
      %v2290 = vrot.slane %v2282, %v2289
      %v2291 = vlaneseq
      %v2292 = vshrl.u32 %v2291, 7
      %v2293 = vsub.s32 0, %v2292
      %v2294 = vrot.slane %v2286, %v2293
      %vm2295 = vcmp.eq.s32.totalorder %v2290, 1
      %vm2296 = vcmp.eq.s32.totalorder %v2294, 1
      %v2297 = vsel %vm2295, %v2275, 0.0
      %v2298 = vsel %vm2296, %v2276, 0.0
      %2299 = vset.pattern.permute.xlu0 46
      %2300 = vperm.xlu0 %2299, %v319
      %v2301 = vpop.permute.xlu0 %2300
      %v2303 = vmul.f32 %v2297, %v2301
      %v2304 = vmul.f32 %v2298, %v2301
      %v2305 = vadd.f32 %v2268, %v2303
      %v2306 = vadd.f32 %v2269, %v2304
      %2307 = vrot.lane.b32.xlu0 %v519, 78
      %v2308 = vpop.permute.xlu0 %2307
      %2309 = vrot.lane.b32.xlu0 %v521, 78
      %v2310 = vpop.permute.xlu0 %2309
      %vm2311 = vcmp.lt.s32.totalorder %v549, 78
      %v2312 = vsel %vm2311, %v2308, %v2310
      %v2313 = vsel %vm2311, %v2310, %v2308
      %vm2314 = vmand %vm543, %vm762
      %v2315 = vsel %vm2314, 1, 0
      %v2316 = vlaneseq
      %v2317 = vshrl.u32 %v2316, 7
      %v2318 = vsub.s32 0, %v2317
      %v2319 = vrot.slane %v2315, %v2318
      %v2320 = vlaneseq
      %v2321 = vshrl.u32 %v2320, 7
      %v2322 = vsub.s32 2, %v2321
      %v2323 = vrot.slane %v2315, %v2322
      %v2324 = vlaneseq
      %v2325 = vshrl.u32 %v2324, 7
      %v2326 = vsub.s32 0, %v2325
      %v2327 = vrot.slane %v2319, %v2326
      %v2328 = vlaneseq
      %v2329 = vshrl.u32 %v2328, 7
      %v2330 = vsub.s32 0, %v2329
      %v2331 = vrot.slane %v2323, %v2330
      %vm2332 = vcmp.eq.s32.totalorder %v2327, 1
      %vm2333 = vcmp.eq.s32.totalorder %v2331, 1
      %v2334 = vsel %vm2332, %v2312, 0.0
      %v2335 = vsel %vm2333, %v2313, 0.0
      %2336 = vset.pattern.permute.xlu0 47
      %2337 = vperm.xlu0 %2336, %v319
      %v2338 = vpop.permute.xlu0 %2337
      %v2340 = vmul.f32 %v2334, %v2338
      %v2341 = vmul.f32 %v2335, %v2338
      %v2342 = vadd.f32 %v2305, %v2340
      %v2343 = vadd.f32 %v2306, %v2341
      %2344 = vrot.lane.b32.xlu0 %v519, 77
      %v2345 = vpop.permute.xlu0 %2344
      %2346 = vrot.lane.b32.xlu0 %v521, 77
      %v2347 = vpop.permute.xlu0 %2346
      %vm2348 = vcmp.lt.s32.totalorder %v549, 77
      %v2349 = vsel %vm2348, %v2345, %v2347
      %v2350 = vsel %vm2348, %v2347, %v2345
      %vm2351 = vmand %vm543, %vm803
      %v2352 = vsel %vm2351, 1, 0
      %v2353 = vlaneseq
      %v2354 = vshrl.u32 %v2353, 7
      %v2355 = vsub.s32 0, %v2354
      %v2356 = vrot.slane %v2352, %v2355
      %v2357 = vlaneseq
      %v2358 = vshrl.u32 %v2357, 7
      %v2359 = vsub.s32 2, %v2358
      %v2360 = vrot.slane %v2352, %v2359
      %v2361 = vlaneseq
      %v2362 = vshrl.u32 %v2361, 7
      %v2363 = vsub.s32 0, %v2362
      %v2364 = vrot.slane %v2356, %v2363
      %v2365 = vlaneseq
      %v2366 = vshrl.u32 %v2365, 7
      %v2367 = vsub.s32 0, %v2366
      %v2368 = vrot.slane %v2360, %v2367
      %vm2369 = vcmp.eq.s32.totalorder %v2364, 1
      %vm2370 = vcmp.eq.s32.totalorder %v2368, 1
      %v2371 = vsel %vm2369, %v2349, 0.0
      %v2372 = vsel %vm2370, %v2350, 0.0
      %2373 = vset.pattern.permute.xlu0 48
      %2374 = vperm.xlu0 %2373, %v319
      %v2375 = vpop.permute.xlu0 %2374
      %v2377 = vmul.f32 %v2371, %v2375
      %v2378 = vmul.f32 %v2372, %v2375
      %v2379 = vadd.f32 %v2342, %v2377
      %v2380 = vadd.f32 %v2343, %v2378
      %2382 = vset.pattern.permute.xlu0 0
      %2383 = vperm.xlu0 %2382, %v320
      %v2384 = vpop.permute.xlu0 %2383
      %v2386 = vadd.f32 %v2379, %v2384
      %v2387 = vadd.f32 %v2380, %v2384
      %2388 = vst [vmem:[%s305] sm:$0xff] %v2386
      %2389 = vst [vmem:[%s305 + $0x8] sm:$0xff] %v2387
      %p2390 = scmp.lt.s32.totalorder %s19, 1
      %s2391 = scalar_select %p2390, %s19, 1
      %s2392 = smul.addr %s2391, 2
      %s2393 = smul.addr %s2392, 8
      %s2394 = scalar_lea.vmem %s8, %s2393
      // Predicated region
      $region53: #{bsc_s_muti_cat_forward.1} parent=51 // pred_check
        %p2395 = pneg %p210
      $region54: #{bsc_s_muti_cat_forward.1} parent=51 // pred_check_branch
        %2397 = sbr.rel (%p2395) target = $region56
      $region55: #{bsc_s_muti_cat_forward.1} parent=51 // pred_region
        _
      $region56: #{bsc_s_muti_cat_forward.1} parent=51 // pred_fallthru
        _
    $region52: #{bsc_s_muti_cat_forward.1} parent=5 // pred_fallthru
      _
    %p2398 = scmp.le.s32.totalorder 2, %s14
    // Predicated region
    $region57: #{bsc_s_muti_cat_forward.1} parent=5 // pred_check
      %p2399 = pneg %p2398
    $region58: #{bsc_s_muti_cat_forward.1} parent=5 // pred_check_branch
      %2401 = sbr.rel (%p2399) target = $region60
    $region59: #{bsc_s_muti_cat_forward.1} parent=5 // pred_region
      %s2402 = ssub.s32 %s14, 2
      // Predicated region
      $region61: #{bsc_s_muti_cat_forward.1} parent=59 // pred_check
        %p2403 = pneg %p216
      $region62: #{bsc_s_muti_cat_forward.1} parent=59 // pred_check_branch
        %2405 = sbr.rel (%p2403) target = $region64
      $region63: #{bsc_s_muti_cat_forward.1} parent=59 // pred_region
        %p2406 = scmp.lt.s32.totalorder %s20, 1
        %s2407 = scalar_select %p2406, %s20, 1
        %s2408 = smul.addr %s2407, 2
        %s2409 = smul.addr %s2408, 8
        %s2410 = scalar_lea.vmem %s8, %s2409
      $region64: #{bsc_s_muti_cat_forward.1} parent=59 // pred_fallthru
        _
    $region60: #{bsc_s_muti_cat_forward.1} parent=5 // pred_fallthru
      _
  $region6: #{bsc_s_muti_cat_forward.1} parent=0 // loop_footer
    %s18 = sadd.s32 1, %s14
  $region7: #{bsc_s_muti_cat_forward.1} parent=0 // loop_footer_branch
    %13 = sbr.rel target = $region3
  $region8: #{bsc_s_muti_cat_forward.1} parent=0 // loop_exit
    _

</llo_original>
